<compile_context>
chip_gen: v7x
topology: tpu7x:2x2x1
jax: 0.10.0
libtpu: 0.0.40
codegen_flags: <defaults>
</compile_context>

<pallas_src>
import jax
import jax.numpy as jnp
from jax.experimental import pallas as pl
from jax.experimental.pallas import tpu as pltpu


def _updown_kernel(q_ref, imfeat_ref,
                   w1_im_ref, w1_q_ref, b1_ref, w2_ref, b2_ref,
                   wc1_q_ref, wc1_s_ref, bc1_ref, wc2_ref, bc2_ref,
                   preds_ref,
                   logits_acc, cls_acc):
    """Grid = (hop, chunk). Streams a CHUNK-wide slice of the 1024-dim attention hidden layer.

    q_ref     : (B, Dq)        f32
    imfeat    : (B, N, Dc)     f32
    w1_im_ref : (1, Dc, CHUNK) bf16   (Attention.nlin weight, image rows, per (hop, chunk) block)
    w1_q_ref  : (1, Dq, CHUNK) bf16   (Attention.nlin weight, question rows)
    b1_ref    : (1, 1, CHUNK)  f32
    w2_ref    : (1, CHUNK, 1)  bf16   (Attention.attnmap weight column slice)
    b2_ref    : (H,)           f32    (SMEM; per-hop scalar bias of attnmap)
    wc1_q_ref : (Dq, Hc)       bf16   (Classifier.lin1 rows for qfeat)
    wc1_s_ref : (1, Dc, Hc)    bf16   (Classifier.lin1 rows for hop h's scaled feature)
    bc1_ref   : (1, Hc)        f32
    wc2_ref   : (Hc, C)        bf16
    bc2_ref   : (1, C)         f32
    preds_ref : (B, C)         f32
    logits_acc: (B*N, 1)       f32 scratch (attention logit accumulator, per hop)
    cls_acc   : (B, Hc)        f32 scratch (classifier pre-activation accumulator)
    """
    h = pl.program_id(0)
    c = pl.program_id(1)
    n_hops = pl.num_programs(0)
    n_chunks = pl.num_programs(1)

    qfeat = q_ref[...]                              # (B, Dq) f32
    imfeat = imfeat_ref[...]                        # (B, N, Dc) f32
    B, N, Dc = imfeat.shape
    im2d = imfeat.reshape(B * N, Dc)                # free (leading-dim collapse)
    q_bf16 = qfeat.astype(jnp.bfloat16)

    # First grid point: start the classifier accumulator with the question branch
    # (replaces the lane-dim concat([qfeat, scaled...]) of the original forward).
    @pl.when((h == 0) & (c == 0))
    def _():
        cls_acc[...] = jnp.dot(q_bf16, wc1_q_ref[...],
                               preferred_element_type=jnp.float32)

    # First chunk of every hop: reset the per-hop attention-logit accumulator.
    @pl.when(c == 0)
    def _():
        logits_acc[...] = jnp.zeros_like(logits_acc)

    # Attention hidden for this (hop, chunk) tile:
    #   ReLU(cat(imfeat, qtile) @ W1 + b1) == ReLU(imfeat @ W1_im + qfeat @ W1_q + b1)
    im_proj = jnp.dot(im2d.astype(jnp.bfloat16), w1_im_ref[0],
                      preferred_element_type=jnp.float32)            # (B*N, CHUNK)
    q_proj = jnp.dot(q_bf16, w1_q_ref[0],
                     preferred_element_type=jnp.float32)             # (B, CHUNK)
    chunk = q_proj.shape[-1]
    hidden = im_proj.reshape(B, N, chunk) + (q_proj + b1_ref[0])[:, None, :]
    hidden = jnp.maximum(hidden, 0.0)                                # f32; eval-mode dropout = identity

    # Partial attention logits on the MXU (instead of a wide cross-lane reduce).
    logits_acc[...] += jnp.dot(hidden.reshape(B * N, chunk).astype(jnp.bfloat16),
                               w2_ref[0], preferred_element_type=jnp.float32)

    # Last chunk of the hop: softmax over objects, attention-weighted image feature,
    # and this hop's contribution to the classifier input.
    @pl.when(c == n_chunks - 1)
    def _():
        logits = logits_acc[...].reshape(B, N, 1) + b2_ref[h]        # (B, N, 1) f32
        m = jnp.max(logits, axis=1, keepdims=True)
        e = jnp.exp(logits - m)
        attn = e / jnp.sum(e, axis=1, keepdims=True)                 # softmax over objects (dim=1)
        scaled = jnp.sum(attn * imfeat, axis=1)                      # (B, Dc) f32
        cls_acc[...] += jnp.dot(scaled.astype(jnp.bfloat16), wc1_s_ref[0],
                                preferred_element_type=jnp.float32)

    # Final grid point: classifier head.
    @pl.when((h == n_hops - 1) & (c == n_chunks - 1))
    def _():
        hc = jnp.maximum(cls_acc[...] + bc1_ref[...], 0.0)           # (B, Hc) f32
        preds_ref[...] = (jnp.dot(hc.astype(jnp.bfloat16), wc2_ref[...],
                                  preferred_element_type=jnp.float32)
                          + bc2_ref[...])


def prepare_params(raw, *, num_hops, cnn_feat_size, chunk):
    """Convert PyTorch-layout f32 params into the kernel's streaming bf16 layout.

    raw: w1 (H, Dc+Dq, 1024), b1 (H, 1024), w2 (H, 1024), b2 (H, 1),
         wc1 (Dq + H*Dc, Hc), bc1 (Hc,), wc2 (Hc, C), bc2 (C,)   (all y = x @ W + b).
    """
    H, Dc = num_hops, cnn_feat_size
    proj = raw["w1"].shape[-1]                     # 1024
    assert proj % chunk == 0
    K = proj // chunk
    Dq = raw["w1"].shape[1] - Dc
    Hc = raw["wc1"].shape[1]

    w1 = raw["w1"].astype(jnp.bfloat16)
    w1_im = w1[:, :Dc, :]                          # cat order in Attention.forward: (imfeat, qtile)
    w1_q = w1[:, Dc:, :]

    def stream3(w):                                # (H, R, proj) -> (H*K, R, chunk), contiguous blocks
        Hh, R, P = w.shape
        return w.reshape(Hh, R, K, chunk).transpose(0, 2, 1, 3).reshape(Hh * K, R, chunk)

    return {
        "w1_im": stream3(w1_im),                                        # (H*K, Dc, chunk) bf16
        "w1_q": stream3(w1_q),                                          # (H*K, Dq, chunk) bf16
        "b1": raw["b1"].astype(jnp.float32).reshape(H * K, 1, chunk),   # (H*K, 1, chunk) f32
        "w2": raw["w2"].astype(jnp.bfloat16).reshape(H * K, chunk, 1),  # (H*K, chunk, 1) bf16
        "b2": raw["b2"].astype(jnp.float32).reshape(H),                 # (H,) f32 -> SMEM
        "wc1_q": raw["wc1"][:Dq].astype(jnp.bfloat16),                  # (Dq, Hc) bf16
        "wc1_s": raw["wc1"][Dq:].astype(jnp.bfloat16).reshape(H, Dc, Hc),
        "bc1": raw["bc1"].astype(jnp.float32).reshape(1, Hc),
        "wc2": raw["wc2"].astype(jnp.bfloat16),                         # (Hc, C) bf16
        "bc2": raw["bc2"].astype(jnp.float32).reshape(1, -1),
    }


def updown_forward(q, imfeat, kp, *, num_hops):
    B, Dq = q.shape
    _, N, Dc = imfeat.shape
    H = num_hops
    HK, _, chunk = kp["w1_q"].shape
    K = HK // H
    Hc = kp["wc1_q"].shape[1]
    C = kp["wc2"].shape[1]

    def hop_chunk(h, c):
        return (h * K + c, 0, 0)

    grid_spec = pltpu.PrefetchScalarGridSpec(
        num_scalar_prefetch=0,
        grid=(H, K),
        in_specs=[
            pl.BlockSpec((B, Dq), lambda h, c: (0, 0)),                # q (resident)
            pl.BlockSpec((B, N, Dc), lambda h, c: (0, 0, 0)),          # imfeat (resident)
            pl.BlockSpec((1, Dc, chunk), hop_chunk),                   # w1_im streamed
            pl.BlockSpec((1, Dq, chunk), hop_chunk),                   # w1_q streamed (the big one)
            pl.BlockSpec((1, 1, chunk), hop_chunk),                    # b1
            pl.BlockSpec((1, chunk, 1), hop_chunk),                    # w2 column slice
            pl.BlockSpec(memory_space=pltpu.MemorySpace.SMEM),         # b2 scalars
            pl.BlockSpec((Dq, Hc), lambda h, c: (0, 0)),               # wc1_q (resident)
            pl.BlockSpec((1, Dc, Hc), lambda h, c: (h, 0, 0)),         # wc1_s per hop
            pl.BlockSpec((1, Hc), lambda h, c: (0, 0)),                # bc1
            pl.BlockSpec((Hc, C), lambda h, c: (0, 0)),                # wc2
            pl.BlockSpec((1, C), lambda h, c: (0, 0)),                 # bc2
        ],
        out_specs=pl.BlockSpec((B, C), lambda h, c: (0, 0)),
        scratch_shapes=[
            pltpu.VMEM((B * N, 1), jnp.float32),   # attention logit accumulator
            pltpu.VMEM((B, Hc), jnp.float32),      # classifier-input accumulator
        ],
    )
    return pl.pallas_call(
        _updown_kernel,
        out_shape=jax.ShapeDtypeStruct((B, C), jnp.float32),
        grid_spec=grid_spec,
        compiler_params=pltpu.CompilerParams(
            dimension_semantics=("arbitrary", "arbitrary")),
    )(q, imfeat,
      kp["w1_im"], kp["w1_q"], kp["b1"], kp["w2"], kp["b2"],
      kp["wc1_q"], kp["wc1_s"], kp["bc1"], kp["wc2"], kp["bc2"])


def reference_forward(q, imfeat, raw, *, num_hops):
    """Plain-JAX mirror of the PyTorch forward (eval mode) with the same bf16-weight /
    f32-accumulate numerics as the kernel, kept in the original concat formulation."""
    def mm(x, w):
        return jnp.dot(x.astype(jnp.bfloat16), w.astype(jnp.bfloat16),
                       preferred_element_type=jnp.float32)

    qfeat = q
    B, N, Dc = imfeat.shape
    concat_feat = None
    for i in range(num_hops):
        qtile = jnp.broadcast_to(qfeat[:, None, :], (B, N, qfeat.shape[1]))
        qi = jnp.concatenate([imfeat, qtile], axis=2)                          # (B, N, Dc+Dq)
        hid = mm(qi.reshape(B * N, -1), raw["w1"][i]).reshape(B, N, -1) + raw["b1"][i]
        hid = jax.nn.relu(hid)
        logits = (mm(hid.reshape(B * N, -1), raw["w2"][i][:, None]).reshape(B, N, 1)
                  + raw["b2"][i])
        attn = jax.nn.softmax(logits, axis=1)
        scaled = jnp.sum(attn * imfeat, axis=1)                                # (B, Dc)
        if i == 0:
            concat_feat = jnp.concatenate([qfeat, scaled], axis=1)
        else:
            concat_feat = jnp.concatenate([concat_feat, scaled], axis=1)
    proj = jax.nn.relu(mm(concat_feat, raw["wc1"]) + raw["bc1"])
    return mm(proj, raw["wc2"]) + raw["bc2"]


def _uniform(key, shape, fan_in):
    k = 1.0 / jnp.sqrt(jnp.float32(fan_in))
    return jax.random.uniform(key, shape, jnp.float32, -k, k)


if __name__ == "__main__":
    # Small synthetic config (matches module defaults for the non-LSTM branch).
    B = 2                 # batch
    N = 8                 # num objects
    Dc = 128              # cnn_feat_size
    Dq = 2048             # qfeat_dim (hard-coded when use_lstm=False)
    H = 2                 # num_attn_hops
    HIDDEN = 128          # num_hidden * 2
    C = 16                # num_classes
    CHUNK = 512           # streaming chunk of the 1024-wide attention hidden dim

    key = jax.random.PRNGKey(0)
    keys = jax.random.split(key, 10)

    # PyTorch Linear stored input-major: y = x @ W + b
    raw = {
        "w1": _uniform(keys[0], (H, Dc + Dq, 1024), Dc + Dq),
        "b1": _uniform(keys[1], (H, 1024), Dc + Dq),
        "w2": _uniform(keys[2], (H, 1024), 1024),
        "b2": _uniform(keys[3], (H, 1), 1024),
        "wc1": _uniform(keys[4], (Dq + H * Dc, HIDDEN), Dq + H * Dc),
        "bc1": _uniform(keys[5], (HIDDEN,), Dq + H * Dc),
        "wc2": _uniform(keys[6], (HIDDEN, C), HIDDEN),
        "bc2": _uniform(keys[7], (C,), HIDDEN),
    }

    q = jax.random.normal(keys[8], (B, Dq), jnp.float32)       # qfeat (use_lstm=False -> q passes through)
    imfeat = jax.random.normal(keys[9], (B, N, Dc), jnp.float32)

    kp = prepare_params(raw, num_hops=H, cnn_feat_size=Dc, chunk=CHUNK)
    preds = updown_forward(q, imfeat, kp, num_hops=H)
    preds = jax.block_until_ready(preds)

    ref = jax.block_until_ready(reference_forward(q, imfeat, raw, num_hops=H))
    assert preds.shape == (B, C)
    max_err = float(jnp.max(jnp.abs(preds - ref)))
    assert jnp.allclose(preds, ref, rtol=2e-3, atol=2e-3), f"mismatch vs reference (max abs err {max_err})"

    print("KERNEL_OK")
</pallas_src>

<mosaic_0001>
module attributes {stable_mosaic.version = 11 : i64} {
  func.func @_updown_kernel(%arg0: i32, %arg1: i32, %arg2: memref<2x2048xf32, #tpu.memory_space<vmem>>, %arg3: memref<2x8x128xf32, #tpu.memory_space<vmem>>, %arg4: memref<1x128x512xbf16, #tpu.memory_space<vmem>>, %arg5: memref<1x2048x512xbf16, #tpu.memory_space<vmem>>, %arg6: memref<1x1x512xf32, #tpu.memory_space<vmem>>, %arg7: memref<1x512x1xbf16, #tpu.memory_space<vmem>>, %arg8: memref<2xf32, #tpu.memory_space<smem>>, %arg9: memref<2048x128xbf16, #tpu.memory_space<vmem>>, %arg10: memref<1x128x128xbf16, #tpu.memory_space<vmem>>, %arg11: memref<1x128xf32, #tpu.memory_space<vmem>>, %arg12: memref<128x16xbf16, #tpu.memory_space<vmem>>, %arg13: memref<1x16xf32, #tpu.memory_space<vmem>>, %arg14: memref<2x16xf32, #tpu.memory_space<vmem>>, %arg15: memref<16x1xf32, #tpu.memory_space<vmem>>, %arg16: memref<2x128xf32, #tpu.memory_space<vmem>>) attributes {dimension_semantics = [#tpu.dimension_semantics<arbitrary>, #tpu.dimension_semantics<arbitrary>], iteration_bounds = array<i64: 2, 2>, scalar_prefetch = 0 : i64, scratch_operands = 2 : i64, tpu.core_type = #tpu.core_type<tc>, window_params = [{pipeline_mode = #tpu.pipeline_mode<synchronous>, transform_indices = @transform_0, window_bounds = array<i64: 2, 2048>}, {pipeline_mode = #tpu.pipeline_mode<synchronous>, transform_indices = @transform_1, window_bounds = array<i64: 2, 8, 128>}, {transform_indices = @transform_2, window_bounds = array<i64: 1, 128, 512>}, {transform_indices = @transform_3, window_bounds = array<i64: 1, 2048, 512>}, {transform_indices = @transform_4, window_bounds = array<i64: 1, 1, 512>}, {transform_indices = @transform_5, window_bounds = array<i64: 1, 512, 1>}, {transform_indices = @transform_6, window_bounds = array<i64: 2>}, {pipeline_mode = #tpu.pipeline_mode<synchronous>, transform_indices = @transform_7, window_bounds = array<i64: 2048, 128>}, {transform_indices = @transform_8, window_bounds = array<i64: 1, 128, 128>}, {pipeline_mode = #tpu.pipeline_mode<synchronous>, transform_indices = @transform_9, window_bounds = array<i64: 1, 128>}, {pipeline_mode = #tpu.pipeline_mode<synchronous>, transform_indices = @transform_10, window_bounds = array<i64: 128, 16>}, {pipeline_mode = #tpu.pipeline_mode<synchronous>, transform_indices = @transform_11, window_bounds = array<i64: 1, 16>}, {pipeline_mode = #tpu.pipeline_mode<synchronous>, transform_indices = @transform_12, window_bounds = array<i64: 2, 16>}]} {
    %c0 = arith.constant 0 : index
    %c0_0 = arith.constant 0 : index
    %0 = vector.load %arg2[%c0, %c0_0] : memref<2x2048xf32, #tpu.memory_space<vmem>>, vector<2x2048xf32>
    %c0_1 = arith.constant 0 : index
    %c0_2 = arith.constant 0 : index
    %c0_3 = arith.constant 0 : index
    %1 = vector.load %arg3[%c0_1, %c0_2, %c0_3] : memref<2x8x128xf32, #tpu.memory_space<vmem>>, vector<2x8x128xf32>
    %2 = vector.shape_cast %1 : vector<2x8x128xf32> to vector<16x128xf32>
    %3 = arith.truncf %0 : vector<2x2048xf32> to vector<2x2048xbf16>
    %c0_i32 = arith.constant 0 : i32
    %4 = arith.cmpi eq, %arg0, %c0_i32 : i32
    %c0_i32_4 = arith.constant 0 : i32
    %5 = arith.cmpi eq, %arg1, %c0_i32_4 : i32
    %6 = arith.andi %4, %5 : i1
    %7 = arith.extui %6 : i1 to i32
    %c0_i32_5 = arith.constant 0 : i32
    %8 = arith.cmpi ne, %7, %c0_i32_5 : i32
    scf.if %8 {
      %c0_31 = arith.constant 0 : index
      %c0_32 = arith.constant 0 : index
      %45 = vector.load %arg9[%c0_31, %c0_32] : memref<2048x128xbf16, #tpu.memory_space<vmem>>, vector<2048x128xbf16>
      %cst_33 = arith.constant dense<0.000000e+00> : vector<2x128xf32>
      %46 = tpu.matmul %3, %45, %cst_33 {dimension_numbers = #tpu.dot_dimension_numbers<[1], [0], [0], [1], [0, 0, 1, 1], [], []>} : vector<2x2048xbf16>, vector<2048x128xbf16>, vector<2x128xf32> -> vector<2x128xf32>
      %c0_34 = arith.constant 0 : index
      %c0_35 = arith.constant 0 : index
      %47 = vector.load %arg16[%c0_34, %c0_35] : memref<2x128xf32, #tpu.memory_space<vmem>>, vector<2x128xf32>
      tpu.vector_store %arg16[%c0_34, %c0_35], %46 {strides = array<i32>} : memref<2x128xf32, #tpu.memory_space<vmem>>, vector<2x128xf32>,
    } else {
    }
    %c0_i32_6 = arith.constant 0 : i32
    %9 = arith.cmpi eq, %arg1, %c0_i32_6 : i32
    %10 = arith.extui %9 : i1 to i32
    %c0_i32_7 = arith.constant 0 : i32
    %11 = arith.cmpi ne, %10, %c0_i32_7 : i32
    scf.if %11 {
      %cst_31 = arith.constant 0.000000e+00 : f32
      %45 = vector.broadcast %cst_31 : f32 to vector<16x1xf32>
      %c0_32 = arith.constant 0 : index
      %c0_33 = arith.constant 0 : index
      %46 = vector.load %arg15[%c0_32, %c0_33] : memref<16x1xf32, #tpu.memory_space<vmem>>, vector<16x1xf32>
      tpu.vector_store %arg15[%c0_32, %c0_33], %45 {strides = array<i32>} : memref<16x1xf32, #tpu.memory_space<vmem>>, vector<16x1xf32>,
    } else {
    }
    %12 = arith.truncf %2 : vector<16x128xf32> to vector<16x128xbf16>
    %c0_8 = arith.constant 0 : index
    %c0_9 = arith.constant 0 : index
    %c0_10 = arith.constant 0 : index
    %13 = vector.load %arg4[%c0_8, %c0_9, %c0_10] : memref<1x128x512xbf16, #tpu.memory_space<vmem>>, vector<1x128x512xbf16>
    %14 = vector.shape_cast %13 : vector<1x128x512xbf16> to vector<128x512xbf16>
    %cst = arith.constant dense<0.000000e+00> : vector<16x512xf32>
    %15 = tpu.matmul %12, %14, %cst {dimension_numbers = #tpu.dot_dimension_numbers<[1], [0], [0], [1], [0, 0, 1, 1], [], []>} : vector<16x128xbf16>, vector<128x512xbf16>, vector<16x512xf32> -> vector<16x512xf32>
    %c0_11 = arith.constant 0 : index
    %c0_12 = arith.constant 0 : index
    %c0_13 = arith.constant 0 : index
    %16 = vector.load %arg5[%c0_11, %c0_12, %c0_13] : memref<1x2048x512xbf16, #tpu.memory_space<vmem>>, vector<1x2048x512xbf16>
    %17 = vector.shape_cast %16 : vector<1x2048x512xbf16> to vector<2048x512xbf16>
    %cst_14 = arith.constant dense<0.000000e+00> : vector<2x512xf32>
    %18 = tpu.matmul %3, %17, %cst_14 {dimension_numbers = #tpu.dot_dimension_numbers<[1], [0], [0], [1], [0, 0, 1, 1], [], []>} : vector<2x2048xbf16>, vector<2048x512xbf16>, vector<2x512xf32> -> vector<2x512xf32>
    %19 = vector.shape_cast %15 : vector<16x512xf32> to vector<2x8x512xf32>
    %c0_15 = arith.constant 0 : index
    %c0_16 = arith.constant 0 : index
    %c0_17 = arith.constant 0 : index
    %20 = vector.load %arg6[%c0_15, %c0_16, %c0_17] : memref<1x1x512xf32, #tpu.memory_space<vmem>>, vector<1x1x512xf32>
    %21 = vector.shape_cast %20 : vector<1x1x512xf32> to vector<1x512xf32>
    %22 = vector.broadcast %21 : vector<1x512xf32> to vector<2x512xf32>
    %23 = arith.addf %18, %22 : vector<2x512xf32>
    %24 = vector.shape_cast %23 : vector<2x512xf32> to vector<2x1x512xf32>
    %25 = vector.broadcast %24 : vector<2x1x512xf32> to vector<2x8x512xf32>
    %26 = arith.addf %19, %25 : vector<2x8x512xf32>
    %cst_18 = arith.constant 0.000000e+00 : f32
    %27 = vector.broadcast %cst_18 : f32 to vector<2x8x512xf32>
    %28 = arith.maximumf %26, %27 : vector<2x8x512xf32>
    %c0_19 = arith.constant 0 : index
    %c0_20 = arith.constant 0 : index
    %29 = vector.load %arg15[%c0_19, %c0_20] : memref<16x1xf32, #tpu.memory_space<vmem>>, vector<16x1xf32>
    %30 = vector.shape_cast %28 : vector<2x8x512xf32> to vector<16x512xf32>
    %31 = arith.truncf %30 : vector<16x512xf32> to vector<16x512xbf16>
    %c0_21 = arith.constant 0 : index
    %c0_22 = arith.constant 0 : index
    %c0_23 = arith.constant 0 : index
    %32 = vector.load %arg7[%c0_21, %c0_22, %c0_23] : memref<1x512x1xbf16, #tpu.memory_space<vmem>>, vector<1x512x1xbf16>
    %33 = vector.shape_cast %32 : vector<1x512x1xbf16> to vector<512x1xbf16>
    %cst_24 = arith.constant dense<0.000000e+00> : vector<16x1xf32>
    %34 = tpu.matmul %31, %33, %cst_24 {dimension_numbers = #tpu.dot_dimension_numbers<[1], [0], [0], [1], [0, 0, 1, 1], [], []>} : vector<16x512xbf16>, vector<512x1xbf16>, vector<16x1xf32> -> vector<16x1xf32>
    %35 = arith.addf %29, %34 : vector<16x1xf32>
    %c0_25 = arith.constant 0 : index
    %c0_26 = arith.constant 0 : index
    %36 = vector.load %arg15[%c0_25, %c0_26] : memref<16x1xf32, #tpu.memory_space<vmem>>, vector<16x1xf32>
    tpu.vector_store %arg15[%c0_25, %c0_26], %35 {strides = array<i32>} : memref<16x1xf32, #tpu.memory_space<vmem>>, vector<16x1xf32>,
    %c1_i32 = arith.constant 1 : i32
    %37 = arith.cmpi eq, %arg1, %c1_i32 : i32
    %38 = arith.extui %37 : i1 to i32
    %c0_i32_27 = arith.constant 0 : i32
    %39 = arith.cmpi ne, %38, %c0_i32_27 : i32
    scf.if %39 {
      %c0_31 = arith.constant 0 : index
      %c0_32 = arith.constant 0 : index
      %45 = vector.load %arg15[%c0_31, %c0_32] : memref<16x1xf32, #tpu.memory_space<vmem>>, vector<16x1xf32>
      %46 = vector.shape_cast %45 : vector<16x1xf32> to vector<2x8x1xf32>
      %47 = arith.index_cast %arg0 : i32 to index
      %48 = memref.load %arg8[%47] : memref<2xf32, #tpu.memory_space<smem>>
      %49 = vector.broadcast %48 : f32 to vector<2x8x1xf32>
      %50 = arith.addf %46, %49 : vector<2x8x1xf32>
      %cst_33 = arith.constant dense<0xFF800000> : vector<2x1xf32>
      %51 = vector.multi_reduction <maximumf>, %50, %cst_33 [1] : vector<2x8x1xf32> to vector<2x1xf32>
      %52 = vector.shape_cast %51 : vector<2x1xf32> to vector<2x1x1xf32>
      %53 = vector.broadcast %52 : vector<2x1x1xf32> to vector<2x8x1xf32>
      %54 = arith.subf %50, %53 : vector<2x8x1xf32>
      %55 = math.exp %54 : vector<2x8x1xf32>
      %cst_34 = arith.constant dense<0.000000e+00> : vector<2x1xf32>
      %56 = vector.multi_reduction <add>, %55, %cst_34 [1] : vector<2x8x1xf32> to vector<2x1xf32>
      %57 = vector.shape_cast %56 : vector<2x1xf32> to vector<2x1x1xf32>
      %58 = vector.broadcast %57 : vector<2x1x1xf32> to vector<2x8x1xf32>
      %59 = arith.divf %55, %58 : vector<2x8x1xf32>
      %60 = vector.broadcast %59 : vector<2x8x1xf32> to vector<2x8x128xf32>
      %61 = arith.mulf %60, %1 : vector<2x8x128xf32>
      %cst_35 = arith.constant dense<0.000000e+00> : vector<2x128xf32>
      %62 = vector.multi_reduction <add>, %61, %cst_35 [1] : vector<2x8x128xf32> to vector<2x128xf32>
      %c0_36 = arith.constant 0 : index
      %c0_37 = arith.constant 0 : index
      %63 = vector.load %arg16[%c0_36, %c0_37] : memref<2x128xf32, #tpu.memory_space<vmem>>, vector<2x128xf32>
      %64 = arith.truncf %62 : vector<2x128xf32> to vector<2x128xbf16>
      %c0_38 = arith.constant 0 : index
      %c0_39 = arith.constant 0 : index
      %c0_40 = arith.constant 0 : index
      %65 = vector.load %arg10[%c0_38, %c0_39, %c0_40] : memref<1x128x128xbf16, #tpu.memory_space<vmem>>, vector<1x128x128xbf16>
      %66 = vector.shape_cast %65 : vector<1x128x128xbf16> to vector<128x128xbf16>
      %cst_41 = arith.constant dense<0.000000e+00> : vector<2x128xf32>
      %67 = tpu.matmul %64, %66, %cst_41 {dimension_numbers = #tpu.dot_dimension_numbers<[1], [0], [0], [1], [0, 0, 1, 1], [], []>} : vector<2x128xbf16>, vector<128x128xbf16>, vector<2x128xf32> -> vector<2x128xf32>
      %68 = arith.addf %63, %67 : vector<2x128xf32>
      %c0_42 = arith.constant 0 : index
      %c0_43 = arith.constant 0 : index
      %69 = vector.load %arg16[%c0_42, %c0_43] : memref<2x128xf32, #tpu.memory_space<vmem>>, vector<2x128xf32>
      tpu.vector_store %arg16[%c0_42, %c0_43], %68 {strides = array<i32>} : memref<2x128xf32, #tpu.memory_space<vmem>>, vector<2x128xf32>,
    } else {
    }
    %c1_i32_28 = arith.constant 1 : i32
    %40 = arith.cmpi eq, %arg0, %c1_i32_28 : i32
    %c1_i32_29 = arith.constant 1 : i32
    %41 = arith.cmpi eq, %arg1, %c1_i32_29 : i32
    %42 = arith.andi %40, %41 : i1
    %43 = arith.extui %42 : i1 to i32
    %c0_i32_30 = arith.constant 0 : i32
    %44 = arith.cmpi ne, %43, %c0_i32_30 : i32
    scf.if %44 {
      %c0_31 = arith.constant 0 : index
      %c0_32 = arith.constant 0 : index
      %45 = vector.load %arg16[%c0_31, %c0_32] : memref<2x128xf32, #tpu.memory_space<vmem>>, vector<2x128xf32>
      %c0_33 = arith.constant 0 : index
      %c0_34 = arith.constant 0 : index
      %46 = vector.load %arg11[%c0_33, %c0_34] : memref<1x128xf32, #tpu.memory_space<vmem>>, vector<1x128xf32>
      %47 = vector.broadcast %46 : vector<1x128xf32> to vector<2x128xf32>
      %48 = arith.addf %45, %47 : vector<2x128xf32>
      %cst_35 = arith.constant 0.000000e+00 : f32
      %49 = vector.broadcast %cst_35 : f32 to vector<2x128xf32>
      %50 = arith.maximumf %48, %49 : vector<2x128xf32>
      %51 = arith.truncf %50 : vector<2x128xf32> to vector<2x128xbf16>
      %c0_36 = arith.constant 0 : index
      %c0_37 = arith.constant 0 : index
      %52 = vector.load %arg12[%c0_36, %c0_37] : memref<128x16xbf16, #tpu.memory_space<vmem>>, vector<128x16xbf16>
      %cst_38 = arith.constant dense<0.000000e+00> : vector<2x16xf32>
      %53 = tpu.matmul %51, %52, %cst_38 {dimension_numbers = #tpu.dot_dimension_numbers<[1], [0], [0], [1], [0, 0, 1, 1], [], []>} : vector<2x128xbf16>, vector<128x16xbf16>, vector<2x16xf32> -> vector<2x16xf32>
      %c0_39 = arith.constant 0 : index
      %c0_40 = arith.constant 0 : index
      %54 = vector.load %arg13[%c0_39, %c0_40] : memref<1x16xf32, #tpu.memory_space<vmem>>, vector<1x16xf32>
      %55 = vector.broadcast %54 : vector<1x16xf32> to vector<2x16xf32>
      %56 = arith.addf %53, %55 : vector<2x16xf32>
      %c0_41 = arith.constant 0 : index
      %c0_42 = arith.constant 0 : index
      %57 = vector.load %arg14[%c0_41, %c0_42] : memref<2x16xf32, #tpu.memory_space<vmem>>, vector<2x16xf32>
      tpu.vector_store %arg14[%c0_41, %c0_42], %56 {strides = array<i32>} : memref<2x16xf32, #tpu.memory_space<vmem>>, vector<2x16xf32>,
    } else {
    }
    return
  }
  func.func @transform_0(%arg0: i32, %arg1: i32) -> (i32, i32) {
    %c0_i32 = arith.constant 0 : i32
    %c0_i32_0 = arith.constant 0 : i32
    %c0_i32_1 = arith.constant 0 : i32
    return %c0_i32, %c0_i32_0 : i32, i32
  }
  func.func @transform_1(%arg0: i32, %arg1: i32) -> (i32, i32, i32) {
    %c0_i32 = arith.constant 0 : i32
    %c0_i32_0 = arith.constant 0 : i32
    %c0_i32_1 = arith.constant 0 : i32
    %c0_i32_2 = arith.constant 0 : i32
    return %c0_i32, %c0_i32_0, %c0_i32_1 : i32, i32, i32
  }
  func.func @transform_2(%arg0: i32, %arg1: i32) -> (i32, i32, i32) {
    %c2_i32 = arith.constant 2 : i32
    %0 = arith.muli %arg0, %c2_i32 : i32
    %1 = arith.addi %0, %arg1 : i32
    %c0_i32 = arith.constant 0 : i32
    %c0_i32_0 = arith.constant 0 : i32
    %c0_i32_1 = arith.constant 0 : i32
    return %1, %c0_i32, %c0_i32_0 : i32, i32, i32
  }
  func.func @transform_3(%arg0: i32, %arg1: i32) -> (i32, i32, i32) {
    %c2_i32 = arith.constant 2 : i32
    %0 = arith.muli %arg0, %c2_i32 : i32
    %1 = arith.addi %0, %arg1 : i32
    %c0_i32 = arith.constant 0 : i32
    %c0_i32_0 = arith.constant 0 : i32
    %c0_i32_1 = arith.constant 0 : i32
    return %1, %c0_i32, %c0_i32_0 : i32, i32, i32
  }
  func.func @transform_4(%arg0: i32, %arg1: i32) -> (i32, i32, i32) {
    %c2_i32 = arith.constant 2 : i32
    %0 = arith.muli %arg0, %c2_i32 : i32
    %1 = arith.addi %0, %arg1 : i32
    %c0_i32 = arith.constant 0 : i32
    %c0_i32_0 = arith.constant 0 : i32
    %c0_i32_1 = arith.constant 0 : i32
    return %1, %c0_i32, %c0_i32_0 : i32, i32, i32
  }
  func.func @transform_5(%arg0: i32, %arg1: i32) -> (i32, i32, i32) {
    %c2_i32 = arith.constant 2 : i32
    %0 = arith.muli %arg0, %c2_i32 : i32
    %1 = arith.addi %0, %arg1 : i32
    %c0_i32 = arith.constant 0 : i32
    %c0_i32_0 = arith.constant 0 : i32
    %c0_i32_1 = arith.constant 0 : i32
    return %1, %c0_i32, %c0_i32_0 : i32, i32, i32
  }
  func.func @transform_6(%arg0: i32, %arg1: i32) -> i32 {
    %c0_i32 = arith.constant 0 : i32
    %c0_i32_0 = arith.constant 0 : i32
    return %c0_i32 : i32
  }
  func.func @transform_7(%arg0: i32, %arg1: i32) -> (i32, i32) {
    %c0_i32 = arith.constant 0 : i32
    %c0_i32_0 = arith.constant 0 : i32
    %c0_i32_1 = arith.constant 0 : i32
    return %c0_i32, %c0_i32_0 : i32, i32
  }
  func.func @transform_8(%arg0: i32, %arg1: i32) -> (i32, i32, i32) {
    %c0_i32 = arith.constant 0 : i32
    %c0_i32_0 = arith.constant 0 : i32
    %c0_i32_1 = arith.constant 0 : i32
    return %arg0, %c0_i32, %c0_i32_0 : i32, i32, i32
  }
  func.func @transform_9(%arg0: i32, %arg1: i32) -> (i32, i32) {
    %c0_i32 = arith.constant 0 : i32
    %c0_i32_0 = arith.constant 0 : i32
    %c0_i32_1 = arith.constant 0 : i32
    return %c0_i32, %c0_i32_0 : i32, i32
  }
  func.func @transform_10(%arg0: i32, %arg1: i32) -> (i32, i32) {
    %c0_i32 = arith.constant 0 : i32
    %c0_i32_0 = arith.constant 0 : i32
    %c0_i32_1 = arith.constant 0 : i32
    return %c0_i32, %c0_i32_0 : i32, i32
  }
  func.func @transform_11(%arg0: i32, %arg1: i32) -> (i32, i32) {
    %c0_i32 = arith.constant 0 : i32
    %c0_i32_0 = arith.constant 0 : i32
    %c0_i32_1 = arith.constant 0 : i32
    return %c0_i32, %c0_i32_0 : i32, i32
  }
  func.func @transform_12(%arg0: i32, %arg1: i32) -> (i32, i32) {
    %c0_i32 = arith.constant 0 : i32
    %c0_i32_0 = arith.constant 0 : i32
    %c0_i32_1 = arith.constant 0 : i32
    return %c0_i32, %c0_i32_0 : i32, i32
  }
}

</mosaic_0001>

<llo_original>
// kernel: tpu_custom_call.1
$region0: #{tpu_custom_call.1}
  #allocation0 [shape = 'u32[]', space=smem, size = 0x4, offset = 0x4, fixed_abs, tag = 'smem constant byte address 0x4 - core index']
  #allocation1 [shape = 'u32[144,128]{1,0:T(1,128)}', space=vmem, size = 0x12000, scoped, tag = 'internal scratch']
  #allocation2 [shape = 'f32[16,1]{1,0:T(8,128)}', space=vmem, size = 0x2000, scoped, tag = 'scratch operand']
  #allocation3 [shape = 'f32[2,128]{1,0:T(2,128)}', space=vmem, size = 0x400, scoped, tag = 'scratch operand']
  %s0 = inlined_call_operand.hbm [shape: f32[2,2048], index: 0, kind: input, shape index: {}]
  %s1 = inlined_call_operand.hbm [shape: f32[2,8,128], index: 1, kind: input, shape index: {}]
  %s2 = inlined_call_operand.hbm [shape: bf16[4,128,512], index: 2, kind: input, shape index: {}]
  %s3 = inlined_call_operand.hbm [shape: bf16[4,2048,512], index: 3, kind: input, shape index: {}]
  %s4 = inlined_call_operand.hbm [shape: f32[4,1,512], index: 4, kind: input, shape index: {}]
  %s5 = inlined_call_operand.vmem [shape: bf16[4,512,1], index: 5, kind: input, shape index: {}]
  %s6 = inlined_call_operand.hbm [shape: f32[2], index: 6, kind: input, shape index: {}]
  %s7 = inlined_call_operand.hbm [shape: bf16[2048,128], index: 7, kind: input, shape index: {}]
  %s8 = inlined_call_operand.hbm [shape: bf16[2,128,128], index: 8, kind: input, shape index: {}]
  %s9 = inlined_call_operand.hbm [shape: f32[1,128], index: 9, kind: input, shape index: {}]
  %s10 = inlined_call_operand.vmem [shape: bf16[128,16], index: 10, kind: input, shape index: {}]
  %s11 = inlined_call_operand.hbm [shape: f32[1,16], index: 11, kind: input, shape index: {}]
  %s12 = inlined_call_operand.hbm [shape: f32[2,16], index: 12, kind: output, shape index: {}]
  %s13 = sld [smem:[#allocation0]]
  $region137: #{tpu_custom_call.1} parent=0
    _
  %s15 = ssub.s32 1, %s13
  %s16 = scalar_select 0, %s15, %s13
  $region1: #{tpu_custom_call.1} parent=0
    #allocation4 [shape = 'u8[16384]{0}', space=vmem, size = 0x4000, scoped, tag = 'input window, operand 0, single buffered']
    #allocation5 [shape = 's32[2]{0}', space=sflag, size = 0x8, scoped, tag = 'scoped memory for tpu_custom_call.1']
    #allocation6 [shape = 's32[2]{0}', space=sflag, size = 0x8, scoped, tag = 'scoped memory for tpu_custom_call.1']
    #allocation7 [shape = 's32[2]{0}', space=sflag, size = 0x8, scoped, tag = 'scoped memory for tpu_custom_call.1']
    #allocation8 [shape = 'u8[8192]{0}', space=vmem, size = 0x2000, scoped, tag = 'input window, operand 1, single buffered']
    #allocation9 [shape = 's32[1]{0}', space=sflag, size = 0x4, scoped, tag = 'scoped memory for tpu_custom_call.1']
    #allocation10 [shape = 'u8[262144]{0}', space=vmem, size = 0x40000, scoped, tag = 'input window, operand 2']
    #allocation11 [shape = 'u8[4194304]{0}', space=vmem, size = 0x400000, scoped, tag = 'input window, operand 3']
    #allocation12 [shape = 'u8[4096]{0}', space=vmem, size = 0x1000, scoped, tag = 'input window, operand 4']
    #allocation13 [shape = 'u8[512]{0}', space=smem, size = 0x200, scoped, tag = 'input window, operand 6, single buffered']
    #allocation14 [shape = 'u8[524288]{0}', space=vmem, size = 0x80000, scoped, tag = 'input window, operand 7, single buffered']
    #allocation15 [shape = 'u8[65536]{0}', space=vmem, size = 0x10000, scoped, tag = 'input window, operand 8']
    #allocation16 [shape = 's32[2]{0}', space=sflag, size = 0x8, scoped, tag = 'scoped memory for tpu_custom_call.1']
    #allocation17 [shape = 'u8[512]{0}', space=vmem, size = 0x400, scoped, tag = 'input window, operand 9, single buffered']
    #allocation18 [shape = 'u8[512]{0}', space=vmem, size = 0x400, scoped, tag = 'input window, operand 11, single buffered']
    #allocation19 [shape = 's32[1]{0}', space=sflag, size = 0x4, scoped, tag = 'scoped memory for tpu_custom_call.1']
    #allocation20 [shape = 'u8[1024]{0}', space=vmem, size = 0x400, scoped, tag = 'output window, operand 0, single buffered']
    %17 = vsyncpa [#allocation5], 0
    %18 = vsyncpa [#allocation9], 0
    %19 = vsyncpa [#allocation7], 0
    %20 = vsyncpa [#allocation16], 0
    %s21 = scalar_lea.sflag [#allocation16], 1
    %22 = vsyncpa %s21, 0
    %23 = vsyncpa [#allocation19], 0
    %24 = vsyncpa [#allocation6], 0
    loop: start=0, step=1, limit=6
    $region2: #{tpu_custom_call.1} parent=1 // loop_pre_header
      _
    $region3: #{tpu_custom_call.1} parent=1 // loop_header
      %s26 = sphi 0, %s30
      %p27 = scmp.ge.s32.totalorder %s26, 6
      %s33 = sphi 0, %s45
      %s34 = sphi 0, %s41
      %s35 = sphi 0, %s33
      %s36 = sphi 0, %s34
      %s37 = sphi 0, %s35
      %s38 = sphi 0, %s36
      %s46 = sphi 0, %s46
      %s48 = sphi 0, %s46
      %s49 = sphi 0, %s48
      %s63 = sphi 0, %s49
      %s67 = sphi 0, %s67
      %s69 = sphi 0, %s67
      %s70 = sphi 0, %s69
      %s84 = sphi 0, %s70
      %s94 = sphi 0, %s96
      %s97 = sphi 0, %s94
      %s98 = sphi 0, %s97
      %s114 = sphi 0, %s98
      %s124 = sphi 0, %s126
      %s127 = sphi 0, %s124
      %s128 = sphi 0, %s127
      %s144 = sphi 0, %s128
      %s154 = sphi 0, %s156
      %s157 = sphi 0, %s154
      %s158 = sphi 0, %s157
      %s174 = sphi 0, %s158
      %s184 = sphi 0, %s186
      %s187 = sphi 0, %s184
      %s188 = sphi 0, %s187
      %s204 = sphi 0, %s188
      %s208 = sphi 0, %s208
      %s210 = sphi 0, %s208
      %s211 = sphi 0, %s210
      %s225 = sphi 0, %s211
      %s229 = sphi 0, %s229
      %s231 = sphi 0, %s229
      %s232 = sphi 0, %s231
      %s246 = sphi 0, %s232
      %s252 = sphi 0, %s254
      %s255 = sphi 0, %s252
      %s256 = sphi 0, %s255
      %s272 = sphi 0, %s256
      %s276 = sphi 0, %s276
      %s278 = sphi 0, %s276
      %s279 = sphi 0, %s278
      %s293 = sphi 0, %s279
      %s297 = sphi 0, %s297
      %s299 = sphi 0, %s297
      %s300 = sphi 0, %s299
      %s314 = sphi 0, %s300
      %s318 = sphi 0, %s318
      %s320 = sphi 0, %s318
      %s321 = sphi 0, %s320
      %s335 = sphi 0, %s321
      %s339 = sphi 0, %s339
      %s341 = sphi 0, %s339
      %s342 = sphi 0, %s341
      %s356 = sphi 0, %s342
    $region4: #{tpu_custom_call.1} parent=1 // loop_header_branch
      %29 = sbr.rel (%p27) target = $region8
    $region5: #{tpu_custom_call.1} parent=1 // loop_body
      %s31 = ssub.s32 %s26, 1
      %s32 = ssub.s32 %s26, 2
      %s39 = sadd.s32 1, %s34
      %p40 = scmp.ge.s32.totalorder %s39, 2
      %s41 = scalar_select %p40, 0, %s39
      %s42 = sadd.s32 1, %s33
      %s43 = scalar_select %p40, %s42, %s33
      %p44 = scmp.ge.s32.totalorder %s43, 2
      %s45 = scalar_select %p44, 0, %s43
      %s47 = sadd.s32 %s46, 1
      %p50 = scmp.eq.s32.totalorder %s26, 3
      %p51 = scmp.ne.s32.totalorder %s46, %s48
      %p52 = scmp.eq.s32.totalorder %s26, 0
      %p53 = por %p51, %p52
      %p54 = scmp.ne.s32.totalorder %s46, %s48
      %p55 = scmp.eq.s32.totalorder %s31, 3
      %p56 = por %p54, %p55
      %p57 = scmp.ne.s32.totalorder %s48, %s49
      %p58 = scmp.eq.s32.totalorder %s31, 0
      %p59 = por %p57, %p58
      %p60 = scmp.ne.s32.totalorder %s48, %s49
      %p61 = scmp.eq.s32.totalorder %s32, 3
      %p62 = por %p60, %p61
      %p64 = scmp.ne.s32.totalorder %s49, %s63
      %p65 = scmp.eq.s32.totalorder %s32, 0
      %p66 = por %p64, %p65
      %s68 = sadd.s32 %s67, 1
      %p71 = scmp.eq.s32.totalorder %s26, 3
      %p72 = scmp.ne.s32.totalorder %s67, %s69
      %p73 = scmp.eq.s32.totalorder %s26, 0
      %p74 = por %p72, %p73
      %p75 = scmp.ne.s32.totalorder %s67, %s69
      %p76 = scmp.eq.s32.totalorder %s31, 3
      %p77 = por %p75, %p76
      %p78 = scmp.ne.s32.totalorder %s69, %s70
      %p79 = scmp.eq.s32.totalorder %s31, 0
      %p80 = por %p78, %p79
      %p81 = scmp.ne.s32.totalorder %s69, %s70
      %p82 = scmp.eq.s32.totalorder %s32, 3
      %p83 = por %p81, %p82
      %p85 = scmp.ne.s32.totalorder %s70, %s84
      %p86 = scmp.eq.s32.totalorder %s32, 0
      %p87 = por %p85, %p86
      %s88 = smul.u32 %s33, 2
      %s89 = sadd.s32 %s88, %s34
      %s90 = smul.u32 %s45, 2
      %s91 = sadd.s32 %s90, %s41
      %s92 = ssub.s32 %s89, %s91
      %p93 = scmp.eq.s32.totalorder %s92, 0
      %s95 = sadd.s32 %s94, 1
      %s96 = scalar_select %p93, %s94, %s95
      %p99 = pneg %p93
      %p100 = scmp.eq.s32.totalorder %s26, 3
      %p101 = por %p99, %p100
      %p102 = scmp.ne.s32.totalorder %s94, %s97
      %p103 = scmp.eq.s32.totalorder %s26, 0
      %p104 = por %p102, %p103
      %p105 = scmp.ne.s32.totalorder %s94, %s97
      %p106 = scmp.eq.s32.totalorder %s31, 3
      %p107 = por %p105, %p106
      %p108 = scmp.ne.s32.totalorder %s97, %s98
      %p109 = scmp.eq.s32.totalorder %s31, 0
      %p110 = por %p108, %p109
      %p111 = scmp.ne.s32.totalorder %s97, %s98
      %p112 = scmp.eq.s32.totalorder %s32, 3
      %p113 = por %p111, %p112
      %p115 = scmp.ne.s32.totalorder %s98, %s114
      %p116 = scmp.eq.s32.totalorder %s32, 0
      %p117 = por %p115, %p116
      %s118 = smul.u32 %s33, 2
      %s119 = sadd.s32 %s118, %s34
      %s120 = smul.u32 %s45, 2
      %s121 = sadd.s32 %s120, %s41
      %s122 = ssub.s32 %s119, %s121
      %p123 = scmp.eq.s32.totalorder %s122, 0
      %s125 = sadd.s32 %s124, 1
      %s126 = scalar_select %p123, %s124, %s125
      %p129 = pneg %p123
      %p130 = scmp.eq.s32.totalorder %s26, 3
      %p131 = por %p129, %p130
      %p132 = scmp.ne.s32.totalorder %s124, %s127
      %p133 = scmp.eq.s32.totalorder %s26, 0
      %p134 = por %p132, %p133
      %p135 = scmp.ne.s32.totalorder %s124, %s127
      %p136 = scmp.eq.s32.totalorder %s31, 3
      %p137 = por %p135, %p136
      %p138 = scmp.ne.s32.totalorder %s127, %s128
      %p139 = scmp.eq.s32.totalorder %s31, 0
      %p140 = por %p138, %p139
      %p141 = scmp.ne.s32.totalorder %s127, %s128
      %p142 = scmp.eq.s32.totalorder %s32, 3
      %p143 = por %p141, %p142
      %p145 = scmp.ne.s32.totalorder %s128, %s144
      %p146 = scmp.eq.s32.totalorder %s32, 0
      %p147 = por %p145, %p146
      %s148 = smul.u32 %s33, 2
      %s149 = sadd.s32 %s148, %s34
      %s150 = smul.u32 %s45, 2
      %s151 = sadd.s32 %s150, %s41
      %s152 = ssub.s32 %s149, %s151
      %p153 = scmp.eq.s32.totalorder %s152, 0
      %s155 = sadd.s32 %s154, 1
      %s156 = scalar_select %p153, %s154, %s155
      %p159 = pneg %p153
      %p160 = scmp.eq.s32.totalorder %s26, 3
      %p161 = por %p159, %p160
      %p162 = scmp.ne.s32.totalorder %s154, %s157
      %p163 = scmp.eq.s32.totalorder %s26, 0
      %p164 = por %p162, %p163
      %p165 = scmp.ne.s32.totalorder %s154, %s157
      %p166 = scmp.eq.s32.totalorder %s31, 3
      %p167 = por %p165, %p166
      %p168 = scmp.ne.s32.totalorder %s157, %s158
      %p169 = scmp.eq.s32.totalorder %s31, 0
      %p170 = por %p168, %p169
      %p171 = scmp.ne.s32.totalorder %s157, %s158
      %p172 = scmp.eq.s32.totalorder %s32, 3
      %p173 = por %p171, %p172
      %p175 = scmp.ne.s32.totalorder %s158, %s174
      %p176 = scmp.eq.s32.totalorder %s32, 0
      %p177 = por %p175, %p176
      %s178 = smul.u32 %s33, 2
      %s179 = sadd.s32 %s178, %s34
      %s180 = smul.u32 %s45, 2
      %s181 = sadd.s32 %s180, %s41
      %s182 = ssub.s32 %s179, %s181
      %p183 = scmp.eq.s32.totalorder %s182, 0
      %s185 = sadd.s32 %s184, 1
      %s186 = scalar_select %p183, %s184, %s185
      %p189 = pneg %p183
      %p190 = scmp.eq.s32.totalorder %s26, 3
      %p191 = por %p189, %p190
      %p192 = scmp.ne.s32.totalorder %s184, %s187
      %p193 = scmp.eq.s32.totalorder %s26, 0
      %p194 = por %p192, %p193
      %p195 = scmp.ne.s32.totalorder %s184, %s187
      %p196 = scmp.eq.s32.totalorder %s31, 3
      %p197 = por %p195, %p196
      %p198 = scmp.ne.s32.totalorder %s187, %s188
      %p199 = scmp.eq.s32.totalorder %s31, 0
      %p200 = por %p198, %p199
      %p201 = scmp.ne.s32.totalorder %s187, %s188
      %p202 = scmp.eq.s32.totalorder %s32, 3
      %p203 = por %p201, %p202
      %p205 = scmp.ne.s32.totalorder %s188, %s204
      %p206 = scmp.eq.s32.totalorder %s32, 0
      %p207 = por %p205, %p206
      %s209 = sadd.s32 %s208, 1
      %p212 = scmp.eq.s32.totalorder %s26, 3
      %p213 = scmp.ne.s32.totalorder %s208, %s210
      %p214 = scmp.eq.s32.totalorder %s26, 0
      %p215 = por %p213, %p214
      %p216 = scmp.ne.s32.totalorder %s208, %s210
      %p217 = scmp.eq.s32.totalorder %s31, 3
      %p218 = por %p216, %p217
      %p219 = scmp.ne.s32.totalorder %s210, %s211
      %p220 = scmp.eq.s32.totalorder %s31, 0
      %p221 = por %p219, %p220
      %p222 = scmp.ne.s32.totalorder %s210, %s211
      %p223 = scmp.eq.s32.totalorder %s32, 3
      %p224 = por %p222, %p223
      %p226 = scmp.ne.s32.totalorder %s211, %s225
      %p227 = scmp.eq.s32.totalorder %s32, 0
      %p228 = por %p226, %p227
      %s230 = sadd.s32 %s229, 1
      %p233 = scmp.eq.s32.totalorder %s26, 3
      %p234 = scmp.ne.s32.totalorder %s229, %s231
      %p235 = scmp.eq.s32.totalorder %s26, 0
      %p236 = por %p234, %p235
      %p237 = scmp.ne.s32.totalorder %s229, %s231
      %p238 = scmp.eq.s32.totalorder %s31, 3
      %p239 = por %p237, %p238
      %p240 = scmp.ne.s32.totalorder %s231, %s232
      %p241 = scmp.eq.s32.totalorder %s31, 0
      %p242 = por %p240, %p241
      %p243 = scmp.ne.s32.totalorder %s231, %s232
      %p244 = scmp.eq.s32.totalorder %s32, 3
      %p245 = por %p243, %p244
      %p247 = scmp.ne.s32.totalorder %s232, %s246
      %p248 = scmp.eq.s32.totalorder %s32, 0
      %p249 = por %p247, %p248
      %s250 = ssub.s32 %s33, %s45
      %p251 = scmp.eq.s32.totalorder %s250, 0
      %s253 = sadd.s32 %s252, 1
      %s254 = scalar_select %p251, %s252, %s253
      %p257 = pneg %p251
      %p258 = scmp.eq.s32.totalorder %s26, 3
      %p259 = por %p257, %p258
      %p260 = scmp.ne.s32.totalorder %s252, %s255
      %p261 = scmp.eq.s32.totalorder %s26, 0
      %p262 = por %p260, %p261
      %p263 = scmp.ne.s32.totalorder %s252, %s255
      %p264 = scmp.eq.s32.totalorder %s31, 3
      %p265 = por %p263, %p264
      %p266 = scmp.ne.s32.totalorder %s255, %s256
      %p267 = scmp.eq.s32.totalorder %s31, 0
      %p268 = por %p266, %p267
      %p269 = scmp.ne.s32.totalorder %s255, %s256
      %p270 = scmp.eq.s32.totalorder %s32, 3
      %p271 = por %p269, %p270
      %p273 = scmp.ne.s32.totalorder %s256, %s272
      %p274 = scmp.eq.s32.totalorder %s32, 0
      %p275 = por %p273, %p274
      %s277 = sadd.s32 %s276, 1
      %p280 = scmp.eq.s32.totalorder %s26, 3
      %p281 = scmp.ne.s32.totalorder %s276, %s278
      %p282 = scmp.eq.s32.totalorder %s26, 0
      %p283 = por %p281, %p282
      %p284 = scmp.ne.s32.totalorder %s276, %s278
      %p285 = scmp.eq.s32.totalorder %s31, 3
      %p286 = por %p284, %p285
      %p287 = scmp.ne.s32.totalorder %s278, %s279
      %p288 = scmp.eq.s32.totalorder %s31, 0
      %p289 = por %p287, %p288
      %p290 = scmp.ne.s32.totalorder %s278, %s279
      %p291 = scmp.eq.s32.totalorder %s32, 3
      %p292 = por %p290, %p291
      %p294 = scmp.ne.s32.totalorder %s279, %s293
      %p295 = scmp.eq.s32.totalorder %s32, 0
      %p296 = por %p294, %p295
      %s298 = sadd.s32 %s297, 1
      %p301 = scmp.eq.s32.totalorder %s26, 3
      %p302 = scmp.ne.s32.totalorder %s297, %s299
      %p303 = scmp.eq.s32.totalorder %s26, 0
      %p304 = por %p302, %p303
      %p305 = scmp.ne.s32.totalorder %s297, %s299
      %p306 = scmp.eq.s32.totalorder %s31, 3
      %p307 = por %p305, %p306
      %p308 = scmp.ne.s32.totalorder %s299, %s300
      %p309 = scmp.eq.s32.totalorder %s31, 0
      %p310 = por %p308, %p309
      %p311 = scmp.ne.s32.totalorder %s299, %s300
      %p312 = scmp.eq.s32.totalorder %s32, 3
      %p313 = por %p311, %p312
      %p315 = scmp.ne.s32.totalorder %s300, %s314
      %p316 = scmp.eq.s32.totalorder %s32, 0
      %p317 = por %p315, %p316
      %s319 = sadd.s32 %s318, 1
      %p322 = scmp.eq.s32.totalorder %s26, 3
      %p323 = scmp.ne.s32.totalorder %s318, %s320
      %p324 = scmp.eq.s32.totalorder %s26, 0
      %p325 = por %p323, %p324
      %p326 = scmp.ne.s32.totalorder %s318, %s320
      %p327 = scmp.eq.s32.totalorder %s31, 3
      %p328 = por %p326, %p327
      %p329 = scmp.ne.s32.totalorder %s320, %s321
      %p330 = scmp.eq.s32.totalorder %s31, 0
      %p331 = por %p329, %p330
      %p332 = scmp.ne.s32.totalorder %s320, %s321
      %p333 = scmp.eq.s32.totalorder %s32, 3
      %p334 = por %p332, %p333
      %p336 = scmp.ne.s32.totalorder %s321, %s335
      %p337 = scmp.eq.s32.totalorder %s32, 0
      %p338 = por %p336, %p337
      %s340 = sadd.s32 %s339, 1
      %p343 = scmp.eq.s32.totalorder %s26, 3
      %p344 = scmp.ne.s32.totalorder %s339, %s341
      %p345 = scmp.eq.s32.totalorder %s26, 0
      %p346 = por %p344, %p345
      %p347 = scmp.ne.s32.totalorder %s339, %s341
      %p348 = scmp.eq.s32.totalorder %s31, 3
      %p349 = por %p347, %p348
      %p350 = scmp.ne.s32.totalorder %s341, %s342
      %p351 = scmp.eq.s32.totalorder %s31, 0
      %p352 = por %p350, %p351
      %p353 = scmp.ne.s32.totalorder %s341, %s342
      %p354 = scmp.eq.s32.totalorder %s32, 3
      %p355 = por %p353, %p354
      %p357 = scmp.ne.s32.totalorder %s342, %s356
      %p358 = scmp.eq.s32.totalorder %s32, 0
      %p359 = por %p357, %p358
      %p360 = scmp.le.s32.totalorder 1, %s26
      %p361 = scmp.lt.s32.totalorder %s26, 5
      %p362 = pnand %p360, %p361
      %p363 = pneg %p362
      // Predicated region
      $region9: #{tpu_custom_call.1} parent=5 // pred_check
        _
      $region10: #{tpu_custom_call.1} parent=5 // pred_check_branch
        %365 = sbr.rel (%p362) target = $region12
      $region11: #{tpu_custom_call.1} parent=5 // pred_region
        %s366 = ssub.s32 %s26, 1
        // Predicated region
        $region13: #{tpu_custom_call.1} parent=11 // pred_check
          %p367 = pneg %p59
        $region14: #{tpu_custom_call.1} parent=11 // pred_check_branch
          %369 = sbr.rel (%p367) target = $region16
        $region15: #{tpu_custom_call.1} parent=11 // pred_region
          %s371 = ssub.s32 512, 512
          %372 = vsyncadd [#allocation5], %s371
          %s374 = sshll.u32 [#allocation4], 4
          %s375 = int_to_ptr.vmem [resolvable:$true] %s374
          %377 = dma.hbm_to_vmem [thread:$0]  %s0, 512, %s375, [#allocation5]
        $region16: #{tpu_custom_call.1} parent=11 // pred_fallthru
          _
        // Predicated region
        $region17: #{tpu_custom_call.1} parent=11 // pred_check
          %p378 = pneg %p80
        $region18: #{tpu_custom_call.1} parent=11 // pred_check_branch
          %380 = sbr.rel (%p378) target = $region20
        $region19: #{tpu_custom_call.1} parent=11 // pred_region
          %s382 = ssub.s32 256, 256
          %383 = vsyncadd [#allocation9], %s382
          %s384 = sshll.u32 [#allocation8], 4
          %s385 = int_to_ptr.vmem [resolvable:$true] %s384
          %390 = dma.hbm_to_vmem [thread:$0]  %s1, 256, %s385, [#allocation9], 128, 128, 8
        $region20: #{tpu_custom_call.1} parent=11 // pred_fallthru
          _
        // Predicated region
        $region21: #{tpu_custom_call.1} parent=11 // pred_check
          %p391 = pneg %p221
        $region22: #{tpu_custom_call.1} parent=11 // pred_check_branch
          %393 = sbr.rel (%p391) target = $region24
        $region23: #{tpu_custom_call.1} parent=11 // pred_region
          %s395 = ssub.s32 16, 16
          %396 = vsyncadd [#allocation7], %s395
          %399 = dma.hbm_to_smem %s6, 16, [#allocation13], [#allocation7]
        $region24: #{tpu_custom_call.1} parent=11 // pred_fallthru
          _
        // Predicated region
        $region25: #{tpu_custom_call.1} parent=11 // pred_check
          %p400 = pneg %p242
        $region26: #{tpu_custom_call.1} parent=11 // pred_check_branch
          %402 = sbr.rel (%p400) target = $region28
        $region27: #{tpu_custom_call.1} parent=11 // pred_region
          %s404 = ssub.s32 16384, 16384
          %405 = vsyncadd [#allocation9], %s404
          %s406 = sshll.u32 [#allocation14], 4
          %s407 = int_to_ptr.vmem [resolvable:$true] %s406
          %412 = dma.hbm_to_vmem [thread:$0]  %s7, 16384, %s407, [#allocation9], 64, 64, 4
        $region28: #{tpu_custom_call.1} parent=11 // pred_fallthru
          _
        // Predicated region
        $region29: #{tpu_custom_call.1} parent=11 // pred_check
          %p413 = pneg %p289
        $region30: #{tpu_custom_call.1} parent=11 // pred_check_branch
          %415 = sbr.rel (%p413) target = $region32
        $region31: #{tpu_custom_call.1} parent=11 // pred_region
          %s417 = ssub.s32 16, 16
          %418 = vsyncadd [#allocation16], %s417
          %s420 = sshll.u32 [#allocation17], 4
          %s421 = int_to_ptr.vmem [resolvable:$true] %s420
          %423 = dma.hbm_to_vmem [thread:$0]  %s9, 16, %s421, [#allocation16]
        $region32: #{tpu_custom_call.1} parent=11 // pred_fallthru
          _
        // Predicated region
        $region33: #{tpu_custom_call.1} parent=11 // pred_check
          %p424 = pneg %p310
        $region34: #{tpu_custom_call.1} parent=11 // pred_check_branch
          %426 = sbr.rel (%p424) target = $region36
        $region35: #{tpu_custom_call.1} parent=11 // pred_region
          _
        $region36: #{tpu_custom_call.1} parent=11 // pred_fallthru
          _
        // Predicated region
        $region37: #{tpu_custom_call.1} parent=11 // pred_check
          %p427 = pneg %p331
        $region38: #{tpu_custom_call.1} parent=11 // pred_check_branch
          %429 = sbr.rel (%p427) target = $region40
        $region39: #{tpu_custom_call.1} parent=11 // pred_region
          %s431 = ssub.s32 16, 16
          %432 = vsyncadd [#allocation19], %s431
          %s434 = sshll.u32 [#allocation18], 4
          %s435 = int_to_ptr.vmem [resolvable:$true] %s434
          %437 = dma.hbm_to_vmem [thread:$0]  %s11, 16, %s435, [#allocation19]
        $region40: #{tpu_custom_call.1} parent=11 // pred_fallthru
          _
      $region12: #{tpu_custom_call.1} parent=5 // pred_fallthru
        _
      %p438 = scmp.lt.s32.totalorder %s26, 4
      // Predicated region
      $region41: #{tpu_custom_call.1} parent=5 // pred_check
        %p439 = pneg %p438
      $region42: #{tpu_custom_call.1} parent=5 // pred_check_branch
        %441 = sbr.rel (%p439) target = $region44
      $region43: #{tpu_custom_call.1} parent=5 // pred_region
        // Predicated region
        $region45: #{tpu_custom_call.1} parent=43 // pred_check
          %p442 = pneg %p104
        $region46: #{tpu_custom_call.1} parent=43 // pred_check_branch
          %444 = sbr.rel (%p442) target = $region48
        $region47: #{tpu_custom_call.1} parent=43 // pred_region
          %s445 = sand.u32 %s26, 1
          %s446 = scalar_lea.sflag [#allocation5], %s445
          %s447 = sand.u32 %s94, 1
          %s448 = smul.addr %s447, 256
          %s449 = scalar_lea.vmem [#allocation10], %s448
          %s450 = smul.u32 %s33, 2
          %s451 = sadd.s32 %s450, %s34
          %s453 = ssub.s32 4096, 4096
          %454 = vsyncadd %s446, %s453
          %s455 = smul.addr %s451, 64
          %s456 = smul.addr %s455, 64
          %s457 = scalar_lea.hbm %s2, %s456
          %s458 = sshll.u32 %s449, 4
          %s459 = int_to_ptr.vmem [resolvable:$true] %s458
          %464 = dma.hbm_to_vmem [thread:$0]  %s457, 4096, %s459, %s446, 256, 256, 16
        $region48: #{tpu_custom_call.1} parent=43 // pred_fallthru
          _
        // Predicated region
        $region49: #{tpu_custom_call.1} parent=43 // pred_check
          %p465 = pneg %p134
        $region50: #{tpu_custom_call.1} parent=43 // pred_check_branch
          %467 = sbr.rel (%p465) target = $region52
        $region51: #{tpu_custom_call.1} parent=43 // pred_region
          %s468 = sand.u32 %s26, 1
          %s469 = scalar_lea.sflag [#allocation5], %s468
          %s470 = sand.u32 %s124, 1
          %s471 = smul.addr %s470, 4096
          %s472 = scalar_lea.vmem [#allocation11], %s471
          %s473 = smul.u32 %s33, 2
          %s474 = sadd.s32 %s473, %s34
          %s476 = ssub.s32 65536, 65536
          %477 = vsyncadd %s469, %s476
          %s478 = smul.addr %s474, 1024
          %s479 = smul.addr %s478, 64
          %s480 = scalar_lea.hbm %s3, %s479
          %s481 = sshll.u32 %s472, 4
          %s482 = int_to_ptr.vmem [resolvable:$true] %s481
          %487 = dma.hbm_to_vmem [thread:$0]  %s480, 65536, %s482, %s469, 256, 256, 16
        $region52: #{tpu_custom_call.1} parent=43 // pred_fallthru
          _
        // Predicated region
        $region53: #{tpu_custom_call.1} parent=43 // pred_check
          %p488 = pneg %p164
        $region54: #{tpu_custom_call.1} parent=43 // pred_check_branch
          %490 = sbr.rel (%p488) target = $region56
        $region55: #{tpu_custom_call.1} parent=43 // pred_region
          %s491 = sand.u32 %s26, 1
          %s492 = scalar_lea.sflag [#allocation5], %s491
          %s493 = sand.u32 %s154, 1
          %s494 = smul.addr %s493, 4
          %s495 = scalar_lea.vmem [#allocation12], %s494
          %s496 = smul.u32 %s33, 2
          %s497 = sadd.s32 %s496, %s34
          %s499 = ssub.s32 64, 64
          %500 = vsyncadd %s492, %s499
          %s501 = smul.addr %s497, 4
          %s502 = smul.addr %s501, 16
          %s503 = scalar_lea.hbm %s4, %s502
          %s505 = sshll.u32 %s495, 4
          %s506 = int_to_ptr.vmem [resolvable:$true] %s505
          %508 = dma.hbm_to_vmem [thread:$0]  %s503, 64, %s506, %s492
        $region56: #{tpu_custom_call.1} parent=43 // pred_fallthru
          _
        // Predicated region
        $region57: #{tpu_custom_call.1} parent=43 // pred_check
          %p509 = pneg %p194
        $region58: #{tpu_custom_call.1} parent=43 // pred_check_branch
          %511 = sbr.rel (%p509) target = $region60
        $region59: #{tpu_custom_call.1} parent=43 // pred_region
          %s512 = smul.u32 %s33, 2
          %s513 = sadd.s32 %s512, %s34
          %p514 = scmp.lt.s32.totalorder %s513, 3
          %s515 = scalar_select %p514, %s513, 3
          %s516 = smul.addr %s515, 64
          %s517 = smul.addr %s516, 4
          %s518 = scalar_lea.vmem %s5, %s517
          %s519 = smul.u32 %s33, 2
          %s520 = sadd.s32 %s519, %s34
        $region60: #{tpu_custom_call.1} parent=43 // pred_fallthru
          _
        // Predicated region
        $region61: #{tpu_custom_call.1} parent=43 // pred_check
          %p521 = pneg %p262
        $region62: #{tpu_custom_call.1} parent=43 // pred_check_branch
          %523 = sbr.rel (%p521) target = $region64
        $region63: #{tpu_custom_call.1} parent=43 // pred_region
          %s524 = sand.u32 %s26, 1
          %s525 = scalar_lea.sflag [#allocation16], %s524
          %s526 = sand.u32 %s252, 1
          %s527 = smul.addr %s526, 64
          %s528 = scalar_lea.vmem [#allocation15], %s527
          %s530 = ssub.s32 1024, 1024
          %531 = vsyncadd %s525, %s530
          %s532 = smul.addr %s33, 16
          %s533 = smul.addr %s532, 64
          %s534 = scalar_lea.hbm %s8, %s533
          %s535 = sshll.u32 %s528, 4
          %s536 = int_to_ptr.vmem [resolvable:$true] %s535
          %541 = dma.hbm_to_vmem [thread:$0]  %s534, 1024, %s536, %s525, 64, 64, 4
        $region64: #{tpu_custom_call.1} parent=43 // pred_fallthru
          _
      $region44: #{tpu_custom_call.1} parent=5 // pred_fallthru
        _
      %p542 = scmp.le.s32.totalorder 1, %s26
      %p543 = scmp.lt.s32.totalorder %s26, 5
      %p544 = pnand %p542, %p543
      %p545 = pneg %p544
      // Predicated region
      $region65: #{tpu_custom_call.1} parent=5 // pred_check
        _
      $region66: #{tpu_custom_call.1} parent=5 // pred_check_branch
        %547 = sbr.rel (%p544) target = $region68
      $region67: #{tpu_custom_call.1} parent=5 // pred_region
        %s548 = ssub.s32 %s26, 1
        // Predicated region
        $region69: #{tpu_custom_call.1} parent=67 // pred_check
          %p549 = pneg %p59
        $region70: #{tpu_custom_call.1} parent=67 // pred_check_branch
          %551 = sbr.rel (%p549) target = $region72
        $region71: #{tpu_custom_call.1} parent=67 // pred_region
          %552 = dma.done [#allocation5], 512
        $region72: #{tpu_custom_call.1} parent=67 // pred_fallthru
          _
        // Predicated region
        $region73: #{tpu_custom_call.1} parent=67 // pred_check
          %p553 = pneg %p80
        $region74: #{tpu_custom_call.1} parent=67 // pred_check_branch
          %555 = sbr.rel (%p553) target = $region76
        $region75: #{tpu_custom_call.1} parent=67 // pred_region
          %556 = dma.done [#allocation9], 256
        $region76: #{tpu_custom_call.1} parent=67 // pred_fallthru
          _
        %s557 = sand.u32 %s31, 1
        %s558 = scalar_lea.sflag [#allocation5], %s557
        %s559 = sand.u32 %s97, 1
        %s560 = smul.addr %s559, 256
        %s561 = scalar_lea.vmem [#allocation10], %s560
        // Predicated region
        $region77: #{tpu_custom_call.1} parent=67 // pred_check
          %p562 = pneg %p110
        $region78: #{tpu_custom_call.1} parent=67 // pred_check_branch
          %564 = sbr.rel (%p562) target = $region80
        $region79: #{tpu_custom_call.1} parent=67 // pred_region
          %565 = dma.done %s558, 4096
        $region80: #{tpu_custom_call.1} parent=67 // pred_fallthru
          _
        %s566 = sand.u32 %s31, 1
        %s567 = scalar_lea.sflag [#allocation5], %s566
        %s568 = sand.u32 %s127, 1
        %s569 = smul.addr %s568, 4096
        %s570 = scalar_lea.vmem [#allocation11], %s569
        // Predicated region
        $region81: #{tpu_custom_call.1} parent=67 // pred_check
          %p571 = pneg %p140
        $region82: #{tpu_custom_call.1} parent=67 // pred_check_branch
          %573 = sbr.rel (%p571) target = $region84
        $region83: #{tpu_custom_call.1} parent=67 // pred_region
          %574 = dma.done %s567, 65536
        $region84: #{tpu_custom_call.1} parent=67 // pred_fallthru
          _
        %s575 = sand.u32 %s31, 1
        %s576 = scalar_lea.sflag [#allocation5], %s575
        %s577 = sand.u32 %s157, 1
        %s578 = smul.addr %s577, 4
        %s579 = scalar_lea.vmem [#allocation12], %s578
        // Predicated region
        $region85: #{tpu_custom_call.1} parent=67 // pred_check
          %p580 = pneg %p170
        $region86: #{tpu_custom_call.1} parent=67 // pred_check_branch
          %582 = sbr.rel (%p580) target = $region88
        $region87: #{tpu_custom_call.1} parent=67 // pred_region
          %583 = dma.done %s576, 64
        $region88: #{tpu_custom_call.1} parent=67 // pred_fallthru
          _
        // Predicated region
        $region89: #{tpu_custom_call.1} parent=67 // pred_check
          %p584 = pneg %p221
        $region90: #{tpu_custom_call.1} parent=67 // pred_check_branch
          %586 = sbr.rel (%p584) target = $region92
        $region91: #{tpu_custom_call.1} parent=67 // pred_region
          %587 = dma.done [#allocation7], 16
        $region92: #{tpu_custom_call.1} parent=67 // pred_fallthru
          _
        // Predicated region
        $region93: #{tpu_custom_call.1} parent=67 // pred_check
          %p588 = pneg %p242
        $region94: #{tpu_custom_call.1} parent=67 // pred_check_branch
          %590 = sbr.rel (%p588) target = $region96
        $region95: #{tpu_custom_call.1} parent=67 // pred_region
          %591 = dma.done [#allocation9], 16384
        $region96: #{tpu_custom_call.1} parent=67 // pred_fallthru
          _
        %s592 = sand.u32 %s31, 1
        %s593 = scalar_lea.sflag [#allocation16], %s592
        %s594 = sand.u32 %s255, 1
        %s595 = smul.addr %s594, 64
        %s596 = scalar_lea.vmem [#allocation15], %s595
        // Predicated region
        $region97: #{tpu_custom_call.1} parent=67 // pred_check
          %p597 = pneg %p268
        $region98: #{tpu_custom_call.1} parent=67 // pred_check_branch
          %599 = sbr.rel (%p597) target = $region100
        $region99: #{tpu_custom_call.1} parent=67 // pred_region
          %600 = dma.done %s593, 1024
        $region100: #{tpu_custom_call.1} parent=67 // pred_fallthru
          _
        // Predicated region
        $region101: #{tpu_custom_call.1} parent=67 // pred_check
          %p601 = pneg %p289
        $region102: #{tpu_custom_call.1} parent=67 // pred_check_branch
          %603 = sbr.rel (%p601) target = $region104
        $region103: #{tpu_custom_call.1} parent=67 // pred_region
          %604 = dma.done [#allocation16], 16
        $region104: #{tpu_custom_call.1} parent=67 // pred_fallthru
          _
        // Predicated region
        $region105: #{tpu_custom_call.1} parent=67 // pred_check
          %p605 = pneg %p331
        $region106: #{tpu_custom_call.1} parent=67 // pred_check_branch
          %607 = sbr.rel (%p605) target = $region108
        $region107: #{tpu_custom_call.1} parent=67 // pred_region
          %608 = dma.done [#allocation19], 16
        $region108: #{tpu_custom_call.1} parent=67 // pred_fallthru
          _
        %609 = sfence
        %p610 = pneg %p59
        %p611 = pneg %p56
        %p612 = pneg %p80
        %p613 = pneg %p77
        %s614 = sand.u32 %s31, 1
        %s615 = scalar_lea.sflag [#allocation5], %s614
        %s616 = sand.u32 %s97, 1
        %s617 = smul.addr %s616, 256
        %s618 = scalar_lea.vmem [#allocation10], %s617
        %p619 = pneg %p110
        %p620 = pneg %p107
        %s621 = sand.u32 %s31, 1
        %s622 = scalar_lea.sflag [#allocation5], %s621
        %s623 = sand.u32 %s127, 1
        %s624 = smul.addr %s623, 4096
        %s625 = scalar_lea.vmem [#allocation11], %s624
        %p626 = pneg %p140
        %p627 = pneg %p137
        %s628 = sand.u32 %s31, 1
        %s629 = scalar_lea.sflag [#allocation5], %s628
        %s630 = sand.u32 %s157, 1
        %s631 = smul.addr %s630, 4
        %s632 = scalar_lea.vmem [#allocation12], %s631
        %p633 = pneg %p170
        %p634 = pneg %p167
        %s635 = smul.u32 %s35, 2
        %s636 = sadd.s32 %s635, %s36
        %p637 = scmp.lt.s32.totalorder %s636, 3
        %s638 = scalar_select %p637, %s636, 3
        %s639 = smul.addr %s638, 64
        %s640 = smul.addr %s639, 4
        %s641 = scalar_lea.vmem %s5, %s640
        %p642 = pneg %p200
        %p643 = pneg %p197
        %p644 = pneg %p221
        %p645 = pneg %p218
        %p646 = pneg %p242
        %p647 = pneg %p239
        %s648 = sand.u32 %s31, 1
        %s649 = scalar_lea.sflag [#allocation16], %s648
        %s650 = sand.u32 %s255, 1
        %s651 = smul.addr %s650, 64
        %s652 = scalar_lea.vmem [#allocation15], %s651
        %p653 = pneg %p268
        %p654 = pneg %p265
        %p655 = pneg %p289
        %p656 = pneg %p286
        %p657 = pneg %p310
        %p658 = pneg %p307
        %p659 = pneg %p331
        %p660 = pneg %p328
        %p661 = pneg %p352
        %p662 = pneg %p349
        %s663 = smul.u32 %s35, 2
        %s664 = sadd.s32 %s663, %s36
        %s665 = smul.u32 %s35, 2
        %s666 = sadd.s32 %s665, %s36
        %s667 = smul.u32 %s35, 2
        %s668 = sadd.s32 %s667, %s36
        %s669 = smul.u32 %s35, 2
        %s670 = sadd.s32 %s669, %s36
        %p671 = scmp.lt.s32.totalorder %s670, 3
        %s672 = scalar_select %p671, %s670, 3
        %s673 = smul.addr %s672, 64
        %s674 = smul.addr %s673, 4
        %s675 = scalar_lea.vmem %s5, %s674
        %s676 = smul.u32 %s35, 2
        %s677 = sadd.s32 %s676, %s36
        %v679 = vld [vmem:[#allocation4] sm:$0xff]
        %v680 = vld [vmem:[#allocation4 + $0x8] sm:$0xff]
        %v681 = vld [vmem:[#allocation4 + $0x10] sm:$0xff]
        %v682 = vld [vmem:[#allocation4 + $0x18] sm:$0xff]
        %v683 = vld [vmem:[#allocation8] sm:$0xff]
        %v684 = vld [vmem:[#allocation8 + $0x8] sm:$0xff]
        %v689 = vcombine.high %v679, %v679
        %v691 = vunpack.c.l.s4 1983009808
        %v692 = vunpack.c.0.s8 %v691
        %v693 = vlaneseq
        %v694 = vshrl.u32 %v693, 7
        %v695 = vsub.s32 %v692, %v694
        %v696 = vrot.slane %v679, %v695
        %v698 = vunpack.c.l.s4 1983009808
        %v699 = vunpack.c.0.s8 %v698
        %v700 = vlaneseq
        %v701 = vshrl.u32 %v700, 7
        %v702 = vsub.s32 %v699, %v701
        %v703 = vrot.slane %v689, %v702
        %v704 = vcombine.high %v696, %v696
        %v705 = vcombine.high %v703, %v703
        %v706 = vcombine.high %v680, %v680
        %v708 = vunpack.c.l.s4 1983009808
        %v709 = vunpack.c.0.s8 %v708
        %v710 = vlaneseq
        %v711 = vshrl.u32 %v710, 7
        %v712 = vsub.s32 %v709, %v711
        %v713 = vrot.slane %v680, %v712
        %v715 = vunpack.c.l.s4 1983009808
        %v716 = vunpack.c.0.s8 %v715
        %v717 = vlaneseq
        %v718 = vshrl.u32 %v717, 7
        %v719 = vsub.s32 %v716, %v718
        %v720 = vrot.slane %v706, %v719
        %v721 = vcombine.high %v713, %v713
        %v722 = vcombine.high %v720, %v720
        %v723 = vcombine.high %v681, %v681
        %v725 = vunpack.c.l.s4 1983009808
        %v726 = vunpack.c.0.s8 %v725
        %v727 = vlaneseq
        %v728 = vshrl.u32 %v727, 7
        %v729 = vsub.s32 %v726, %v728
        %v730 = vrot.slane %v681, %v729
        %v732 = vunpack.c.l.s4 1983009808
        %v733 = vunpack.c.0.s8 %v732
        %v734 = vlaneseq
        %v735 = vshrl.u32 %v734, 7
        %v736 = vsub.s32 %v733, %v735
        %v737 = vrot.slane %v723, %v736
        %v738 = vcombine.high %v730, %v730
        %v739 = vcombine.high %v737, %v737
        %v740 = vcombine.high %v682, %v682
        %v742 = vunpack.c.l.s4 1983009808
        %v743 = vunpack.c.0.s8 %v742
        %v744 = vlaneseq
        %v745 = vshrl.u32 %v744, 7
        %v746 = vsub.s32 %v743, %v745
        %v747 = vrot.slane %v682, %v746
        %v749 = vunpack.c.l.s4 1983009808
        %v750 = vunpack.c.0.s8 %v749
        %v751 = vlaneseq
        %v752 = vshrl.u32 %v751, 7
        %v753 = vsub.s32 %v750, %v752
        %v754 = vrot.slane %v740, %v753
        %v755 = vcombine.high %v747, %v747
        %v756 = vcombine.high %v754, %v754
        %v773 = vpack.c.bf16 %v696, %v696
        %v774 = vpack.c.bf16 %v704, %v704
        %v775 = vpack.c.bf16 %v703, %v703
        %v776 = vpack.c.bf16 %v705, %v705
        %v777 = vpack.c.bf16 %v713, %v713
        %v778 = vpack.c.bf16 %v721, %v721
        %v779 = vpack.c.bf16 %v720, %v720
        %v780 = vpack.c.bf16 %v722, %v722
        %v781 = vpack.c.bf16 %v730, %v730
        %v782 = vpack.c.bf16 %v738, %v738
        %v783 = vpack.c.bf16 %v737, %v737
        %v784 = vpack.c.bf16 %v739, %v739
        %v785 = vpack.c.bf16 %v747, %v747
        %v786 = vpack.c.bf16 %v755, %v755
        %v787 = vpack.c.bf16 %v754, %v754
        %v788 = vpack.c.bf16 %v756, %v756
        %p789 = scmp.eq.s32.totalorder %s35, 0
        %p790 = scmp.eq.s32.totalorder %s36, 0
        %p791 = pnand %p789, %p790
        %p792 = pneg %p791
        // Predicated region
        $region109: #{tpu_custom_call.1} parent=67 // pred_check
          _
        $region110: #{tpu_custom_call.1} parent=67 // pred_check_branch
          %794 = sbr.rel (%p791) target = $region112
        $region111: #{tpu_custom_call.1} parent=67 // pred_region
          %v795 = vld [vmem:[#allocation14] sm:$0xf]
          %v796 = vld [vmem:[#allocation14 + $0x4] sm:$0xf]
          %v797 = vld [vmem:[#allocation14 + $0x8] sm:$0xf]
          %v798 = vld [vmem:[#allocation14 + $0xc] sm:$0xf]
          %v799 = vld [vmem:[#allocation14 + $0x10] sm:$0xf]
          %v800 = vld [vmem:[#allocation14 + $0x14] sm:$0xf]
          %v801 = vld [vmem:[#allocation14 + $0x18] sm:$0xf]
          %v802 = vld [vmem:[#allocation14 + $0x1c] sm:$0xf]
          %v803 = vld [vmem:[#allocation14 + $0x20] sm:$0xf]
          %v804 = vld [vmem:[#allocation14 + $0x24] sm:$0xf]
          %v805 = vld [vmem:[#allocation14 + $0x28] sm:$0xf]
          %v806 = vld [vmem:[#allocation14 + $0x2c] sm:$0xf]
          %v807 = vld [vmem:[#allocation14 + $0x30] sm:$0xf]
          %v808 = vld [vmem:[#allocation14 + $0x34] sm:$0xf]
          %v809 = vld [vmem:[#allocation14 + $0x38] sm:$0xf]
          %v810 = vld [vmem:[#allocation14 + $0x3c] sm:$0xf]
          %v811 = vld [vmem:[#allocation14 + $0x40] sm:$0xf]
          %v812 = vld [vmem:[#allocation14 + $0x44] sm:$0xf]
          %v813 = vld [vmem:[#allocation14 + $0x48] sm:$0xf]
          %v814 = vld [vmem:[#allocation14 + $0x4c] sm:$0xf]
          %v815 = vld [vmem:[#allocation14 + $0x50] sm:$0xf]
          %v816 = vld [vmem:[#allocation14 + $0x54] sm:$0xf]
          %v817 = vld [vmem:[#allocation14 + $0x58] sm:$0xf]
          %v818 = vld [vmem:[#allocation14 + $0x5c] sm:$0xf]
          %v819 = vld [vmem:[#allocation14 + $0x60] sm:$0xf]
          %v820 = vld [vmem:[#allocation14 + $0x64] sm:$0xf]
          %v821 = vld [vmem:[#allocation14 + $0x68] sm:$0xf]
          %v822 = vld [vmem:[#allocation14 + $0x6c] sm:$0xf]
          %v823 = vld [vmem:[#allocation14 + $0x70] sm:$0xf]
          %v824 = vld [vmem:[#allocation14 + $0x74] sm:$0xf]
          %v825 = vld [vmem:[#allocation14 + $0x78] sm:$0xf]
          %v826 = vld [vmem:[#allocation14 + $0x7c] sm:$0xf]
          %v827 = vld [vmem:[#allocation14 + $0x80] sm:$0xf]
          %v828 = vld [vmem:[#allocation14 + $0x84] sm:$0xf]
          %v829 = vld [vmem:[#allocation14 + $0x88] sm:$0xf]
          %v830 = vld [vmem:[#allocation14 + $0x8c] sm:$0xf]
          %v831 = vld [vmem:[#allocation14 + $0x90] sm:$0xf]
          %v832 = vld [vmem:[#allocation14 + $0x94] sm:$0xf]
          %v833 = vld [vmem:[#allocation14 + $0x98] sm:$0xf]
          %v834 = vld [vmem:[#allocation14 + $0x9c] sm:$0xf]
          %v835 = vld [vmem:[#allocation14 + $0xa0] sm:$0xf]
          %v836 = vld [vmem:[#allocation14 + $0xa4] sm:$0xf]
          %v837 = vld [vmem:[#allocation14 + $0xa8] sm:$0xf]
          %v838 = vld [vmem:[#allocation14 + $0xac] sm:$0xf]
          %v839 = vld [vmem:[#allocation14 + $0xb0] sm:$0xf]
          %v840 = vld [vmem:[#allocation14 + $0xb4] sm:$0xf]
          %v841 = vld [vmem:[#allocation14 + $0xb8] sm:$0xf]
          %v842 = vld [vmem:[#allocation14 + $0xbc] sm:$0xf]
          %v843 = vld [vmem:[#allocation14 + $0xc0] sm:$0xf]
          %v844 = vld [vmem:[#allocation14 + $0xc4] sm:$0xf]
          %v845 = vld [vmem:[#allocation14 + $0xc8] sm:$0xf]
          %v846 = vld [vmem:[#allocation14 + $0xcc] sm:$0xf]
          %v847 = vld [vmem:[#allocation14 + $0xd0] sm:$0xf]
          %v848 = vld [vmem:[#allocation14 + $0xd4] sm:$0xf]
          %v849 = vld [vmem:[#allocation14 + $0xd8] sm:$0xf]
          %v850 = vld [vmem:[#allocation14 + $0xdc] sm:$0xf]
          %v851 = vld [vmem:[#allocation14 + $0xe0] sm:$0xf]
          %v852 = vld [vmem:[#allocation14 + $0xe4] sm:$0xf]
          %v853 = vld [vmem:[#allocation14 + $0xe8] sm:$0xf]
          %v854 = vld [vmem:[#allocation14 + $0xec] sm:$0xf]
          %v855 = vld [vmem:[#allocation14 + $0xf0] sm:$0xf]
          %v856 = vld [vmem:[#allocation14 + $0xf4] sm:$0xf]
          %v857 = vld [vmem:[#allocation14 + $0xf8] sm:$0xf]
          %v858 = vld [vmem:[#allocation14 + $0xfc] sm:$0xf]
          %v859 = vld [vmem:[#allocation14 + $0x100] sm:$0xf]
          %v860 = vld [vmem:[#allocation14 + $0x104] sm:$0xf]
          %v861 = vld [vmem:[#allocation14 + $0x108] sm:$0xf]
          %v862 = vld [vmem:[#allocation14 + $0x10c] sm:$0xf]
          %v863 = vld [vmem:[#allocation14 + $0x110] sm:$0xf]
          %v864 = vld [vmem:[#allocation14 + $0x114] sm:$0xf]
          %v865 = vld [vmem:[#allocation14 + $0x118] sm:$0xf]
          %v866 = vld [vmem:[#allocation14 + $0x11c] sm:$0xf]
          %v867 = vld [vmem:[#allocation14 + $0x120] sm:$0xf]
          %v868 = vld [vmem:[#allocation14 + $0x124] sm:$0xf]
          %v869 = vld [vmem:[#allocation14 + $0x128] sm:$0xf]
          %v870 = vld [vmem:[#allocation14 + $0x12c] sm:$0xf]
          %v871 = vld [vmem:[#allocation14 + $0x130] sm:$0xf]
          %v872 = vld [vmem:[#allocation14 + $0x134] sm:$0xf]
          %v873 = vld [vmem:[#allocation14 + $0x138] sm:$0xf]
          %v874 = vld [vmem:[#allocation14 + $0x13c] sm:$0xf]
          %v875 = vld [vmem:[#allocation14 + $0x140] sm:$0xf]
          %v876 = vld [vmem:[#allocation14 + $0x144] sm:$0xf]
          %v877 = vld [vmem:[#allocation14 + $0x148] sm:$0xf]
          %v878 = vld [vmem:[#allocation14 + $0x14c] sm:$0xf]
          %v879 = vld [vmem:[#allocation14 + $0x150] sm:$0xf]
          %v880 = vld [vmem:[#allocation14 + $0x154] sm:$0xf]
          %v881 = vld [vmem:[#allocation14 + $0x158] sm:$0xf]
          %v882 = vld [vmem:[#allocation14 + $0x15c] sm:$0xf]
          %v883 = vld [vmem:[#allocation14 + $0x160] sm:$0xf]
          %v884 = vld [vmem:[#allocation14 + $0x164] sm:$0xf]
          %v885 = vld [vmem:[#allocation14 + $0x168] sm:$0xf]
          %v886 = vld [vmem:[#allocation14 + $0x16c] sm:$0xf]
          %v887 = vld [vmem:[#allocation14 + $0x170] sm:$0xf]
          %v888 = vld [vmem:[#allocation14 + $0x174] sm:$0xf]
          %v889 = vld [vmem:[#allocation14 + $0x178] sm:$0xf]
          %v890 = vld [vmem:[#allocation14 + $0x17c] sm:$0xf]
          %v891 = vld [vmem:[#allocation14 + $0x180] sm:$0xf]
          %v892 = vld [vmem:[#allocation14 + $0x184] sm:$0xf]
          %v893 = vld [vmem:[#allocation14 + $0x188] sm:$0xf]
          %v894 = vld [vmem:[#allocation14 + $0x18c] sm:$0xf]
          %v895 = vld [vmem:[#allocation14 + $0x190] sm:$0xf]
          %v896 = vld [vmem:[#allocation14 + $0x194] sm:$0xf]
          %v897 = vld [vmem:[#allocation14 + $0x198] sm:$0xf]
          %v898 = vld [vmem:[#allocation14 + $0x19c] sm:$0xf]
          %v899 = vld [vmem:[#allocation14 + $0x1a0] sm:$0xf]
          %v900 = vld [vmem:[#allocation14 + $0x1a4] sm:$0xf]
          %v901 = vld [vmem:[#allocation14 + $0x1a8] sm:$0xf]
          %v902 = vld [vmem:[#allocation14 + $0x1ac] sm:$0xf]
          %v903 = vld [vmem:[#allocation14 + $0x1b0] sm:$0xf]
          %v904 = vld [vmem:[#allocation14 + $0x1b4] sm:$0xf]
          %v905 = vld [vmem:[#allocation14 + $0x1b8] sm:$0xf]
          %v906 = vld [vmem:[#allocation14 + $0x1bc] sm:$0xf]
          %v907 = vld [vmem:[#allocation14 + $0x1c0] sm:$0xf]
          %v908 = vld [vmem:[#allocation14 + $0x1c4] sm:$0xf]
          %v909 = vld [vmem:[#allocation14 + $0x1c8] sm:$0xf]
          %v910 = vld [vmem:[#allocation14 + $0x1cc] sm:$0xf]
          %v911 = vld [vmem:[#allocation14 + $0x1d0] sm:$0xf]
          %v912 = vld [vmem:[#allocation14 + $0x1d4] sm:$0xf]
          %v913 = vld [vmem:[#allocation14 + $0x1d8] sm:$0xf]
          %v914 = vld [vmem:[#allocation14 + $0x1dc] sm:$0xf]
          %v915 = vld [vmem:[#allocation14 + $0x1e0] sm:$0xf]
          %v916 = vld [vmem:[#allocation14 + $0x1e4] sm:$0xf]
          %v917 = vld [vmem:[#allocation14 + $0x1e8] sm:$0xf]
          %v918 = vld [vmem:[#allocation14 + $0x1ec] sm:$0xf]
          %v919 = vld [vmem:[#allocation14 + $0x1f0] sm:$0xf]
          %v920 = vld [vmem:[#allocation14 + $0x1f4] sm:$0xf]
          %v921 = vld [vmem:[#allocation14 + $0x1f8] sm:$0xf]
          %v922 = vld [vmem:[#allocation14 + $0x1fc] sm:$0xf]
          %v923 = vld [vmem:[#allocation14 + $0x200] sm:$0xf]
          %v924 = vld [vmem:[#allocation14 + $0x204] sm:$0xf]
          %v925 = vld [vmem:[#allocation14 + $0x208] sm:$0xf]
          %v926 = vld [vmem:[#allocation14 + $0x20c] sm:$0xf]
          %v927 = vld [vmem:[#allocation14 + $0x210] sm:$0xf]
          %v928 = vld [vmem:[#allocation14 + $0x214] sm:$0xf]
          %v929 = vld [vmem:[#allocation14 + $0x218] sm:$0xf]
          %v930 = vld [vmem:[#allocation14 + $0x21c] sm:$0xf]
          %v931 = vld [vmem:[#allocation14 + $0x220] sm:$0xf]
          %v932 = vld [vmem:[#allocation14 + $0x224] sm:$0xf]
          %v933 = vld [vmem:[#allocation14 + $0x228] sm:$0xf]
          %v934 = vld [vmem:[#allocation14 + $0x22c] sm:$0xf]
          %v935 = vld [vmem:[#allocation14 + $0x230] sm:$0xf]
          %v936 = vld [vmem:[#allocation14 + $0x234] sm:$0xf]
          %v937 = vld [vmem:[#allocation14 + $0x238] sm:$0xf]
          %v938 = vld [vmem:[#allocation14 + $0x23c] sm:$0xf]
          %v939 = vld [vmem:[#allocation14 + $0x240] sm:$0xf]
          %v940 = vld [vmem:[#allocation14 + $0x244] sm:$0xf]
          %v941 = vld [vmem:[#allocation14 + $0x248] sm:$0xf]
          %v942 = vld [vmem:[#allocation14 + $0x24c] sm:$0xf]
          %v943 = vld [vmem:[#allocation14 + $0x250] sm:$0xf]
          %v944 = vld [vmem:[#allocation14 + $0x254] sm:$0xf]
          %v945 = vld [vmem:[#allocation14 + $0x258] sm:$0xf]
          %v946 = vld [vmem:[#allocation14 + $0x25c] sm:$0xf]
          %v947 = vld [vmem:[#allocation14 + $0x260] sm:$0xf]
          %v948 = vld [vmem:[#allocation14 + $0x264] sm:$0xf]
          %v949 = vld [vmem:[#allocation14 + $0x268] sm:$0xf]
          %v950 = vld [vmem:[#allocation14 + $0x26c] sm:$0xf]
          %v951 = vld [vmem:[#allocation14 + $0x270] sm:$0xf]
          %v952 = vld [vmem:[#allocation14 + $0x274] sm:$0xf]
          %v953 = vld [vmem:[#allocation14 + $0x278] sm:$0xf]
          %v954 = vld [vmem:[#allocation14 + $0x27c] sm:$0xf]
          %v955 = vld [vmem:[#allocation14 + $0x280] sm:$0xf]
          %v956 = vld [vmem:[#allocation14 + $0x284] sm:$0xf]
          %v957 = vld [vmem:[#allocation14 + $0x288] sm:$0xf]
          %v958 = vld [vmem:[#allocation14 + $0x28c] sm:$0xf]
          %v959 = vld [vmem:[#allocation14 + $0x290] sm:$0xf]
          %v960 = vld [vmem:[#allocation14 + $0x294] sm:$0xf]
          %v961 = vld [vmem:[#allocation14 + $0x298] sm:$0xf]
          %v962 = vld [vmem:[#allocation14 + $0x29c] sm:$0xf]
          %v963 = vld [vmem:[#allocation14 + $0x2a0] sm:$0xf]
          %v964 = vld [vmem:[#allocation14 + $0x2a4] sm:$0xf]
          %v965 = vld [vmem:[#allocation14 + $0x2a8] sm:$0xf]
          %v966 = vld [vmem:[#allocation14 + $0x2ac] sm:$0xf]
          %v967 = vld [vmem:[#allocation14 + $0x2b0] sm:$0xf]
          %v968 = vld [vmem:[#allocation14 + $0x2b4] sm:$0xf]
          %v969 = vld [vmem:[#allocation14 + $0x2b8] sm:$0xf]
          %v970 = vld [vmem:[#allocation14 + $0x2bc] sm:$0xf]
          %v971 = vld [vmem:[#allocation14 + $0x2c0] sm:$0xf]
          %v972 = vld [vmem:[#allocation14 + $0x2c4] sm:$0xf]
          %v973 = vld [vmem:[#allocation14 + $0x2c8] sm:$0xf]
          %v974 = vld [vmem:[#allocation14 + $0x2cc] sm:$0xf]
          %v975 = vld [vmem:[#allocation14 + $0x2d0] sm:$0xf]
          %v976 = vld [vmem:[#allocation14 + $0x2d4] sm:$0xf]
          %v977 = vld [vmem:[#allocation14 + $0x2d8] sm:$0xf]
          %v978 = vld [vmem:[#allocation14 + $0x2dc] sm:$0xf]
          %v979 = vld [vmem:[#allocation14 + $0x2e0] sm:$0xf]
          %v980 = vld [vmem:[#allocation14 + $0x2e4] sm:$0xf]
          %v981 = vld [vmem:[#allocation14 + $0x2e8] sm:$0xf]
          %v982 = vld [vmem:[#allocation14 + $0x2ec] sm:$0xf]
          %v983 = vld [vmem:[#allocation14 + $0x2f0] sm:$0xf]
          %v984 = vld [vmem:[#allocation14 + $0x2f4] sm:$0xf]
          %v985 = vld [vmem:[#allocation14 + $0x2f8] sm:$0xf]
          %v986 = vld [vmem:[#allocation14 + $0x2fc] sm:$0xf]
          %v987 = vld [vmem:[#allocation14 + $0x300] sm:$0xf]
          %v988 = vld [vmem:[#allocation14 + $0x304] sm:$0xf]
          %v989 = vld [vmem:[#allocation14 + $0x308] sm:$0xf]
          %v990 = vld [vmem:[#allocation14 + $0x30c] sm:$0xf]
          %v991 = vld [vmem:[#allocation14 + $0x310] sm:$0xf]
          %v992 = vld [vmem:[#allocation14 + $0x314] sm:$0xf]
          %v993 = vld [vmem:[#allocation14 + $0x318] sm:$0xf]
          %v994 = vld [vmem:[#allocation14 + $0x31c] sm:$0xf]
          %v995 = vld [vmem:[#allocation14 + $0x320] sm:$0xf]
          %v996 = vld [vmem:[#allocation14 + $0x324] sm:$0xf]
          %v997 = vld [vmem:[#allocation14 + $0x328] sm:$0xf]
          %v998 = vld [vmem:[#allocation14 + $0x32c] sm:$0xf]
          %v999 = vld [vmem:[#allocation14 + $0x330] sm:$0xf]
          %v1000 = vld [vmem:[#allocation14 + $0x334] sm:$0xf]
          %v1001 = vld [vmem:[#allocation14 + $0x338] sm:$0xf]
          %v1002 = vld [vmem:[#allocation14 + $0x33c] sm:$0xf]
          %v1003 = vld [vmem:[#allocation14 + $0x340] sm:$0xf]
          %v1004 = vld [vmem:[#allocation14 + $0x344] sm:$0xf]
          %v1005 = vld [vmem:[#allocation14 + $0x348] sm:$0xf]
          %v1006 = vld [vmem:[#allocation14 + $0x34c] sm:$0xf]
          %v1007 = vld [vmem:[#allocation14 + $0x350] sm:$0xf]
          %v1008 = vld [vmem:[#allocation14 + $0x354] sm:$0xf]
          %v1009 = vld [vmem:[#allocation14 + $0x358] sm:$0xf]
          %v1010 = vld [vmem:[#allocation14 + $0x35c] sm:$0xf]
          %v1011 = vld [vmem:[#allocation14 + $0x360] sm:$0xf]
          %v1012 = vld [vmem:[#allocation14 + $0x364] sm:$0xf]
          %v1013 = vld [vmem:[#allocation14 + $0x368] sm:$0xf]
          %v1014 = vld [vmem:[#allocation14 + $0x36c] sm:$0xf]
          %v1015 = vld [vmem:[#allocation14 + $0x370] sm:$0xf]
          %v1016 = vld [vmem:[#allocation14 + $0x374] sm:$0xf]
          %v1017 = vld [vmem:[#allocation14 + $0x378] sm:$0xf]
          %v1018 = vld [vmem:[#allocation14 + $0x37c] sm:$0xf]
          %v1019 = vld [vmem:[#allocation14 + $0x380] sm:$0xf]
          %v1020 = vld [vmem:[#allocation14 + $0x384] sm:$0xf]
          %v1021 = vld [vmem:[#allocation14 + $0x388] sm:$0xf]
          %v1022 = vld [vmem:[#allocation14 + $0x38c] sm:$0xf]
          %v1023 = vld [vmem:[#allocation14 + $0x390] sm:$0xf]
          %v1024 = vld [vmem:[#allocation14 + $0x394] sm:$0xf]
          %v1025 = vld [vmem:[#allocation14 + $0x398] sm:$0xf]
          %v1026 = vld [vmem:[#allocation14 + $0x39c] sm:$0xf]
          %v1027 = vld [vmem:[#allocation14 + $0x3a0] sm:$0xf]
          %v1028 = vld [vmem:[#allocation14 + $0x3a4] sm:$0xf]
          %v1029 = vld [vmem:[#allocation14 + $0x3a8] sm:$0xf]
          %v1030 = vld [vmem:[#allocation14 + $0x3ac] sm:$0xf]
          %v1031 = vld [vmem:[#allocation14 + $0x3b0] sm:$0xf]
          %v1032 = vld [vmem:[#allocation14 + $0x3b4] sm:$0xf]
          %v1033 = vld [vmem:[#allocation14 + $0x3b8] sm:$0xf]
          %v1034 = vld [vmem:[#allocation14 + $0x3bc] sm:$0xf]
          %v1035 = vld [vmem:[#allocation14 + $0x3c0] sm:$0xf]
          %v1036 = vld [vmem:[#allocation14 + $0x3c4] sm:$0xf]
          %v1037 = vld [vmem:[#allocation14 + $0x3c8] sm:$0xf]
          %v1038 = vld [vmem:[#allocation14 + $0x3cc] sm:$0xf]
          %v1039 = vld [vmem:[#allocation14 + $0x3d0] sm:$0xf]
          %v1040 = vld [vmem:[#allocation14 + $0x3d4] sm:$0xf]
          %v1041 = vld [vmem:[#allocation14 + $0x3d8] sm:$0xf]
          %v1042 = vld [vmem:[#allocation14 + $0x3dc] sm:$0xf]
          %v1043 = vld [vmem:[#allocation14 + $0x3e0] sm:$0xf]
          %v1044 = vld [vmem:[#allocation14 + $0x3e4] sm:$0xf]
          %v1045 = vld [vmem:[#allocation14 + $0x3e8] sm:$0xf]
          %v1046 = vld [vmem:[#allocation14 + $0x3ec] sm:$0xf]
          %v1047 = vld [vmem:[#allocation14 + $0x3f0] sm:$0xf]
          %v1048 = vld [vmem:[#allocation14 + $0x3f4] sm:$0xf]
          %v1049 = vld [vmem:[#allocation14 + $0x3f8] sm:$0xf]
          %v1050 = vld [vmem:[#allocation14 + $0x3fc] sm:$0xf]
          %v1307 = vunpack.c.l.b16 %v795
          %v1308 = vunpack.c.l.b16 %v796
          %v1309 = vunpack.c.l.b16 %v797
          %v1310 = vunpack.c.l.b16 %v798
          %v1311 = vunpack.c.l.b16 %v799
          %v1312 = vunpack.c.l.b16 %v800
          %v1313 = vunpack.c.l.b16 %v801
          %v1314 = vunpack.c.l.b16 %v802
          %v1315 = vunpack.c.l.b16 %v803
          %v1316 = vunpack.c.l.b16 %v804
          %v1317 = vunpack.c.l.b16 %v805
          %v1318 = vunpack.c.l.b16 %v806
          %v1319 = vunpack.c.l.b16 %v807
          %v1320 = vunpack.c.l.b16 %v808
          %v1321 = vunpack.c.l.b16 %v809
          %v1322 = vunpack.c.l.b16 %v810
          %v1323 = vunpack.c.l.b16 %v811
          %v1324 = vunpack.c.l.b16 %v812
          %v1325 = vunpack.c.l.b16 %v813
          %v1326 = vunpack.c.l.b16 %v814
          %v1327 = vunpack.c.l.b16 %v815
          %v1328 = vunpack.c.l.b16 %v816
          %v1329 = vunpack.c.l.b16 %v817
          %v1330 = vunpack.c.l.b16 %v818
          %v1331 = vunpack.c.l.b16 %v819
          %v1332 = vunpack.c.l.b16 %v820
          %v1333 = vunpack.c.l.b16 %v821
          %v1334 = vunpack.c.l.b16 %v822
          %v1335 = vunpack.c.l.b16 %v823
          %v1336 = vunpack.c.l.b16 %v824
          %v1337 = vunpack.c.l.b16 %v825
          %v1338 = vunpack.c.l.b16 %v826
          %v1339 = vunpack.c.l.b16 %v827
          %v1340 = vunpack.c.l.b16 %v828
          %v1341 = vunpack.c.l.b16 %v829
          %v1342 = vunpack.c.l.b16 %v830
          %v1343 = vunpack.c.l.b16 %v831
          %v1344 = vunpack.c.l.b16 %v832
          %v1345 = vunpack.c.l.b16 %v833
          %v1346 = vunpack.c.l.b16 %v834
          %v1347 = vunpack.c.l.b16 %v835
          %v1348 = vunpack.c.l.b16 %v836
          %v1349 = vunpack.c.l.b16 %v837
          %v1350 = vunpack.c.l.b16 %v838
          %v1351 = vunpack.c.l.b16 %v839
          %v1352 = vunpack.c.l.b16 %v840
          %v1353 = vunpack.c.l.b16 %v841
          %v1354 = vunpack.c.l.b16 %v842
          %v1355 = vunpack.c.l.b16 %v843
          %v1356 = vunpack.c.l.b16 %v844
          %v1357 = vunpack.c.l.b16 %v845
          %v1358 = vunpack.c.l.b16 %v846
          %v1359 = vunpack.c.l.b16 %v847
          %v1360 = vunpack.c.l.b16 %v848
          %v1361 = vunpack.c.l.b16 %v849
          %v1362 = vunpack.c.l.b16 %v850
          %v1363 = vunpack.c.l.b16 %v851
          %v1364 = vunpack.c.l.b16 %v852
          %v1365 = vunpack.c.l.b16 %v853
          %v1366 = vunpack.c.l.b16 %v854
          %v1367 = vunpack.c.l.b16 %v855
          %v1368 = vunpack.c.l.b16 %v856
          %v1369 = vunpack.c.l.b16 %v857
          %v1370 = vunpack.c.l.b16 %v858
          %v1371 = vunpack.c.l.b16 %v859
          %v1372 = vunpack.c.l.b16 %v860
          %v1373 = vunpack.c.l.b16 %v861
          %v1374 = vunpack.c.l.b16 %v862
          %v1375 = vunpack.c.l.b16 %v863
          %v1376 = vunpack.c.l.b16 %v864
          %v1377 = vunpack.c.l.b16 %v865
          %v1378 = vunpack.c.l.b16 %v866
          %v1379 = vunpack.c.l.b16 %v867
          %v1380 = vunpack.c.l.b16 %v868
          %v1381 = vunpack.c.l.b16 %v869
          %v1382 = vunpack.c.l.b16 %v870
          %v1383 = vunpack.c.l.b16 %v871
          %v1384 = vunpack.c.l.b16 %v872
          %v1385 = vunpack.c.l.b16 %v873
          %v1386 = vunpack.c.l.b16 %v874
          %v1387 = vunpack.c.l.b16 %v875
          %v1388 = vunpack.c.l.b16 %v876
          %v1389 = vunpack.c.l.b16 %v877
          %v1390 = vunpack.c.l.b16 %v878
          %v1391 = vunpack.c.l.b16 %v879
          %v1392 = vunpack.c.l.b16 %v880
          %v1393 = vunpack.c.l.b16 %v881
          %v1394 = vunpack.c.l.b16 %v882
          %v1395 = vunpack.c.l.b16 %v883
          %v1396 = vunpack.c.l.b16 %v884
          %v1397 = vunpack.c.l.b16 %v885
          %v1398 = vunpack.c.l.b16 %v886
          %v1399 = vunpack.c.l.b16 %v887
          %v1400 = vunpack.c.l.b16 %v888
          %v1401 = vunpack.c.l.b16 %v889
          %v1402 = vunpack.c.l.b16 %v890
          %v1403 = vunpack.c.l.b16 %v891
          %v1404 = vunpack.c.l.b16 %v892
          %v1405 = vunpack.c.l.b16 %v893
          %v1406 = vunpack.c.l.b16 %v894
          %v1407 = vunpack.c.l.b16 %v895
          %v1408 = vunpack.c.l.b16 %v896
          %v1409 = vunpack.c.l.b16 %v897
          %v1410 = vunpack.c.l.b16 %v898
          %v1411 = vunpack.c.l.b16 %v899
          %v1412 = vunpack.c.l.b16 %v900
          %v1413 = vunpack.c.l.b16 %v901
          %v1414 = vunpack.c.l.b16 %v902
          %v1415 = vunpack.c.l.b16 %v903
          %v1416 = vunpack.c.l.b16 %v904
          %v1417 = vunpack.c.l.b16 %v905
          %v1418 = vunpack.c.l.b16 %v906
          %v1419 = vunpack.c.l.b16 %v907
          %v1420 = vunpack.c.l.b16 %v908
          %v1421 = vunpack.c.l.b16 %v909
          %v1422 = vunpack.c.l.b16 %v910
          %v1423 = vunpack.c.l.b16 %v911
          %v1424 = vunpack.c.l.b16 %v912
          %v1425 = vunpack.c.l.b16 %v913
          %v1426 = vunpack.c.l.b16 %v914
          %v1427 = vunpack.c.l.b16 %v915
          %v1428 = vunpack.c.l.b16 %v916
          %v1429 = vunpack.c.l.b16 %v917
          %v1430 = vunpack.c.l.b16 %v918
          %v1431 = vunpack.c.l.b16 %v919
          %v1432 = vunpack.c.l.b16 %v920
          %v1433 = vunpack.c.l.b16 %v921
          %v1434 = vunpack.c.l.b16 %v922
          %v1435 = vunpack.c.l.b16 %v923
          %v1436 = vunpack.c.l.b16 %v924
          %v1437 = vunpack.c.l.b16 %v925
          %v1438 = vunpack.c.l.b16 %v926
          %v1439 = vunpack.c.l.b16 %v927
          %v1440 = vunpack.c.l.b16 %v928
          %v1441 = vunpack.c.l.b16 %v929
          %v1442 = vunpack.c.l.b16 %v930
          %v1443 = vunpack.c.l.b16 %v931
          %v1444 = vunpack.c.l.b16 %v932
          %v1445 = vunpack.c.l.b16 %v933
          %v1446 = vunpack.c.l.b16 %v934
          %v1447 = vunpack.c.l.b16 %v935
          %v1448 = vunpack.c.l.b16 %v936
          %v1449 = vunpack.c.l.b16 %v937
          %v1450 = vunpack.c.l.b16 %v938
          %v1451 = vunpack.c.l.b16 %v939
          %v1452 = vunpack.c.l.b16 %v940
          %v1453 = vunpack.c.l.b16 %v941
          %v1454 = vunpack.c.l.b16 %v942
          %v1455 = vunpack.c.l.b16 %v943
          %v1456 = vunpack.c.l.b16 %v944
          %v1457 = vunpack.c.l.b16 %v945
          %v1458 = vunpack.c.l.b16 %v946
          %v1459 = vunpack.c.l.b16 %v947
          %v1460 = vunpack.c.l.b16 %v948
          %v1461 = vunpack.c.l.b16 %v949
          %v1462 = vunpack.c.l.b16 %v950
          %v1463 = vunpack.c.l.b16 %v951
          %v1464 = vunpack.c.l.b16 %v952
          %v1465 = vunpack.c.l.b16 %v953
          %v1466 = vunpack.c.l.b16 %v954
          %v1467 = vunpack.c.l.b16 %v955
          %v1468 = vunpack.c.l.b16 %v956
          %v1469 = vunpack.c.l.b16 %v957
          %v1470 = vunpack.c.l.b16 %v958
          %v1471 = vunpack.c.l.b16 %v959
          %v1472 = vunpack.c.l.b16 %v960
          %v1473 = vunpack.c.l.b16 %v961
          %v1474 = vunpack.c.l.b16 %v962
          %v1475 = vunpack.c.l.b16 %v963
          %v1476 = vunpack.c.l.b16 %v964
          %v1477 = vunpack.c.l.b16 %v965
          %v1478 = vunpack.c.l.b16 %v966
          %v1479 = vunpack.c.l.b16 %v967
          %v1480 = vunpack.c.l.b16 %v968
          %v1481 = vunpack.c.l.b16 %v969
          %v1482 = vunpack.c.l.b16 %v970
          %v1483 = vunpack.c.l.b16 %v971
          %v1484 = vunpack.c.l.b16 %v972
          %v1485 = vunpack.c.l.b16 %v973
          %v1486 = vunpack.c.l.b16 %v974
          %v1487 = vunpack.c.l.b16 %v975
          %v1488 = vunpack.c.l.b16 %v976
          %v1489 = vunpack.c.l.b16 %v977
          %v1490 = vunpack.c.l.b16 %v978
          %v1491 = vunpack.c.l.b16 %v979
          %v1492 = vunpack.c.l.b16 %v980
          %v1493 = vunpack.c.l.b16 %v981
          %v1494 = vunpack.c.l.b16 %v982
          %v1495 = vunpack.c.l.b16 %v983
          %v1496 = vunpack.c.l.b16 %v984
          %v1497 = vunpack.c.l.b16 %v985
          %v1498 = vunpack.c.l.b16 %v986
          %v1499 = vunpack.c.l.b16 %v987
          %v1500 = vunpack.c.l.b16 %v988
          %v1501 = vunpack.c.l.b16 %v989
          %v1502 = vunpack.c.l.b16 %v990
          %v1503 = vunpack.c.l.b16 %v991
          %v1504 = vunpack.c.l.b16 %v992
          %v1505 = vunpack.c.l.b16 %v993
          %v1506 = vunpack.c.l.b16 %v994
          %v1507 = vunpack.c.l.b16 %v995
          %v1508 = vunpack.c.l.b16 %v996
          %v1509 = vunpack.c.l.b16 %v997
          %v1510 = vunpack.c.l.b16 %v998
          %v1511 = vunpack.c.l.b16 %v999
          %v1512 = vunpack.c.l.b16 %v1000
          %v1513 = vunpack.c.l.b16 %v1001
          %v1514 = vunpack.c.l.b16 %v1002
          %v1515 = vunpack.c.l.b16 %v1003
          %v1516 = vunpack.c.l.b16 %v1004
          %v1517 = vunpack.c.l.b16 %v1005
          %v1518 = vunpack.c.l.b16 %v1006
          %v1519 = vunpack.c.l.b16 %v1007
          %v1520 = vunpack.c.l.b16 %v1008
          %v1521 = vunpack.c.l.b16 %v1009
          %v1522 = vunpack.c.l.b16 %v1010
          %v1523 = vunpack.c.l.b16 %v1011
          %v1524 = vunpack.c.l.b16 %v1012
          %v1525 = vunpack.c.l.b16 %v1013
          %v1526 = vunpack.c.l.b16 %v1014
          %v1527 = vunpack.c.l.b16 %v1015
          %v1528 = vunpack.c.l.b16 %v1016
          %v1529 = vunpack.c.l.b16 %v1017
          %v1530 = vunpack.c.l.b16 %v1018
          %v1531 = vunpack.c.l.b16 %v1019
          %v1532 = vunpack.c.l.b16 %v1020
          %v1533 = vunpack.c.l.b16 %v1021
          %v1534 = vunpack.c.l.b16 %v1022
          %v1535 = vunpack.c.l.b16 %v1023
          %v1536 = vunpack.c.l.b16 %v1024
          %v1537 = vunpack.c.l.b16 %v1025
          %v1538 = vunpack.c.l.b16 %v1026
          %v1539 = vunpack.c.l.b16 %v1027
          %v1540 = vunpack.c.l.b16 %v1028
          %v1541 = vunpack.c.l.b16 %v1029
          %v1542 = vunpack.c.l.b16 %v1030
          %v1543 = vunpack.c.l.b16 %v1031
          %v1544 = vunpack.c.l.b16 %v1032
          %v1545 = vunpack.c.l.b16 %v1033
          %v1546 = vunpack.c.l.b16 %v1034
          %v1547 = vunpack.c.l.b16 %v1035
          %v1548 = vunpack.c.l.b16 %v1036
          %v1549 = vunpack.c.l.b16 %v1037
          %v1550 = vunpack.c.l.b16 %v1038
          %v1551 = vunpack.c.l.b16 %v1039
          %v1552 = vunpack.c.l.b16 %v1040
          %v1553 = vunpack.c.l.b16 %v1041
          %v1554 = vunpack.c.l.b16 %v1042
          %v1555 = vunpack.c.l.b16 %v1043
          %v1556 = vunpack.c.l.b16 %v1044
          %v1557 = vunpack.c.l.b16 %v1045
          %v1558 = vunpack.c.l.b16 %v1046
          %v1559 = vunpack.c.l.b16 %v1047
          %v1560 = vunpack.c.l.b16 %v1048
          %v1561 = vunpack.c.l.b16 %v1049
          %v1562 = vunpack.c.l.b16 %v1050
          %v1563 = vpack.c.b16 %v1308, %v1307
          %v1564 = vpack.c.b16 %v1310, %v1309
          %v1565 = vpack.c.b16 %v1312, %v1311
          %v1566 = vpack.c.b16 %v1314, %v1313
          %v1567 = vpack.c.b16 %v1316, %v1315
          %v1568 = vpack.c.b16 %v1318, %v1317
          %v1569 = vpack.c.b16 %v1320, %v1319
          %v1570 = vpack.c.b16 %v1322, %v1321
          %v1571 = vpack.c.b16 %v1324, %v1323
          %v1572 = vpack.c.b16 %v1326, %v1325
          %v1573 = vpack.c.b16 %v1328, %v1327
          %v1574 = vpack.c.b16 %v1330, %v1329
          %v1575 = vpack.c.b16 %v1332, %v1331
          %v1576 = vpack.c.b16 %v1334, %v1333
          %v1577 = vpack.c.b16 %v1336, %v1335
          %v1578 = vpack.c.b16 %v1338, %v1337
          %v1579 = vpack.c.b16 %v1340, %v1339
          %v1580 = vpack.c.b16 %v1342, %v1341
          %v1581 = vpack.c.b16 %v1344, %v1343
          %v1582 = vpack.c.b16 %v1346, %v1345
          %v1583 = vpack.c.b16 %v1348, %v1347
          %v1584 = vpack.c.b16 %v1350, %v1349
          %v1585 = vpack.c.b16 %v1352, %v1351
          %v1586 = vpack.c.b16 %v1354, %v1353
          %v1587 = vpack.c.b16 %v1356, %v1355
          %v1588 = vpack.c.b16 %v1358, %v1357
          %v1589 = vpack.c.b16 %v1360, %v1359
          %v1590 = vpack.c.b16 %v1362, %v1361
          %v1591 = vpack.c.b16 %v1364, %v1363
          %v1592 = vpack.c.b16 %v1366, %v1365
          %v1593 = vpack.c.b16 %v1368, %v1367
          %v1594 = vpack.c.b16 %v1370, %v1369
          %v1595 = vpack.c.b16 %v1372, %v1371
          %v1596 = vpack.c.b16 %v1374, %v1373
          %v1597 = vpack.c.b16 %v1376, %v1375
          %v1598 = vpack.c.b16 %v1378, %v1377
          %v1599 = vpack.c.b16 %v1380, %v1379
          %v1600 = vpack.c.b16 %v1382, %v1381
          %v1601 = vpack.c.b16 %v1384, %v1383
          %v1602 = vpack.c.b16 %v1386, %v1385
          %v1603 = vpack.c.b16 %v1388, %v1387
          %v1604 = vpack.c.b16 %v1390, %v1389
          %v1605 = vpack.c.b16 %v1392, %v1391
          %v1606 = vpack.c.b16 %v1394, %v1393
          %v1607 = vpack.c.b16 %v1396, %v1395
          %v1608 = vpack.c.b16 %v1398, %v1397
          %v1609 = vpack.c.b16 %v1400, %v1399
          %v1610 = vpack.c.b16 %v1402, %v1401
          %v1611 = vpack.c.b16 %v1404, %v1403
          %v1612 = vpack.c.b16 %v1406, %v1405
          %v1613 = vpack.c.b16 %v1408, %v1407
          %v1614 = vpack.c.b16 %v1410, %v1409
          %v1615 = vpack.c.b16 %v1412, %v1411
          %v1616 = vpack.c.b16 %v1414, %v1413
          %v1617 = vpack.c.b16 %v1416, %v1415
          %v1618 = vpack.c.b16 %v1418, %v1417
          %v1619 = vpack.c.b16 %v1420, %v1419
          %v1620 = vpack.c.b16 %v1422, %v1421
          %v1621 = vpack.c.b16 %v1424, %v1423
          %v1622 = vpack.c.b16 %v1426, %v1425
          %v1623 = vpack.c.b16 %v1428, %v1427
          %v1624 = vpack.c.b16 %v1430, %v1429
          %v1625 = vpack.c.b16 %v1432, %v1431
          %v1626 = vpack.c.b16 %v1434, %v1433
          %v1627 = vpack.c.b16 %v1436, %v1435
          %v1628 = vpack.c.b16 %v1438, %v1437
          %v1629 = vpack.c.b16 %v1440, %v1439
          %v1630 = vpack.c.b16 %v1442, %v1441
          %v1631 = vpack.c.b16 %v1444, %v1443
          %v1632 = vpack.c.b16 %v1446, %v1445
          %v1633 = vpack.c.b16 %v1448, %v1447
          %v1634 = vpack.c.b16 %v1450, %v1449
          %v1635 = vpack.c.b16 %v1452, %v1451
          %v1636 = vpack.c.b16 %v1454, %v1453
          %v1637 = vpack.c.b16 %v1456, %v1455
          %v1638 = vpack.c.b16 %v1458, %v1457
          %v1639 = vpack.c.b16 %v1460, %v1459
          %v1640 = vpack.c.b16 %v1462, %v1461
          %v1641 = vpack.c.b16 %v1464, %v1463
          %v1642 = vpack.c.b16 %v1466, %v1465
          %v1643 = vpack.c.b16 %v1468, %v1467
          %v1644 = vpack.c.b16 %v1470, %v1469
          %v1645 = vpack.c.b16 %v1472, %v1471
          %v1646 = vpack.c.b16 %v1474, %v1473
          %v1647 = vpack.c.b16 %v1476, %v1475
          %v1648 = vpack.c.b16 %v1478, %v1477
          %v1649 = vpack.c.b16 %v1480, %v1479
          %v1650 = vpack.c.b16 %v1482, %v1481
          %v1651 = vpack.c.b16 %v1484, %v1483
          %v1652 = vpack.c.b16 %v1486, %v1485
          %v1653 = vpack.c.b16 %v1488, %v1487
          %v1654 = vpack.c.b16 %v1490, %v1489
          %v1655 = vpack.c.b16 %v1492, %v1491
          %v1656 = vpack.c.b16 %v1494, %v1493
          %v1657 = vpack.c.b16 %v1496, %v1495
          %v1658 = vpack.c.b16 %v1498, %v1497
          %v1659 = vpack.c.b16 %v1500, %v1499
          %v1660 = vpack.c.b16 %v1502, %v1501
          %v1661 = vpack.c.b16 %v1504, %v1503
          %v1662 = vpack.c.b16 %v1506, %v1505
          %v1663 = vpack.c.b16 %v1508, %v1507
          %v1664 = vpack.c.b16 %v1510, %v1509
          %v1665 = vpack.c.b16 %v1512, %v1511
          %v1666 = vpack.c.b16 %v1514, %v1513
          %v1667 = vpack.c.b16 %v1516, %v1515
          %v1668 = vpack.c.b16 %v1518, %v1517
          %v1669 = vpack.c.b16 %v1520, %v1519
          %v1670 = vpack.c.b16 %v1522, %v1521
          %v1671 = vpack.c.b16 %v1524, %v1523
          %v1672 = vpack.c.b16 %v1526, %v1525
          %v1673 = vpack.c.b16 %v1528, %v1527
          %v1674 = vpack.c.b16 %v1530, %v1529
          %v1675 = vpack.c.b16 %v1532, %v1531
          %v1676 = vpack.c.b16 %v1534, %v1533
          %v1677 = vpack.c.b16 %v1536, %v1535
          %v1678 = vpack.c.b16 %v1538, %v1537
          %v1679 = vpack.c.b16 %v1540, %v1539
          %v1680 = vpack.c.b16 %v1542, %v1541
          %v1681 = vpack.c.b16 %v1544, %v1543
          %v1682 = vpack.c.b16 %v1546, %v1545
          %v1683 = vpack.c.b16 %v1548, %v1547
          %v1684 = vpack.c.b16 %v1550, %v1549
          %v1685 = vpack.c.b16 %v1552, %v1551
          %v1686 = vpack.c.b16 %v1554, %v1553
          %v1687 = vpack.c.b16 %v1556, %v1555
          %v1688 = vpack.c.b16 %v1558, %v1557
          %v1689 = vpack.c.b16 %v1560, %v1559
          %v1690 = vpack.c.b16 %v1562, %v1561
          %1819 = vmatprep.subr.bf16.mxu0 0
          %1820 = vmatpush1.bf16.msra.mxu0 %v1563
          %1821 = vmatprep.subr.bf16.mxu0 0
          %1822 = vmatpush1.bf16.msra.mxu0 %v1564
          %1823 = vmatprep.subr.bf16.mxu0 0
          %1824 = vmatpush1.bf16.msra.mxu0 %v1565
          %1825 = vmatprep.subr.bf16.mxu0 0
          %1826 = vmatpush1.bf16.msra.mxu0 %v1566
          %1827 = vmatprep.subr.bf16.mxu0 0
          %1828 = vmatpush1.bf16.msra.mxu0 %v1567
          %1829 = vmatprep.subr.bf16.mxu0 0
          %1830 = vmatpush1.bf16.msra.mxu0 %v1568
          %1831 = vmatprep.subr.bf16.mxu0 0
          %1832 = vmatpush1.bf16.msra.mxu0 %v1569
          %1833 = vmatprep.subr.bf16.mxu0 0
          %1834 = vmatpush1.bf16.msra.mxu0 %v1570
          %1835 = vmatprep.subr.bf16.mxu0 0
          %1836 = vmatpush1.bf16.msra.mxu0 %v1571
          %1837 = vmatprep.subr.bf16.mxu0 0
          %1838 = vmatpush1.bf16.msra.mxu0 %v1572
          %1839 = vmatprep.subr.bf16.mxu0 0
          %1840 = vmatpush1.bf16.msra.mxu0 %v1573
          %1841 = vmatprep.subr.bf16.mxu0 0
          %1842 = vmatpush1.bf16.msra.mxu0 %v1574
          %1843 = vmatprep.subr.bf16.mxu0 0
          %1844 = vmatpush1.bf16.msra.mxu0 %v1575
          %1845 = vmatprep.subr.bf16.mxu0 0
          %1846 = vmatpush1.bf16.msra.mxu0 %v1576
          %1847 = vmatprep.subr.bf16.mxu0 0
          %1848 = vmatpush1.bf16.msra.mxu0 %v1577
          %1849 = vmatprep.subr.bf16.mxu0 0
          %1850 = vmatpush1.bf16.msra.mxu0 %v1578
          %1851 = vmatprep.mubr.bf16.mxu0 %v774
          %1852 = vmatmul.mubr.bf16.gmra.mrb[0].mxu0 %v773
          %v1853 = vpop.f32.mrb[0].mxu0
          %v1854 = vadd.f32 0.0, %v1853
          %v1855 = vpop.f32.mrb[0].mxu0
          %v1856 = vpop.f32.mrb[0].mxu0
          %v1857 = vpop.f32.mrb[0].mxu0
          %1858 = vdwg.mxu0
          %1859 = vmatprep.subr.bf16.mxu0 0
          %1860 = vmatpush1.bf16.msra.mxu0 %v1579
          %1861 = vmatprep.subr.bf16.mxu0 0
          %1862 = vmatpush1.bf16.msra.mxu0 %v1580
          %1863 = vmatprep.subr.bf16.mxu0 0
          %1864 = vmatpush1.bf16.msra.mxu0 %v1581
          %1865 = vmatprep.subr.bf16.mxu0 0
          %1866 = vmatpush1.bf16.msra.mxu0 %v1582
          %1867 = vmatprep.subr.bf16.mxu0 0
          %1868 = vmatpush1.bf16.msra.mxu0 %v1583
          %1869 = vmatprep.subr.bf16.mxu0 0
          %1870 = vmatpush1.bf16.msra.mxu0 %v1584
          %1871 = vmatprep.subr.bf16.mxu0 0
          %1872 = vmatpush1.bf16.msra.mxu0 %v1585
          %1873 = vmatprep.subr.bf16.mxu0 0
          %1874 = vmatpush1.bf16.msra.mxu0 %v1586
          %1875 = vmatprep.subr.bf16.mxu0 0
          %1876 = vmatpush1.bf16.msra.mxu0 %v1587
          %1877 = vmatprep.subr.bf16.mxu0 0
          %1878 = vmatpush1.bf16.msra.mxu0 %v1588
          %1879 = vmatprep.subr.bf16.mxu0 0
          %1880 = vmatpush1.bf16.msra.mxu0 %v1589
          %1881 = vmatprep.subr.bf16.mxu0 0
          %1882 = vmatpush1.bf16.msra.mxu0 %v1590
          %1883 = vmatprep.subr.bf16.mxu0 0
          %1884 = vmatpush1.bf16.msra.mxu0 %v1591
          %1885 = vmatprep.subr.bf16.mxu0 0
          %1886 = vmatpush1.bf16.msra.mxu0 %v1592
          %1887 = vmatprep.subr.bf16.mxu0 0
          %1888 = vmatpush1.bf16.msra.mxu0 %v1593
          %1889 = vmatprep.subr.bf16.mxu0 0
          %1890 = vmatpush1.bf16.msra.mxu0 %v1594
          %1891 = vmatprep.mubr.bf16.mxu0 %v776
          %1892 = vmatmul.mubr.bf16.gmra.mrb[0].mxu0 %v775
          %v1893 = vpop.f32.mrb[0].mxu0
          %v1894 = vadd.f32 %v1854, %v1893
          %v1895 = vpop.f32.mrb[0].mxu0
          %v1896 = vpop.f32.mrb[0].mxu0
          %v1897 = vpop.f32.mrb[0].mxu0
          %1898 = vdwg.mxu0
          %1899 = vmatprep.subr.bf16.mxu0 0
          %1900 = vmatpush1.bf16.msra.mxu0 %v1595
          %1901 = vmatprep.subr.bf16.mxu0 0
          %1902 = vmatpush1.bf16.msra.mxu0 %v1596
          %1903 = vmatprep.subr.bf16.mxu0 0
          %1904 = vmatpush1.bf16.msra.mxu0 %v1597
          %1905 = vmatprep.subr.bf16.mxu0 0
          %1906 = vmatpush1.bf16.msra.mxu0 %v1598
          %1907 = vmatprep.subr.bf16.mxu0 0
          %1908 = vmatpush1.bf16.msra.mxu0 %v1599
          %1909 = vmatprep.subr.bf16.mxu0 0
          %1910 = vmatpush1.bf16.msra.mxu0 %v1600
          %1911 = vmatprep.subr.bf16.mxu0 0
          %1912 = vmatpush1.bf16.msra.mxu0 %v1601
          %1913 = vmatprep.subr.bf16.mxu0 0
          %1914 = vmatpush1.bf16.msra.mxu0 %v1602
          %1915 = vmatprep.subr.bf16.mxu0 0
          %1916 = vmatpush1.bf16.msra.mxu0 %v1603
          %1917 = vmatprep.subr.bf16.mxu0 0
          %1918 = vmatpush1.bf16.msra.mxu0 %v1604
          %1919 = vmatprep.subr.bf16.mxu0 0
          %1920 = vmatpush1.bf16.msra.mxu0 %v1605
          %1921 = vmatprep.subr.bf16.mxu0 0
          %1922 = vmatpush1.bf16.msra.mxu0 %v1606
          %1923 = vmatprep.subr.bf16.mxu0 0
          %1924 = vmatpush1.bf16.msra.mxu0 %v1607
          %1925 = vmatprep.subr.bf16.mxu0 0
          %1926 = vmatpush1.bf16.msra.mxu0 %v1608
          %1927 = vmatprep.subr.bf16.mxu0 0
          %1928 = vmatpush1.bf16.msra.mxu0 %v1609
          %1929 = vmatprep.subr.bf16.mxu0 0
          %1930 = vmatpush1.bf16.msra.mxu0 %v1610
          %1931 = vmatprep.mubr.bf16.mxu0 %v778
          %1932 = vmatmul.mubr.bf16.gmra.mrb[0].mxu0 %v777
          %v1933 = vpop.f32.mrb[0].mxu0
          %v1934 = vadd.f32 %v1894, %v1933
          %v1935 = vpop.f32.mrb[0].mxu0
          %v1936 = vpop.f32.mrb[0].mxu0
          %v1937 = vpop.f32.mrb[0].mxu0
          %1938 = vdwg.mxu0
          %1939 = vmatprep.subr.bf16.mxu0 0
          %1940 = vmatpush1.bf16.msra.mxu0 %v1611
          %1941 = vmatprep.subr.bf16.mxu0 0
          %1942 = vmatpush1.bf16.msra.mxu0 %v1612
          %1943 = vmatprep.subr.bf16.mxu0 0
          %1944 = vmatpush1.bf16.msra.mxu0 %v1613
          %1945 = vmatprep.subr.bf16.mxu0 0
          %1946 = vmatpush1.bf16.msra.mxu0 %v1614
          %1947 = vmatprep.subr.bf16.mxu0 0
          %1948 = vmatpush1.bf16.msra.mxu0 %v1615
          %1949 = vmatprep.subr.bf16.mxu0 0
          %1950 = vmatpush1.bf16.msra.mxu0 %v1616
          %1951 = vmatprep.subr.bf16.mxu0 0
          %1952 = vmatpush1.bf16.msra.mxu0 %v1617
          %1953 = vmatprep.subr.bf16.mxu0 0
          %1954 = vmatpush1.bf16.msra.mxu0 %v1618
          %1955 = vmatprep.subr.bf16.mxu0 0
          %1956 = vmatpush1.bf16.msra.mxu0 %v1619
          %1957 = vmatprep.subr.bf16.mxu0 0
          %1958 = vmatpush1.bf16.msra.mxu0 %v1620
          %1959 = vmatprep.subr.bf16.mxu0 0
          %1960 = vmatpush1.bf16.msra.mxu0 %v1621
          %1961 = vmatprep.subr.bf16.mxu0 0
          %1962 = vmatpush1.bf16.msra.mxu0 %v1622
          %1963 = vmatprep.subr.bf16.mxu0 0
          %1964 = vmatpush1.bf16.msra.mxu0 %v1623
          %1965 = vmatprep.subr.bf16.mxu0 0
          %1966 = vmatpush1.bf16.msra.mxu0 %v1624
          %1967 = vmatprep.subr.bf16.mxu0 0
          %1968 = vmatpush1.bf16.msra.mxu0 %v1625
          %1969 = vmatprep.subr.bf16.mxu0 0
          %1970 = vmatpush1.bf16.msra.mxu0 %v1626
          %1971 = vmatprep.mubr.bf16.mxu0 %v780
          %1972 = vmatmul.mubr.bf16.gmra.mrb[0].mxu0 %v779
          %v1973 = vpop.f32.mrb[0].mxu0
          %v1974 = vadd.f32 %v1934, %v1973
          %v1975 = vpop.f32.mrb[0].mxu0
          %v1976 = vpop.f32.mrb[0].mxu0
          %v1977 = vpop.f32.mrb[0].mxu0
          %1978 = vdwg.mxu0
          %1979 = vmatprep.subr.bf16.mxu0 0
          %1980 = vmatpush1.bf16.msra.mxu0 %v1627
          %1981 = vmatprep.subr.bf16.mxu0 0
          %1982 = vmatpush1.bf16.msra.mxu0 %v1628
          %1983 = vmatprep.subr.bf16.mxu0 0
          %1984 = vmatpush1.bf16.msra.mxu0 %v1629
          %1985 = vmatprep.subr.bf16.mxu0 0
          %1986 = vmatpush1.bf16.msra.mxu0 %v1630
          %1987 = vmatprep.subr.bf16.mxu0 0
          %1988 = vmatpush1.bf16.msra.mxu0 %v1631
          %1989 = vmatprep.subr.bf16.mxu0 0
          %1990 = vmatpush1.bf16.msra.mxu0 %v1632
          %1991 = vmatprep.subr.bf16.mxu0 0
          %1992 = vmatpush1.bf16.msra.mxu0 %v1633
          %1993 = vmatprep.subr.bf16.mxu0 0
          %1994 = vmatpush1.bf16.msra.mxu0 %v1634
          %1995 = vmatprep.subr.bf16.mxu0 0
          %1996 = vmatpush1.bf16.msra.mxu0 %v1635
          %1997 = vmatprep.subr.bf16.mxu0 0
          %1998 = vmatpush1.bf16.msra.mxu0 %v1636
          %1999 = vmatprep.subr.bf16.mxu0 0
          %2000 = vmatpush1.bf16.msra.mxu0 %v1637
          %2001 = vmatprep.subr.bf16.mxu0 0
          %2002 = vmatpush1.bf16.msra.mxu0 %v1638
          %2003 = vmatprep.subr.bf16.mxu0 0
          %2004 = vmatpush1.bf16.msra.mxu0 %v1639
          %2005 = vmatprep.subr.bf16.mxu0 0
          %2006 = vmatpush1.bf16.msra.mxu0 %v1640
          %2007 = vmatprep.subr.bf16.mxu0 0
          %2008 = vmatpush1.bf16.msra.mxu0 %v1641
          %2009 = vmatprep.subr.bf16.mxu0 0
          %2010 = vmatpush1.bf16.msra.mxu0 %v1642
          %2011 = vmatprep.mubr.bf16.mxu0 %v782
          %2012 = vmatmul.mubr.bf16.gmra.mrb[0].mxu0 %v781
          %v2013 = vpop.f32.mrb[0].mxu0
          %v2014 = vadd.f32 %v1974, %v2013
          %v2015 = vpop.f32.mrb[0].mxu0
          %v2016 = vpop.f32.mrb[0].mxu0
          %v2017 = vpop.f32.mrb[0].mxu0
          %2018 = vdwg.mxu0
          %2019 = vmatprep.subr.bf16.mxu0 0
          %2020 = vmatpush1.bf16.msra.mxu0 %v1643
          %2021 = vmatprep.subr.bf16.mxu0 0
          %2022 = vmatpush1.bf16.msra.mxu0 %v1644
          %2023 = vmatprep.subr.bf16.mxu0 0
          %2024 = vmatpush1.bf16.msra.mxu0 %v1645
          %2025 = vmatprep.subr.bf16.mxu0 0
          %2026 = vmatpush1.bf16.msra.mxu0 %v1646
          %2027 = vmatprep.subr.bf16.mxu0 0
          %2028 = vmatpush1.bf16.msra.mxu0 %v1647
          %2029 = vmatprep.subr.bf16.mxu0 0
          %2030 = vmatpush1.bf16.msra.mxu0 %v1648
          %2031 = vmatprep.subr.bf16.mxu0 0
          %2032 = vmatpush1.bf16.msra.mxu0 %v1649
          %2033 = vmatprep.subr.bf16.mxu0 0
          %2034 = vmatpush1.bf16.msra.mxu0 %v1650
          %2035 = vmatprep.subr.bf16.mxu0 0
          %2036 = vmatpush1.bf16.msra.mxu0 %v1651
          %2037 = vmatprep.subr.bf16.mxu0 0
          %2038 = vmatpush1.bf16.msra.mxu0 %v1652
          %2039 = vmatprep.subr.bf16.mxu0 0
          %2040 = vmatpush1.bf16.msra.mxu0 %v1653
          %2041 = vmatprep.subr.bf16.mxu0 0
          %2042 = vmatpush1.bf16.msra.mxu0 %v1654
          %2043 = vmatprep.subr.bf16.mxu0 0
          %2044 = vmatpush1.bf16.msra.mxu0 %v1655
          %2045 = vmatprep.subr.bf16.mxu0 0
          %2046 = vmatpush1.bf16.msra.mxu0 %v1656
          %2047 = vmatprep.subr.bf16.mxu0 0
          %2048 = vmatpush1.bf16.msra.mxu0 %v1657
          %2049 = vmatprep.subr.bf16.mxu0 0
          %2050 = vmatpush1.bf16.msra.mxu0 %v1658
          %2051 = vmatprep.mubr.bf16.mxu0 %v784
          %2052 = vmatmul.mubr.bf16.gmra.mrb[0].mxu0 %v783
          %v2053 = vpop.f32.mrb[0].mxu0
          %v2054 = vadd.f32 %v2014, %v2053
          %v2055 = vpop.f32.mrb[0].mxu0
          %v2056 = vpop.f32.mrb[0].mxu0
          %v2057 = vpop.f32.mrb[0].mxu0
          %2058 = vdwg.mxu0
          %2059 = vmatprep.subr.bf16.mxu0 0
          %2060 = vmatpush1.bf16.msra.mxu0 %v1659
          %2061 = vmatprep.subr.bf16.mxu0 0
          %2062 = vmatpush1.bf16.msra.mxu0 %v1660
          %2063 = vmatprep.subr.bf16.mxu0 0
          %2064 = vmatpush1.bf16.msra.mxu0 %v1661
          %2065 = vmatprep.subr.bf16.mxu0 0
          %2066 = vmatpush1.bf16.msra.mxu0 %v1662
          %2067 = vmatprep.subr.bf16.mxu0 0
          %2068 = vmatpush1.bf16.msra.mxu0 %v1663
          %2069 = vmatprep.subr.bf16.mxu0 0
          %2070 = vmatpush1.bf16.msra.mxu0 %v1664
          %2071 = vmatprep.subr.bf16.mxu0 0
          %2072 = vmatpush1.bf16.msra.mxu0 %v1665
          %2073 = vmatprep.subr.bf16.mxu0 0
          %2074 = vmatpush1.bf16.msra.mxu0 %v1666
          %2075 = vmatprep.subr.bf16.mxu0 0
          %2076 = vmatpush1.bf16.msra.mxu0 %v1667
          %2077 = vmatprep.subr.bf16.mxu0 0
          %2078 = vmatpush1.bf16.msra.mxu0 %v1668
          %2079 = vmatprep.subr.bf16.mxu0 0
          %2080 = vmatpush1.bf16.msra.mxu0 %v1669
          %2081 = vmatprep.subr.bf16.mxu0 0
          %2082 = vmatpush1.bf16.msra.mxu0 %v1670
          %2083 = vmatprep.subr.bf16.mxu0 0
          %2084 = vmatpush1.bf16.msra.mxu0 %v1671
          %2085 = vmatprep.subr.bf16.mxu0 0
          %2086 = vmatpush1.bf16.msra.mxu0 %v1672
          %2087 = vmatprep.subr.bf16.mxu0 0
          %2088 = vmatpush1.bf16.msra.mxu0 %v1673
          %2089 = vmatprep.subr.bf16.mxu0 0
          %2090 = vmatpush1.bf16.msra.mxu0 %v1674
          %2091 = vmatprep.mubr.bf16.mxu0 %v786
          %2092 = vmatmul.mubr.bf16.gmra.mrb[0].mxu0 %v785
          %v2093 = vpop.f32.mrb[0].mxu0
          %v2094 = vadd.f32 %v2054, %v2093
          %v2095 = vpop.f32.mrb[0].mxu0
          %v2096 = vpop.f32.mrb[0].mxu0
          %v2097 = vpop.f32.mrb[0].mxu0
          %2098 = vdwg.mxu0
          %2099 = vmatprep.subr.bf16.mxu0 0
          %2100 = vmatpush1.bf16.msra.mxu0 %v1675
          %2101 = vmatprep.subr.bf16.mxu0 0
          %2102 = vmatpush1.bf16.msra.mxu0 %v1676
          %2103 = vmatprep.subr.bf16.mxu0 0
          %2104 = vmatpush1.bf16.msra.mxu0 %v1677
          %2105 = vmatprep.subr.bf16.mxu0 0
          %2106 = vmatpush1.bf16.msra.mxu0 %v1678
          %2107 = vmatprep.subr.bf16.mxu0 0
          %2108 = vmatpush1.bf16.msra.mxu0 %v1679
          %2109 = vmatprep.subr.bf16.mxu0 0
          %2110 = vmatpush1.bf16.msra.mxu0 %v1680
          %2111 = vmatprep.subr.bf16.mxu0 0
          %2112 = vmatpush1.bf16.msra.mxu0 %v1681
          %2113 = vmatprep.subr.bf16.mxu0 0
          %2114 = vmatpush1.bf16.msra.mxu0 %v1682
          %2115 = vmatprep.subr.bf16.mxu0 0
          %2116 = vmatpush1.bf16.msra.mxu0 %v1683
          %2117 = vmatprep.subr.bf16.mxu0 0
          %2118 = vmatpush1.bf16.msra.mxu0 %v1684
          %2119 = vmatprep.subr.bf16.mxu0 0
          %2120 = vmatpush1.bf16.msra.mxu0 %v1685
          %2121 = vmatprep.subr.bf16.mxu0 0
          %2122 = vmatpush1.bf16.msra.mxu0 %v1686
          %2123 = vmatprep.subr.bf16.mxu0 0
          %2124 = vmatpush1.bf16.msra.mxu0 %v1687
          %2125 = vmatprep.subr.bf16.mxu0 0
          %2126 = vmatpush1.bf16.msra.mxu0 %v1688
          %2127 = vmatprep.subr.bf16.mxu0 0
          %2128 = vmatpush1.bf16.msra.mxu0 %v1689
          %2129 = vmatprep.subr.bf16.mxu0 0
          %2130 = vmatpush1.bf16.msra.mxu0 %v1690
          %2131 = vmatprep.mubr.bf16.mxu0 %v788
          %2132 = vmatmul.mubr.bf16.gmra.mrb[0].mxu0 %v787
          %v2133 = vpop.f32.mrb[0].mxu0
          %v2134 = vadd.f32 %v2094, %v2133
          %v2135 = vpop.f32.mrb[0].mxu0
          %v2136 = vpop.f32.mrb[0].mxu0
          %v2137 = vpop.f32.mrb[0].mxu0
          %2138 = vdwg.mxu0
          %2139 = vst [vmem:[#allocation3] sm:$0x3] %v2134
        $region112: #{tpu_custom_call.1} parent=67 // pred_fallthru
          _
        // Predicated region
        $region113: #{tpu_custom_call.1} parent=67 // pred_check
          %p2140 = pneg %p790
        $region114: #{tpu_custom_call.1} parent=67 // pred_check_branch
          %2142 = sbr.rel (%p2140) target = $region116
        $region115: #{tpu_custom_call.1} parent=67 // pred_region
          %vm2143 = vcmask 7168
          %2144 = vst.msk [vmem:[#allocation2] sm:$0xff] %vm2143, 0.0
          %2145 = vst.msk [vmem:[#allocation2 + $0x8] sm:$0xff] %vm2143, 0.0
        $region116: #{tpu_custom_call.1} parent=67 // pred_fallthru
          _
        %v2146 = vpack.c.bf16 %v684, %v683
        %v2147 = vld [vmem:[%s561] sm:$0xff]
        %v2148 = vld [vmem:[%s561 + $0x8] sm:$0xff]
        %v2149 = vld [vmem:[%s561 + $0x10] sm:$0xff]
        %v2150 = vld [vmem:[%s561 + $0x18] sm:$0xff]
        %v2151 = vld [vmem:[%s561 + $0x20] sm:$0xff]
        %v2152 = vld [vmem:[%s561 + $0x28] sm:$0xff]
        %v2153 = vld [vmem:[%s561 + $0x30] sm:$0xff]
        %v2154 = vld [vmem:[%s561 + $0x38] sm:$0xff]
        %v2155 = vld [vmem:[%s561 + $0x40] sm:$0xff]
        %v2156 = vld [vmem:[%s561 + $0x48] sm:$0xff]
        %v2157 = vld [vmem:[%s561 + $0x50] sm:$0xff]
        %v2158 = vld [vmem:[%s561 + $0x58] sm:$0xff]
        %v2159 = vld [vmem:[%s561 + $0x60] sm:$0xff]
        %v2160 = vld [vmem:[%s561 + $0x68] sm:$0xff]
        %v2161 = vld [vmem:[%s561 + $0x70] sm:$0xff]
        %v2162 = vld [vmem:[%s561 + $0x78] sm:$0xff]
        %v2163 = vld [vmem:[%s561 + $0x80] sm:$0xff]
        %v2164 = vld [vmem:[%s561 + $0x88] sm:$0xff]
        %v2165 = vld [vmem:[%s561 + $0x90] sm:$0xff]
        %v2166 = vld [vmem:[%s561 + $0x98] sm:$0xff]
        %v2167 = vld [vmem:[%s561 + $0xa0] sm:$0xff]
        %v2168 = vld [vmem:[%s561 + $0xa8] sm:$0xff]
        %v2169 = vld [vmem:[%s561 + $0xb0] sm:$0xff]
        %v2170 = vld [vmem:[%s561 + $0xb8] sm:$0xff]
        %v2171 = vld [vmem:[%s561 + $0xc0] sm:$0xff]
        %v2172 = vld [vmem:[%s561 + $0xc8] sm:$0xff]
        %v2173 = vld [vmem:[%s561 + $0xd0] sm:$0xff]
        %v2174 = vld [vmem:[%s561 + $0xd8] sm:$0xff]
        %v2175 = vld [vmem:[%s561 + $0xe0] sm:$0xff]
        %v2176 = vld [vmem:[%s561 + $0xe8] sm:$0xff]
        %v2177 = vld [vmem:[%s561 + $0xf0] sm:$0xff]
        %v2178 = vld [vmem:[%s561 + $0xf8] sm:$0xff]
        %v2211 = vunpack.c.l.b16 %v2147
        %v2212 = vunpack.c.h.b16 %v2147
        %v2213 = vunpack.c.l.b16 %v2148
        %v2214 = vunpack.c.h.b16 %v2148
        %v2215 = vunpack.c.l.b16 %v2149
        %v2216 = vunpack.c.h.b16 %v2149
        %v2217 = vunpack.c.l.b16 %v2150
        %v2218 = vunpack.c.h.b16 %v2150
        %v2219 = vunpack.c.l.b16 %v2151
        %v2220 = vunpack.c.h.b16 %v2151
        %v2221 = vunpack.c.l.b16 %v2152
        %v2222 = vunpack.c.h.b16 %v2152
        %v2223 = vunpack.c.l.b16 %v2153
        %v2224 = vunpack.c.h.b16 %v2153
        %v2225 = vunpack.c.l.b16 %v2154
        %v2226 = vunpack.c.h.b16 %v2154
        %v2227 = vunpack.c.l.b16 %v2155
        %v2228 = vunpack.c.h.b16 %v2155
        %v2229 = vunpack.c.l.b16 %v2156
        %v2230 = vunpack.c.h.b16 %v2156
        %v2231 = vunpack.c.l.b16 %v2157
        %v2232 = vunpack.c.h.b16 %v2157
        %v2233 = vunpack.c.l.b16 %v2158
        %v2234 = vunpack.c.h.b16 %v2158
        %v2235 = vunpack.c.l.b16 %v2159
        %v2236 = vunpack.c.h.b16 %v2159
        %v2237 = vunpack.c.l.b16 %v2160
        %v2238 = vunpack.c.h.b16 %v2160
        %v2239 = vunpack.c.l.b16 %v2161
        %v2240 = vunpack.c.h.b16 %v2161
        %v2241 = vunpack.c.l.b16 %v2162
        %v2242 = vunpack.c.h.b16 %v2162
        %v2243 = vunpack.c.l.b16 %v2163
        %v2244 = vunpack.c.h.b16 %v2163
        %v2245 = vunpack.c.l.b16 %v2164
        %v2246 = vunpack.c.h.b16 %v2164
        %v2247 = vunpack.c.l.b16 %v2165
        %v2248 = vunpack.c.h.b16 %v2165
        %v2249 = vunpack.c.l.b16 %v2166
        %v2250 = vunpack.c.h.b16 %v2166
        %v2251 = vunpack.c.l.b16 %v2167
        %v2252 = vunpack.c.h.b16 %v2167
        %v2253 = vunpack.c.l.b16 %v2168
        %v2254 = vunpack.c.h.b16 %v2168
        %v2255 = vunpack.c.l.b16 %v2169
        %v2256 = vunpack.c.h.b16 %v2169
        %v2257 = vunpack.c.l.b16 %v2170
        %v2258 = vunpack.c.h.b16 %v2170
        %v2259 = vunpack.c.l.b16 %v2171
        %v2260 = vunpack.c.h.b16 %v2171
        %v2261 = vunpack.c.l.b16 %v2172
        %v2262 = vunpack.c.h.b16 %v2172
        %v2263 = vunpack.c.l.b16 %v2173
        %v2264 = vunpack.c.h.b16 %v2173
        %v2265 = vunpack.c.l.b16 %v2174
        %v2266 = vunpack.c.h.b16 %v2174
        %v2267 = vunpack.c.l.b16 %v2175
        %v2268 = vunpack.c.h.b16 %v2175
        %v2269 = vunpack.c.l.b16 %v2176
        %v2270 = vunpack.c.h.b16 %v2176
        %v2271 = vunpack.c.l.b16 %v2177
        %v2272 = vunpack.c.h.b16 %v2177
        %v2273 = vunpack.c.l.b16 %v2178
        %v2274 = vunpack.c.h.b16 %v2178
        %v2275 = vpack.c.b16 %v2215, %v2211
        %v2276 = vpack.c.b16 %v2216, %v2212
        %v2277 = vpack.c.b16 %v2217, %v2213
        %v2278 = vpack.c.b16 %v2218, %v2214
        %v2279 = vpack.c.b16 %v2223, %v2219
        %v2280 = vpack.c.b16 %v2224, %v2220
        %v2281 = vpack.c.b16 %v2225, %v2221
        %v2282 = vpack.c.b16 %v2226, %v2222
        %v2283 = vpack.c.b16 %v2231, %v2227
        %v2284 = vpack.c.b16 %v2232, %v2228
        %v2285 = vpack.c.b16 %v2233, %v2229
        %v2286 = vpack.c.b16 %v2234, %v2230
        %v2287 = vpack.c.b16 %v2239, %v2235
        %v2288 = vpack.c.b16 %v2240, %v2236
        %v2289 = vpack.c.b16 %v2241, %v2237
        %v2290 = vpack.c.b16 %v2242, %v2238
        %v2291 = vpack.c.b16 %v2247, %v2243
        %v2292 = vpack.c.b16 %v2248, %v2244
        %v2293 = vpack.c.b16 %v2249, %v2245
        %v2294 = vpack.c.b16 %v2250, %v2246
        %v2295 = vpack.c.b16 %v2255, %v2251
        %v2296 = vpack.c.b16 %v2256, %v2252
        %v2297 = vpack.c.b16 %v2257, %v2253
        %v2298 = vpack.c.b16 %v2258, %v2254
        %v2299 = vpack.c.b16 %v2263, %v2259
        %v2300 = vpack.c.b16 %v2264, %v2260
        %v2301 = vpack.c.b16 %v2265, %v2261
        %v2302 = vpack.c.b16 %v2266, %v2262
        %v2303 = vpack.c.b16 %v2271, %v2267
        %v2304 = vpack.c.b16 %v2272, %v2268
        %v2305 = vpack.c.b16 %v2273, %v2269
        %v2306 = vpack.c.b16 %v2274, %v2270
        %2339 = vmatprep.subr.bf16.mxu0 %v2276
        %2340 = vmatpush1.bf16.msra.mxu0 %v2275
        %2341 = vmatprep.subr.bf16.mxu0 %v2280
        %2342 = vmatpush1.bf16.msra.mxu0 %v2279
        %2343 = vmatprep.subr.bf16.mxu0 %v2284
        %2344 = vmatpush1.bf16.msra.mxu0 %v2283
        %2345 = vmatprep.subr.bf16.mxu0 %v2288
        %2346 = vmatpush1.bf16.msra.mxu0 %v2287
        %2347 = vmatprep.subr.bf16.mxu0 %v2292
        %2348 = vmatpush1.bf16.msra.mxu0 %v2291
        %2349 = vmatprep.subr.bf16.mxu0 %v2296
        %2350 = vmatpush1.bf16.msra.mxu0 %v2295
        %2351 = vmatprep.subr.bf16.mxu0 %v2300
        %2352 = vmatpush1.bf16.msra.mxu0 %v2299
        %2353 = vmatprep.subr.bf16.mxu0 %v2304
        %2354 = vmatpush1.bf16.msra.mxu0 %v2303
        %2355 = vmatprep.subr.bf16.mxu0 0
        %2356 = vmatpush1.bf16.msra.mxu0 0
        %2357 = vmatprep.subr.bf16.mxu0 0
        %2358 = vmatpush1.bf16.msra.mxu0 0
        %2359 = vmatprep.subr.bf16.mxu0 0
        %2360 = vmatpush1.bf16.msra.mxu0 0
        %2361 = vmatprep.subr.bf16.mxu0 0
        %2362 = vmatpush1.bf16.msra.mxu0 0
        %2363 = vmatprep.subr.bf16.mxu0 0
        %2364 = vmatpush1.bf16.msra.mxu0 0
        %2365 = vmatprep.subr.bf16.mxu0 0
        %2366 = vmatpush1.bf16.msra.mxu0 0
        %2367 = vmatprep.subr.bf16.mxu0 0
        %2368 = vmatpush1.bf16.msra.mxu0 0
        %2369 = vmatprep.subr.bf16.mxu0 0
        %2370 = vmatpush1.bf16.msra.mxu0 0
        %2371 = vmatprep.mubr.bf16.mxu0 0
        %2372 = vmatmul.mubr.bf16.gmra.mrb[0].mxu0 %v2146
        %v2373 = vpop.f32.mrb[0].mxu0
        %v2374 = vadd.f32 0.0, %v2373
        %v2375 = vpop.f32.mrb[0].mxu0
        %v2376 = vadd.f32 0.0, %v2375
        %v2377 = vpop.f32.mrb[0].mxu0
        %v2378 = vadd.f32 0.0, %v2377
        %v2379 = vpop.f32.mrb[0].mxu0
        %v2380 = vadd.f32 0.0, %v2379
        %2381 = vdwg.mxu0
        %2382 = vmatprep.subr.bf16.mxu0 %v2278
        %2383 = vmatpush1.bf16.msra.mxu0 %v2277
        %2384 = vmatprep.subr.bf16.mxu0 %v2282
        %2385 = vmatpush1.bf16.msra.mxu0 %v2281
        %2386 = vmatprep.subr.bf16.mxu0 %v2286
        %2387 = vmatpush1.bf16.msra.mxu0 %v2285
        %2388 = vmatprep.subr.bf16.mxu0 %v2290
        %2389 = vmatpush1.bf16.msra.mxu0 %v2289
        %2390 = vmatprep.subr.bf16.mxu0 %v2294
        %2391 = vmatpush1.bf16.msra.mxu0 %v2293
        %2392 = vmatprep.subr.bf16.mxu0 %v2298
        %2393 = vmatpush1.bf16.msra.mxu0 %v2297
        %2394 = vmatprep.subr.bf16.mxu0 %v2302
        %2395 = vmatpush1.bf16.msra.mxu0 %v2301
        %2396 = vmatprep.subr.bf16.mxu0 %v2306
        %2397 = vmatpush1.bf16.msra.mxu0 %v2305
        %2398 = vmatprep.subr.bf16.mxu0 0
        %2399 = vmatpush1.bf16.msra.mxu0 0
        %2400 = vmatprep.subr.bf16.mxu0 0
        %2401 = vmatpush1.bf16.msra.mxu0 0
        %2402 = vmatprep.subr.bf16.mxu0 0
        %2403 = vmatpush1.bf16.msra.mxu0 0
        %2404 = vmatprep.subr.bf16.mxu0 0
        %2405 = vmatpush1.bf16.msra.mxu0 0
        %2406 = vmatprep.subr.bf16.mxu0 0
        %2407 = vmatpush1.bf16.msra.mxu0 0
        %2408 = vmatprep.subr.bf16.mxu0 0
        %2409 = vmatpush1.bf16.msra.mxu0 0
        %2410 = vmatprep.subr.bf16.mxu0 0
        %2411 = vmatpush1.bf16.msra.mxu0 0
        %2412 = vmatprep.subr.bf16.mxu0 0
        %2413 = vmatpush1.bf16.msra.mxu0 0
        %2414 = vmatprep.mubr.bf16.mxu0 0
        %2415 = vmatmul.mubr.bf16.gmra.mrb[0].mxu0 %v2146
        %v2416 = vpop.f32.mrb[0].mxu0
        %v2417 = vadd.f32 0.0, %v2416
        %v2418 = vpop.f32.mrb[0].mxu0
        %v2419 = vadd.f32 0.0, %v2418
        %v2420 = vpop.f32.mrb[0].mxu0
        %v2421 = vadd.f32 0.0, %v2420
        %v2422 = vpop.f32.mrb[0].mxu0
        %v2423 = vadd.f32 0.0, %v2422
        %2424 = vdwg.mxu0
        %v2425 = vld [vmem:[%s570] sm:$0xff]
        %v2426 = vld [vmem:[%s570 + $0x8] sm:$0xff]
        %v2427 = vld [vmem:[%s570 + $0x10] sm:$0xff]
        %v2428 = vld [vmem:[%s570 + $0x18] sm:$0xff]
        %v2429 = vld [vmem:[%s570 + $0x20] sm:$0xff]
        %v2430 = vld [vmem:[%s570 + $0x28] sm:$0xff]
        %v2431 = vld [vmem:[%s570 + $0x30] sm:$0xff]
        %v2432 = vld [vmem:[%s570 + $0x38] sm:$0xff]
        %v2433 = vld [vmem:[%s570 + $0x40] sm:$0xff]
        %v2434 = vld [vmem:[%s570 + $0x48] sm:$0xff]
        %v2435 = vld [vmem:[%s570 + $0x50] sm:$0xff]
        %v2436 = vld [vmem:[%s570 + $0x58] sm:$0xff]
        %v2437 = vld [vmem:[%s570 + $0x60] sm:$0xff]
        %v2438 = vld [vmem:[%s570 + $0x68] sm:$0xff]
        %v2439 = vld [vmem:[%s570 + $0x70] sm:$0xff]
        %v2440 = vld [vmem:[%s570 + $0x78] sm:$0xff]
        %v2441 = vld [vmem:[%s570 + $0x80] sm:$0xff]
        %v2442 = vld [vmem:[%s570 + $0x88] sm:$0xff]
        %v2443 = vld [vmem:[%s570 + $0x90] sm:$0xff]
        %v2444 = vld [vmem:[%s570 + $0x98] sm:$0xff]
        %v2445 = vld [vmem:[%s570 + $0xa0] sm:$0xff]
        %v2446 = vld [vmem:[%s570 + $0xa8] sm:$0xff]
        %v2447 = vld [vmem:[%s570 + $0xb0] sm:$0xff]
        %v2448 = vld [vmem:[%s570 + $0xb8] sm:$0xff]
        %v2449 = vld [vmem:[%s570 + $0xc0] sm:$0xff]
        %v2450 = vld [vmem:[%s570 + $0xc8] sm:$0xff]
        %v2451 = vld [vmem:[%s570 + $0xd0] sm:$0xff]
        %v2452 = vld [vmem:[%s570 + $0xd8] sm:$0xff]
        %v2453 = vld [vmem:[%s570 + $0xe0] sm:$0xff]
        %v2454 = vld [vmem:[%s570 + $0xe8] sm:$0xff]
        %v2455 = vld [vmem:[%s570 + $0xf0] sm:$0xff]
        %v2456 = vld [vmem:[%s570 + $0xf8] sm:$0xff]
        %v2457 = vld [vmem:[%s570 + $0x100] sm:$0xff]
        %v2458 = vld [vmem:[%s570 + $0x108] sm:$0xff]
        %v2459 = vld [vmem:[%s570 + $0x110] sm:$0xff]
        %v2460 = vld [vmem:[%s570 + $0x118] sm:$0xff]
        %v2461 = vld [vmem:[%s570 + $0x120] sm:$0xff]
        %v2462 = vld [vmem:[%s570 + $0x128] sm:$0xff]
        %v2463 = vld [vmem:[%s570 + $0x130] sm:$0xff]
        %v2464 = vld [vmem:[%s570 + $0x138] sm:$0xff]
        %v2465 = vld [vmem:[%s570 + $0x140] sm:$0xff]
        %v2466 = vld [vmem:[%s570 + $0x148] sm:$0xff]
        %v2467 = vld [vmem:[%s570 + $0x150] sm:$0xff]
        %v2468 = vld [vmem:[%s570 + $0x158] sm:$0xff]
        %v2469 = vld [vmem:[%s570 + $0x160] sm:$0xff]
        %v2470 = vld [vmem:[%s570 + $0x168] sm:$0xff]
        %v2471 = vld [vmem:[%s570 + $0x170] sm:$0xff]
        %v2472 = vld [vmem:[%s570 + $0x178] sm:$0xff]
        %v2473 = vld [vmem:[%s570 + $0x180] sm:$0xff]
        %v2474 = vld [vmem:[%s570 + $0x188] sm:$0xff]
        %v2475 = vld [vmem:[%s570 + $0x190] sm:$0xff]
        %v2476 = vld [vmem:[%s570 + $0x198] sm:$0xff]
        %v2477 = vld [vmem:[%s570 + $0x1a0] sm:$0xff]
        %v2478 = vld [vmem:[%s570 + $0x1a8] sm:$0xff]
        %v2479 = vld [vmem:[%s570 + $0x1b0] sm:$0xff]
        %v2480 = vld [vmem:[%s570 + $0x1b8] sm:$0xff]
        %v2481 = vld [vmem:[%s570 + $0x1c0] sm:$0xff]
        %v2482 = vld [vmem:[%s570 + $0x1c8] sm:$0xff]
        %v2483 = vld [vmem:[%s570 + $0x1d0] sm:$0xff]
        %v2484 = vld [vmem:[%s570 + $0x1d8] sm:$0xff]
        %v2485 = vld [vmem:[%s570 + $0x1e0] sm:$0xff]
        %v2486 = vld [vmem:[%s570 + $0x1e8] sm:$0xff]
        %v2487 = vld [vmem:[%s570 + $0x1f0] sm:$0xff]
        %v2488 = vld [vmem:[%s570 + $0x1f8] sm:$0xff]
        %v2489 = vld [vmem:[%s570 + $0x200] sm:$0xff]
        %v2490 = vld [vmem:[%s570 + $0x208] sm:$0xff]
        %v2491 = vld [vmem:[%s570 + $0x210] sm:$0xff]
        %v2492 = vld [vmem:[%s570 + $0x218] sm:$0xff]
        %v2493 = vld [vmem:[%s570 + $0x220] sm:$0xff]
        %v2494 = vld [vmem:[%s570 + $0x228] sm:$0xff]
        %v2495 = vld [vmem:[%s570 + $0x230] sm:$0xff]
        %v2496 = vld [vmem:[%s570 + $0x238] sm:$0xff]
        %v2497 = vld [vmem:[%s570 + $0x240] sm:$0xff]
        %v2498 = vld [vmem:[%s570 + $0x248] sm:$0xff]
        %v2499 = vld [vmem:[%s570 + $0x250] sm:$0xff]
        %v2500 = vld [vmem:[%s570 + $0x258] sm:$0xff]
        %v2501 = vld [vmem:[%s570 + $0x260] sm:$0xff]
        %v2502 = vld [vmem:[%s570 + $0x268] sm:$0xff]
        %v2503 = vld [vmem:[%s570 + $0x270] sm:$0xff]
        %v2504 = vld [vmem:[%s570 + $0x278] sm:$0xff]
        %v2505 = vld [vmem:[%s570 + $0x280] sm:$0xff]
        %v2506 = vld [vmem:[%s570 + $0x288] sm:$0xff]
        %v2507 = vld [vmem:[%s570 + $0x290] sm:$0xff]
        %v2508 = vld [vmem:[%s570 + $0x298] sm:$0xff]
        %v2509 = vld [vmem:[%s570 + $0x2a0] sm:$0xff]
        %v2510 = vld [vmem:[%s570 + $0x2a8] sm:$0xff]
        %v2511 = vld [vmem:[%s570 + $0x2b0] sm:$0xff]
        %v2512 = vld [vmem:[%s570 + $0x2b8] sm:$0xff]
        %v2513 = vld [vmem:[%s570 + $0x2c0] sm:$0xff]
        %v2514 = vld [vmem:[%s570 + $0x2c8] sm:$0xff]
        %v2515 = vld [vmem:[%s570 + $0x2d0] sm:$0xff]
        %v2516 = vld [vmem:[%s570 + $0x2d8] sm:$0xff]
        %v2517 = vld [vmem:[%s570 + $0x2e0] sm:$0xff]
        %v2518 = vld [vmem:[%s570 + $0x2e8] sm:$0xff]
        %v2519 = vld [vmem:[%s570 + $0x2f0] sm:$0xff]
        %v2520 = vld [vmem:[%s570 + $0x2f8] sm:$0xff]
        %v2521 = vld [vmem:[%s570 + $0x300] sm:$0xff]
        %v2522 = vld [vmem:[%s570 + $0x308] sm:$0xff]
        %v2523 = vld [vmem:[%s570 + $0x310] sm:$0xff]
        %v2524 = vld [vmem:[%s570 + $0x318] sm:$0xff]
        %v2525 = vld [vmem:[%s570 + $0x320] sm:$0xff]
        %v2526 = vld [vmem:[%s570 + $0x328] sm:$0xff]
        %v2527 = vld [vmem:[%s570 + $0x330] sm:$0xff]
        %v2528 = vld [vmem:[%s570 + $0x338] sm:$0xff]
        %v2529 = vld [vmem:[%s570 + $0x340] sm:$0xff]
        %v2530 = vld [vmem:[%s570 + $0x348] sm:$0xff]
        %v2531 = vld [vmem:[%s570 + $0x350] sm:$0xff]
        %v2532 = vld [vmem:[%s570 + $0x358] sm:$0xff]
        %v2533 = vld [vmem:[%s570 + $0x360] sm:$0xff]
        %v2534 = vld [vmem:[%s570 + $0x368] sm:$0xff]
        %v2535 = vld [vmem:[%s570 + $0x370] sm:$0xff]
        %v2536 = vld [vmem:[%s570 + $0x378] sm:$0xff]
        %v2537 = vld [vmem:[%s570 + $0x380] sm:$0xff]
        %v2538 = vld [vmem:[%s570 + $0x388] sm:$0xff]
        %v2539 = vld [vmem:[%s570 + $0x390] sm:$0xff]
        %v2540 = vld [vmem:[%s570 + $0x398] sm:$0xff]
        %v2541 = vld [vmem:[%s570 + $0x3a0] sm:$0xff]
        %v2542 = vld [vmem:[%s570 + $0x3a8] sm:$0xff]
        %v2543 = vld [vmem:[%s570 + $0x3b0] sm:$0xff]
        %v2544 = vld [vmem:[%s570 + $0x3b8] sm:$0xff]
        %v2545 = vld [vmem:[%s570 + $0x3c0] sm:$0xff]
        %v2546 = vld [vmem:[%s570 + $0x3c8] sm:$0xff]
        %v2547 = vld [vmem:[%s570 + $0x3d0] sm:$0xff]
        %v2548 = vld [vmem:[%s570 + $0x3d8] sm:$0xff]
        %v2549 = vld [vmem:[%s570 + $0x3e0] sm:$0xff]
        %v2550 = vld [vmem:[%s570 + $0x3e8] sm:$0xff]
        %v2551 = vld [vmem:[%s570 + $0x3f0] sm:$0xff]
        %v2552 = vld [vmem:[%s570 + $0x3f8] sm:$0xff]
        %v2553 = vld [vmem:[%s570 + $0x400] sm:$0xff]
        %v2554 = vld [vmem:[%s570 + $0x408] sm:$0xff]
        %v2555 = vld [vmem:[%s570 + $0x410] sm:$0xff]
        %v2556 = vld [vmem:[%s570 + $0x418] sm:$0xff]
        %v2557 = vld [vmem:[%s570 + $0x420] sm:$0xff]
        %v2558 = vld [vmem:[%s570 + $0x428] sm:$0xff]
        %v2559 = vld [vmem:[%s570 + $0x430] sm:$0xff]
        %v2560 = vld [vmem:[%s570 + $0x438] sm:$0xff]
        %v2561 = vld [vmem:[%s570 + $0x440] sm:$0xff]
        %v2562 = vld [vmem:[%s570 + $0x448] sm:$0xff]
        %v2563 = vld [vmem:[%s570 + $0x450] sm:$0xff]
        %v2564 = vld [vmem:[%s570 + $0x458] sm:$0xff]
        %v2565 = vld [vmem:[%s570 + $0x460] sm:$0xff]
        %v2566 = vld [vmem:[%s570 + $0x468] sm:$0xff]
        %v2567 = vld [vmem:[%s570 + $0x470] sm:$0xff]
        %v2568 = vld [vmem:[%s570 + $0x478] sm:$0xff]
        %v2569 = vld [vmem:[%s570 + $0x480] sm:$0xff]
        %v2570 = vld [vmem:[%s570 + $0x488] sm:$0xff]
        %v2571 = vld [vmem:[%s570 + $0x490] sm:$0xff]
        %v2572 = vld [vmem:[%s570 + $0x498] sm:$0xff]
        %v2573 = vld [vmem:[%s570 + $0x4a0] sm:$0xff]
        %v2574 = vld [vmem:[%s570 + $0x4a8] sm:$0xff]
        %v2575 = vld [vmem:[%s570 + $0x4b0] sm:$0xff]
        %v2576 = vld [vmem:[%s570 + $0x4b8] sm:$0xff]
        %v2577 = vld [vmem:[%s570 + $0x4c0] sm:$0xff]
        %v2578 = vld [vmem:[%s570 + $0x4c8] sm:$0xff]
        %v2579 = vld [vmem:[%s570 + $0x4d0] sm:$0xff]
        %v2580 = vld [vmem:[%s570 + $0x4d8] sm:$0xff]
        %v2581 = vld [vmem:[%s570 + $0x4e0] sm:$0xff]
        %v2582 = vld [vmem:[%s570 + $0x4e8] sm:$0xff]
        %v2583 = vld [vmem:[%s570 + $0x4f0] sm:$0xff]
        %v2584 = vld [vmem:[%s570 + $0x4f8] sm:$0xff]
        %v2585 = vld [vmem:[%s570 + $0x500] sm:$0xff]
        %v2586 = vld [vmem:[%s570 + $0x508] sm:$0xff]
        %v2587 = vld [vmem:[%s570 + $0x510] sm:$0xff]
        %v2588 = vld [vmem:[%s570 + $0x518] sm:$0xff]
        %v2589 = vld [vmem:[%s570 + $0x520] sm:$0xff]
        %v2590 = vld [vmem:[%s570 + $0x528] sm:$0xff]
        %v2591 = vld [vmem:[%s570 + $0x530] sm:$0xff]
        %v2592 = vld [vmem:[%s570 + $0x538] sm:$0xff]
        %v2593 = vld [vmem:[%s570 + $0x540] sm:$0xff]
        %v2594 = vld [vmem:[%s570 + $0x548] sm:$0xff]
        %v2595 = vld [vmem:[%s570 + $0x550] sm:$0xff]
        %v2596 = vld [vmem:[%s570 + $0x558] sm:$0xff]
        %v2597 = vld [vmem:[%s570 + $0x560] sm:$0xff]
        %v2598 = vld [vmem:[%s570 + $0x568] sm:$0xff]
        %v2599 = vld [vmem:[%s570 + $0x570] sm:$0xff]
        %v2600 = vld [vmem:[%s570 + $0x578] sm:$0xff]
        %v2601 = vld [vmem:[%s570 + $0x580] sm:$0xff]
        %v2602 = vld [vmem:[%s570 + $0x588] sm:$0xff]
        %v2603 = vld [vmem:[%s570 + $0x590] sm:$0xff]
        %v2604 = vld [vmem:[%s570 + $0x598] sm:$0xff]
        %v2605 = vld [vmem:[%s570 + $0x5a0] sm:$0xff]
        %v2606 = vld [vmem:[%s570 + $0x5a8] sm:$0xff]
        %v2607 = vld [vmem:[%s570 + $0x5b0] sm:$0xff]
        %v2608 = vld [vmem:[%s570 + $0x5b8] sm:$0xff]
        %v2609 = vld [vmem:[%s570 + $0x5c0] sm:$0xff]
        %v2610 = vld [vmem:[%s570 + $0x5c8] sm:$0xff]
        %v2611 = vld [vmem:[%s570 + $0x5d0] sm:$0xff]
        %v2612 = vld [vmem:[%s570 + $0x5d8] sm:$0xff]
        %v2613 = vld [vmem:[%s570 + $0x5e0] sm:$0xff]
        %v2614 = vld [vmem:[%s570 + $0x5e8] sm:$0xff]
        %v2615 = vld [vmem:[%s570 + $0x5f0] sm:$0xff]
        %v2616 = vld [vmem:[%s570 + $0x5f8] sm:$0xff]
        %v2617 = vld [vmem:[%s570 + $0x600] sm:$0xff]
        %v2618 = vld [vmem:[%s570 + $0x608] sm:$0xff]
        %v2619 = vld [vmem:[%s570 + $0x610] sm:$0xff]
        %v2620 = vld [vmem:[%s570 + $0x618] sm:$0xff]
        %v2621 = vld [vmem:[%s570 + $0x620] sm:$0xff]
        %v2622 = vld [vmem:[%s570 + $0x628] sm:$0xff]
        %v2623 = vld [vmem:[%s570 + $0x630] sm:$0xff]
        %v2624 = vld [vmem:[%s570 + $0x638] sm:$0xff]
        %v2625 = vld [vmem:[%s570 + $0x640] sm:$0xff]
        %v2626 = vld [vmem:[%s570 + $0x648] sm:$0xff]
        %v2627 = vld [vmem:[%s570 + $0x650] sm:$0xff]
        %v2628 = vld [vmem:[%s570 + $0x658] sm:$0xff]
        %v2629 = vld [vmem:[%s570 + $0x660] sm:$0xff]
        %v2630 = vld [vmem:[%s570 + $0x668] sm:$0xff]
        %v2631 = vld [vmem:[%s570 + $0x670] sm:$0xff]
        %v2632 = vld [vmem:[%s570 + $0x678] sm:$0xff]
        %v2633 = vld [vmem:[%s570 + $0x680] sm:$0xff]
        %v2634 = vld [vmem:[%s570 + $0x688] sm:$0xff]
        %v2635 = vld [vmem:[%s570 + $0x690] sm:$0xff]
        %v2636 = vld [vmem:[%s570 + $0x698] sm:$0xff]
        %v2637 = vld [vmem:[%s570 + $0x6a0] sm:$0xff]
        %v2638 = vld [vmem:[%s570 + $0x6a8] sm:$0xff]
        %v2639 = vld [vmem:[%s570 + $0x6b0] sm:$0xff]
        %v2640 = vld [vmem:[%s570 + $0x6b8] sm:$0xff]
        %v2641 = vld [vmem:[%s570 + $0x6c0] sm:$0xff]
        %v2642 = vld [vmem:[%s570 + $0x6c8] sm:$0xff]
        %v2643 = vld [vmem:[%s570 + $0x6d0] sm:$0xff]
        %v2644 = vld [vmem:[%s570 + $0x6d8] sm:$0xff]
        %v2645 = vld [vmem:[%s570 + $0x6e0] sm:$0xff]
        %v2646 = vld [vmem:[%s570 + $0x6e8] sm:$0xff]
        %v2647 = vld [vmem:[%s570 + $0x6f0] sm:$0xff]
        %v2648 = vld [vmem:[%s570 + $0x6f8] sm:$0xff]
        %v2649 = vld [vmem:[%s570 + $0x700] sm:$0xff]
        %v2650 = vld [vmem:[%s570 + $0x708] sm:$0xff]
        %v2651 = vld [vmem:[%s570 + $0x710] sm:$0xff]
        %v2652 = vld [vmem:[%s570 + $0x718] sm:$0xff]
        %v2653 = vld [vmem:[%s570 + $0x720] sm:$0xff]
        %v2654 = vld [vmem:[%s570 + $0x728] sm:$0xff]
        %v2655 = vld [vmem:[%s570 + $0x730] sm:$0xff]
        %v2656 = vld [vmem:[%s570 + $0x738] sm:$0xff]
        %v2657 = vld [vmem:[%s570 + $0x740] sm:$0xff]
        %v2658 = vld [vmem:[%s570 + $0x748] sm:$0xff]
        %v2659 = vld [vmem:[%s570 + $0x750] sm:$0xff]
        %v2660 = vld [vmem:[%s570 + $0x758] sm:$0xff]
        %v2661 = vld [vmem:[%s570 + $0x760] sm:$0xff]
        %v2662 = vld [vmem:[%s570 + $0x768] sm:$0xff]
        %v2663 = vld [vmem:[%s570 + $0x770] sm:$0xff]
        %v2664 = vld [vmem:[%s570 + $0x778] sm:$0xff]
        %v2665 = vld [vmem:[%s570 + $0x780] sm:$0xff]
        %v2666 = vld [vmem:[%s570 + $0x788] sm:$0xff]
        %v2667 = vld [vmem:[%s570 + $0x790] sm:$0xff]
        %v2668 = vld [vmem:[%s570 + $0x798] sm:$0xff]
        %v2669 = vld [vmem:[%s570 + $0x7a0] sm:$0xff]
        %v2670 = vld [vmem:[%s570 + $0x7a8] sm:$0xff]
        %v2671 = vld [vmem:[%s570 + $0x7b0] sm:$0xff]
        %v2672 = vld [vmem:[%s570 + $0x7b8] sm:$0xff]
        %v2673 = vld [vmem:[%s570 + $0x7c0] sm:$0xff]
        %v2674 = vld [vmem:[%s570 + $0x7c8] sm:$0xff]
        %v2675 = vld [vmem:[%s570 + $0x7d0] sm:$0xff]
        %v2676 = vld [vmem:[%s570 + $0x7d8] sm:$0xff]
        %v2677 = vld [vmem:[%s570 + $0x7e0] sm:$0xff]
        %v2678 = vld [vmem:[%s570 + $0x7e8] sm:$0xff]
        %v2679 = vld [vmem:[%s570 + $0x7f0] sm:$0xff]
        %v2680 = vld [vmem:[%s570 + $0x7f8] sm:$0xff]
        %v2681 = vld [vmem:[%s570 + $0x800] sm:$0xff]
        %v2682 = vld [vmem:[%s570 + $0x808] sm:$0xff]
        %v2683 = vld [vmem:[%s570 + $0x810] sm:$0xff]
        %v2684 = vld [vmem:[%s570 + $0x818] sm:$0xff]
        %v2685 = vld [vmem:[%s570 + $0x820] sm:$0xff]
        %v2686 = vld [vmem:[%s570 + $0x828] sm:$0xff]
        %v2687 = vld [vmem:[%s570 + $0x830] sm:$0xff]
        %v2688 = vld [vmem:[%s570 + $0x838] sm:$0xff]
        %v2689 = vld [vmem:[%s570 + $0x840] sm:$0xff]
        %v2690 = vld [vmem:[%s570 + $0x848] sm:$0xff]
        %v2691 = vld [vmem:[%s570 + $0x850] sm:$0xff]
        %v2692 = vld [vmem:[%s570 + $0x858] sm:$0xff]
        %v2693 = vld [vmem:[%s570 + $0x860] sm:$0xff]
        %v2694 = vld [vmem:[%s570 + $0x868] sm:$0xff]
        %v2695 = vld [vmem:[%s570 + $0x870] sm:$0xff]
        %v2696 = vld [vmem:[%s570 + $0x878] sm:$0xff]
        %v2697 = vld [vmem:[%s570 + $0x880] sm:$0xff]
        %v2698 = vld [vmem:[%s570 + $0x888] sm:$0xff]
        %v2699 = vld [vmem:[%s570 + $0x890] sm:$0xff]
        %v2700 = vld [vmem:[%s570 + $0x898] sm:$0xff]
        %v2701 = vld [vmem:[%s570 + $0x8a0] sm:$0xff]
        %v2702 = vld [vmem:[%s570 + $0x8a8] sm:$0xff]
        %v2703 = vld [vmem:[%s570 + $0x8b0] sm:$0xff]
        %v2704 = vld [vmem:[%s570 + $0x8b8] sm:$0xff]
        %v2705 = vld [vmem:[%s570 + $0x8c0] sm:$0xff]
        %v2706 = vld [vmem:[%s570 + $0x8c8] sm:$0xff]
        %v2707 = vld [vmem:[%s570 + $0x8d0] sm:$0xff]
        %v2708 = vld [vmem:[%s570 + $0x8d8] sm:$0xff]
        %v2709 = vld [vmem:[%s570 + $0x8e0] sm:$0xff]
        %v2710 = vld [vmem:[%s570 + $0x8e8] sm:$0xff]
        %v2711 = vld [vmem:[%s570 + $0x8f0] sm:$0xff]
        %v2712 = vld [vmem:[%s570 + $0x8f8] sm:$0xff]
        %v2713 = vld [vmem:[%s570 + $0x900] sm:$0xff]
        %v2714 = vld [vmem:[%s570 + $0x908] sm:$0xff]
        %v2715 = vld [vmem:[%s570 + $0x910] sm:$0xff]
        %v2716 = vld [vmem:[%s570 + $0x918] sm:$0xff]
        %v2717 = vld [vmem:[%s570 + $0x920] sm:$0xff]
        %v2718 = vld [vmem:[%s570 + $0x928] sm:$0xff]
        %v2719 = vld [vmem:[%s570 + $0x930] sm:$0xff]
        %v2720 = vld [vmem:[%s570 + $0x938] sm:$0xff]
        %v2721 = vld [vmem:[%s570 + $0x940] sm:$0xff]
        %v2722 = vld [vmem:[%s570 + $0x948] sm:$0xff]
        %v2723 = vld [vmem:[%s570 + $0x950] sm:$0xff]
        %v2724 = vld [vmem:[%s570 + $0x958] sm:$0xff]
        %v2725 = vld [vmem:[%s570 + $0x960] sm:$0xff]
        %v2726 = vld [vmem:[%s570 + $0x968] sm:$0xff]
        %v2727 = vld [vmem:[%s570 + $0x970] sm:$0xff]
        %v2728 = vld [vmem:[%s570 + $0x978] sm:$0xff]
        %v2729 = vld [vmem:[%s570 + $0x980] sm:$0xff]
        %v2730 = vld [vmem:[%s570 + $0x988] sm:$0xff]
        %v2731 = vld [vmem:[%s570 + $0x990] sm:$0xff]
        %v2732 = vld [vmem:[%s570 + $0x998] sm:$0xff]
        %v2733 = vld [vmem:[%s570 + $0x9a0] sm:$0xff]
        %v2734 = vld [vmem:[%s570 + $0x9a8] sm:$0xff]
        %v2735 = vld [vmem:[%s570 + $0x9b0] sm:$0xff]
        %v2736 = vld [vmem:[%s570 + $0x9b8] sm:$0xff]
        %v2737 = vld [vmem:[%s570 + $0x9c0] sm:$0xff]
        %v2738 = vld [vmem:[%s570 + $0x9c8] sm:$0xff]
        %v2739 = vld [vmem:[%s570 + $0x9d0] sm:$0xff]
        %v2740 = vld [vmem:[%s570 + $0x9d8] sm:$0xff]
        %v2741 = vld [vmem:[%s570 + $0x9e0] sm:$0xff]
        %v2742 = vld [vmem:[%s570 + $0x9e8] sm:$0xff]
        %v2743 = vld [vmem:[%s570 + $0x9f0] sm:$0xff]
        %v2744 = vld [vmem:[%s570 + $0x9f8] sm:$0xff]
        %v2745 = vld [vmem:[%s570 + $0xa00] sm:$0xff]
        %v2746 = vld [vmem:[%s570 + $0xa08] sm:$0xff]
        %v2747 = vld [vmem:[%s570 + $0xa10] sm:$0xff]
        %v2748 = vld [vmem:[%s570 + $0xa18] sm:$0xff]
        %v2749 = vld [vmem:[%s570 + $0xa20] sm:$0xff]
        %v2750 = vld [vmem:[%s570 + $0xa28] sm:$0xff]
        %v2751 = vld [vmem:[%s570 + $0xa30] sm:$0xff]
        %v2752 = vld [vmem:[%s570 + $0xa38] sm:$0xff]
        %v2753 = vld [vmem:[%s570 + $0xa40] sm:$0xff]
        %v2754 = vld [vmem:[%s570 + $0xa48] sm:$0xff]
        %v2755 = vld [vmem:[%s570 + $0xa50] sm:$0xff]
        %v2756 = vld [vmem:[%s570 + $0xa58] sm:$0xff]
        %v2757 = vld [vmem:[%s570 + $0xa60] sm:$0xff]
        %v2758 = vld [vmem:[%s570 + $0xa68] sm:$0xff]
        %v2759 = vld [vmem:[%s570 + $0xa70] sm:$0xff]
        %v2760 = vld [vmem:[%s570 + $0xa78] sm:$0xff]
        %v2761 = vld [vmem:[%s570 + $0xa80] sm:$0xff]
        %v2762 = vld [vmem:[%s570 + $0xa88] sm:$0xff]
        %v2763 = vld [vmem:[%s570 + $0xa90] sm:$0xff]
        %v2764 = vld [vmem:[%s570 + $0xa98] sm:$0xff]
        %v2765 = vld [vmem:[%s570 + $0xaa0] sm:$0xff]
        %v2766 = vld [vmem:[%s570 + $0xaa8] sm:$0xff]
        %v2767 = vld [vmem:[%s570 + $0xab0] sm:$0xff]
        %v2768 = vld [vmem:[%s570 + $0xab8] sm:$0xff]
        %v2769 = vld [vmem:[%s570 + $0xac0] sm:$0xff]
        %v2770 = vld [vmem:[%s570 + $0xac8] sm:$0xff]
        %v2771 = vld [vmem:[%s570 + $0xad0] sm:$0xff]
        %v2772 = vld [vmem:[%s570 + $0xad8] sm:$0xff]
        %v2773 = vld [vmem:[%s570 + $0xae0] sm:$0xff]
        %v2774 = vld [vmem:[%s570 + $0xae8] sm:$0xff]
        %v2775 = vld [vmem:[%s570 + $0xaf0] sm:$0xff]
        %v2776 = vld [vmem:[%s570 + $0xaf8] sm:$0xff]
        %v2777 = vld [vmem:[%s570 + $0xb00] sm:$0xff]
        %v2778 = vld [vmem:[%s570 + $0xb08] sm:$0xff]
        %v2779 = vld [vmem:[%s570 + $0xb10] sm:$0xff]
        %v2780 = vld [vmem:[%s570 + $0xb18] sm:$0xff]
        %v2781 = vld [vmem:[%s570 + $0xb20] sm:$0xff]
        %v2782 = vld [vmem:[%s570 + $0xb28] sm:$0xff]
        %v2783 = vld [vmem:[%s570 + $0xb30] sm:$0xff]
        %v2784 = vld [vmem:[%s570 + $0xb38] sm:$0xff]
        %v2785 = vld [vmem:[%s570 + $0xb40] sm:$0xff]
        %v2786 = vld [vmem:[%s570 + $0xb48] sm:$0xff]
        %v2787 = vld [vmem:[%s570 + $0xb50] sm:$0xff]
        %v2788 = vld [vmem:[%s570 + $0xb58] sm:$0xff]
        %v2789 = vld [vmem:[%s570 + $0xb60] sm:$0xff]
        %v2790 = vld [vmem:[%s570 + $0xb68] sm:$0xff]
        %v2791 = vld [vmem:[%s570 + $0xb70] sm:$0xff]
        %v2792 = vld [vmem:[%s570 + $0xb78] sm:$0xff]
        %v2793 = vld [vmem:[%s570 + $0xb80] sm:$0xff]
        %v2794 = vld [vmem:[%s570 + $0xb88] sm:$0xff]
        %v2795 = vld [vmem:[%s570 + $0xb90] sm:$0xff]
        %v2796 = vld [vmem:[%s570 + $0xb98] sm:$0xff]
        %v2797 = vld [vmem:[%s570 + $0xba0] sm:$0xff]
        %v2798 = vld [vmem:[%s570 + $0xba8] sm:$0xff]
        %v2799 = vld [vmem:[%s570 + $0xbb0] sm:$0xff]
        %v2800 = vld [vmem:[%s570 + $0xbb8] sm:$0xff]
        %v2801 = vld [vmem:[%s570 + $0xbc0] sm:$0xff]
        %v2802 = vld [vmem:[%s570 + $0xbc8] sm:$0xff]
        %v2803 = vld [vmem:[%s570 + $0xbd0] sm:$0xff]
        %v2804 = vld [vmem:[%s570 + $0xbd8] sm:$0xff]
        %v2805 = vld [vmem:[%s570 + $0xbe0] sm:$0xff]
        %v2806 = vld [vmem:[%s570 + $0xbe8] sm:$0xff]
        %v2807 = vld [vmem:[%s570 + $0xbf0] sm:$0xff]
        %v2808 = vld [vmem:[%s570 + $0xbf8] sm:$0xff]
        %v2809 = vld [vmem:[%s570 + $0xc00] sm:$0xff]
        %v2810 = vld [vmem:[%s570 + $0xc08] sm:$0xff]
        %v2811 = vld [vmem:[%s570 + $0xc10] sm:$0xff]
        %v2812 = vld [vmem:[%s570 + $0xc18] sm:$0xff]
        %v2813 = vld [vmem:[%s570 + $0xc20] sm:$0xff]
        %v2814 = vld [vmem:[%s570 + $0xc28] sm:$0xff]
        %v2815 = vld [vmem:[%s570 + $0xc30] sm:$0xff]
        %v2816 = vld [vmem:[%s570 + $0xc38] sm:$0xff]
        %v2817 = vld [vmem:[%s570 + $0xc40] sm:$0xff]
        %v2818 = vld [vmem:[%s570 + $0xc48] sm:$0xff]
        %v2819 = vld [vmem:[%s570 + $0xc50] sm:$0xff]
        %v2820 = vld [vmem:[%s570 + $0xc58] sm:$0xff]
        %v2821 = vld [vmem:[%s570 + $0xc60] sm:$0xff]
        %v2822 = vld [vmem:[%s570 + $0xc68] sm:$0xff]
        %v2823 = vld [vmem:[%s570 + $0xc70] sm:$0xff]
        %v2824 = vld [vmem:[%s570 + $0xc78] sm:$0xff]
        %v2825 = vld [vmem:[%s570 + $0xc80] sm:$0xff]
        %v2826 = vld [vmem:[%s570 + $0xc88] sm:$0xff]
        %v2827 = vld [vmem:[%s570 + $0xc90] sm:$0xff]
        %v2828 = vld [vmem:[%s570 + $0xc98] sm:$0xff]
        %v2829 = vld [vmem:[%s570 + $0xca0] sm:$0xff]
        %v2830 = vld [vmem:[%s570 + $0xca8] sm:$0xff]
        %v2831 = vld [vmem:[%s570 + $0xcb0] sm:$0xff]
        %v2832 = vld [vmem:[%s570 + $0xcb8] sm:$0xff]
        %v2833 = vld [vmem:[%s570 + $0xcc0] sm:$0xff]
        %v2834 = vld [vmem:[%s570 + $0xcc8] sm:$0xff]
        %v2835 = vld [vmem:[%s570 + $0xcd0] sm:$0xff]
        %v2836 = vld [vmem:[%s570 + $0xcd8] sm:$0xff]
        %v2837 = vld [vmem:[%s570 + $0xce0] sm:$0xff]
        %v2838 = vld [vmem:[%s570 + $0xce8] sm:$0xff]
        %v2839 = vld [vmem:[%s570 + $0xcf0] sm:$0xff]
        %v2840 = vld [vmem:[%s570 + $0xcf8] sm:$0xff]
        %v2841 = vld [vmem:[%s570 + $0xd00] sm:$0xff]
        %v2842 = vld [vmem:[%s570 + $0xd08] sm:$0xff]
        %v2843 = vld [vmem:[%s570 + $0xd10] sm:$0xff]
        %v2844 = vld [vmem:[%s570 + $0xd18] sm:$0xff]
        %v2845 = vld [vmem:[%s570 + $0xd20] sm:$0xff]
        %v2846 = vld [vmem:[%s570 + $0xd28] sm:$0xff]
        %v2847 = vld [vmem:[%s570 + $0xd30] sm:$0xff]
        %v2848 = vld [vmem:[%s570 + $0xd38] sm:$0xff]
        %v2849 = vld [vmem:[%s570 + $0xd40] sm:$0xff]
        %v2850 = vld [vmem:[%s570 + $0xd48] sm:$0xff]
        %v2851 = vld [vmem:[%s570 + $0xd50] sm:$0xff]
        %v2852 = vld [vmem:[%s570 + $0xd58] sm:$0xff]
        %v2853 = vld [vmem:[%s570 + $0xd60] sm:$0xff]
        %v2854 = vld [vmem:[%s570 + $0xd68] sm:$0xff]
        %v2855 = vld [vmem:[%s570 + $0xd70] sm:$0xff]
        %v2856 = vld [vmem:[%s570 + $0xd78] sm:$0xff]
        %v2857 = vld [vmem:[%s570 + $0xd80] sm:$0xff]
        %v2858 = vld [vmem:[%s570 + $0xd88] sm:$0xff]
        %v2859 = vld [vmem:[%s570 + $0xd90] sm:$0xff]
        %v2860 = vld [vmem:[%s570 + $0xd98] sm:$0xff]
        %v2861 = vld [vmem:[%s570 + $0xda0] sm:$0xff]
        %v2862 = vld [vmem:[%s570 + $0xda8] sm:$0xff]
        %v2863 = vld [vmem:[%s570 + $0xdb0] sm:$0xff]
        %v2864 = vld [vmem:[%s570 + $0xdb8] sm:$0xff]
        %v2865 = vld [vmem:[%s570 + $0xdc0] sm:$0xff]
        %v2866 = vld [vmem:[%s570 + $0xdc8] sm:$0xff]
        %v2867 = vld [vmem:[%s570 + $0xdd0] sm:$0xff]
        %v2868 = vld [vmem:[%s570 + $0xdd8] sm:$0xff]
        %v2869 = vld [vmem:[%s570 + $0xde0] sm:$0xff]
        %v2870 = vld [vmem:[%s570 + $0xde8] sm:$0xff]
        %v2871 = vld [vmem:[%s570 + $0xdf0] sm:$0xff]
        %v2872 = vld [vmem:[%s570 + $0xdf8] sm:$0xff]
        %v2873 = vld [vmem:[%s570 + $0xe00] sm:$0xff]
        %v2874 = vld [vmem:[%s570 + $0xe08] sm:$0xff]
        %v2875 = vld [vmem:[%s570 + $0xe10] sm:$0xff]
        %v2876 = vld [vmem:[%s570 + $0xe18] sm:$0xff]
        %v2877 = vld [vmem:[%s570 + $0xe20] sm:$0xff]
        %v2878 = vld [vmem:[%s570 + $0xe28] sm:$0xff]
        %v2879 = vld [vmem:[%s570 + $0xe30] sm:$0xff]
        %v2880 = vld [vmem:[%s570 + $0xe38] sm:$0xff]
        %v2881 = vld [vmem:[%s570 + $0xe40] sm:$0xff]
        %v2882 = vld [vmem:[%s570 + $0xe48] sm:$0xff]
        %v2883 = vld [vmem:[%s570 + $0xe50] sm:$0xff]
        %v2884 = vld [vmem:[%s570 + $0xe58] sm:$0xff]
        %v2885 = vld [vmem:[%s570 + $0xe60] sm:$0xff]
        %v2886 = vld [vmem:[%s570 + $0xe68] sm:$0xff]
        %v2887 = vld [vmem:[%s570 + $0xe70] sm:$0xff]
        %v2888 = vld [vmem:[%s570 + $0xe78] sm:$0xff]
        %v2889 = vld [vmem:[%s570 + $0xe80] sm:$0xff]
        %v2890 = vld [vmem:[%s570 + $0xe88] sm:$0xff]
        %v2891 = vld [vmem:[%s570 + $0xe90] sm:$0xff]
        %v2892 = vld [vmem:[%s570 + $0xe98] sm:$0xff]
        %v2893 = vld [vmem:[%s570 + $0xea0] sm:$0xff]
        %v2894 = vld [vmem:[%s570 + $0xea8] sm:$0xff]
        %v2895 = vld [vmem:[%s570 + $0xeb0] sm:$0xff]
        %v2896 = vld [vmem:[%s570 + $0xeb8] sm:$0xff]
        %v2897 = vld [vmem:[%s570 + $0xec0] sm:$0xff]
        %v2898 = vld [vmem:[%s570 + $0xec8] sm:$0xff]
        %v2899 = vld [vmem:[%s570 + $0xed0] sm:$0xff]
        %v2900 = vld [vmem:[%s570 + $0xed8] sm:$0xff]
        %v2901 = vld [vmem:[%s570 + $0xee0] sm:$0xff]
        %v2902 = vld [vmem:[%s570 + $0xee8] sm:$0xff]
        %v2903 = vld [vmem:[%s570 + $0xef0] sm:$0xff]
        %v2904 = vld [vmem:[%s570 + $0xef8] sm:$0xff]
        %v2905 = vld [vmem:[%s570 + $0xf00] sm:$0xff]
        %v2906 = vld [vmem:[%s570 + $0xf08] sm:$0xff]
        %v2907 = vld [vmem:[%s570 + $0xf10] sm:$0xff]
        %v2908 = vld [vmem:[%s570 + $0xf18] sm:$0xff]
        %v2909 = vld [vmem:[%s570 + $0xf20] sm:$0xff]
        %v2910 = vld [vmem:[%s570 + $0xf28] sm:$0xff]
        %v2911 = vld [vmem:[%s570 + $0xf30] sm:$0xff]
        %v2912 = vld [vmem:[%s570 + $0xf38] sm:$0xff]
        %v2913 = vld [vmem:[%s570 + $0xf40] sm:$0xff]
        %v2914 = vld [vmem:[%s570 + $0xf48] sm:$0xff]
        %v2915 = vld [vmem:[%s570 + $0xf50] sm:$0xff]
        %v2916 = vld [vmem:[%s570 + $0xf58] sm:$0xff]
        %v2917 = vld [vmem:[%s570 + $0xf60] sm:$0xff]
        %v2918 = vld [vmem:[%s570 + $0xf68] sm:$0xff]
        %v2919 = vld [vmem:[%s570 + $0xf70] sm:$0xff]
        %v2920 = vld [vmem:[%s570 + $0xf78] sm:$0xff]
        %v2921 = vld [vmem:[%s570 + $0xf80] sm:$0xff]
        %v2922 = vld [vmem:[%s570 + $0xf88] sm:$0xff]
        %v2923 = vld [vmem:[%s570 + $0xf90] sm:$0xff]
        %v2924 = vld [vmem:[%s570 + $0xf98] sm:$0xff]
        %v2925 = vld [vmem:[%s570 + $0xfa0] sm:$0xff]
        %v2926 = vld [vmem:[%s570 + $0xfa8] sm:$0xff]
        %v2927 = vld [vmem:[%s570 + $0xfb0] sm:$0xff]
        %v2928 = vld [vmem:[%s570 + $0xfb8] sm:$0xff]
        %v2929 = vld [vmem:[%s570 + $0xfc0] sm:$0xff]
        %v2930 = vld [vmem:[%s570 + $0xfc8] sm:$0xff]
        %v2931 = vld [vmem:[%s570 + $0xfd0] sm:$0xff]
        %v2932 = vld [vmem:[%s570 + $0xfd8] sm:$0xff]
        %v2933 = vld [vmem:[%s570 + $0xfe0] sm:$0xff]
        %v2934 = vld [vmem:[%s570 + $0xfe8] sm:$0xff]
        %v2935 = vld [vmem:[%s570 + $0xff0] sm:$0xff]
        %v2936 = vld [vmem:[%s570 + $0xff8] sm:$0xff]
        %v2937 = vld [vmem:[%s579] sm:$0xf]
        %v2939 = vlaneseq
        %v2940 = vshrl.u32 %v2939, 7
        %v2941 = vsub.s32 0, %v2940
        %v2942 = vrot.slane %v2937, %v2941
        %v2943 = vlaneseq
        %v2944 = vshrl.u32 %v2943, 7
        %v2945 = vsub.s32 1, %v2944
        %v2946 = vrot.slane %v2937, %v2945
        %v2947 = vlaneseq
        %v2948 = vshrl.u32 %v2947, 7
        %v2949 = vsub.s32 2, %v2948
        %v2950 = vrot.slane %v2937, %v2949
        %v2951 = vlaneseq
        %v2952 = vshrl.u32 %v2951, 7
        %v2953 = vsub.s32 3, %v2952
        %v2954 = vrot.slane %v2937, %v2953
        %v3471 = vunpack.c.l.b16 %v2425
        %v3472 = vunpack.c.h.b16 %v2425
        %v3473 = vunpack.c.l.b16 %v2426
        %v3474 = vunpack.c.h.b16 %v2426
        %v3475 = vunpack.c.l.b16 %v2427
        %v3476 = vunpack.c.h.b16 %v2427
        %v3477 = vunpack.c.l.b16 %v2428
        %v3478 = vunpack.c.h.b16 %v2428
        %v3479 = vunpack.c.l.b16 %v2429
        %v3480 = vunpack.c.h.b16 %v2429
        %v3481 = vunpack.c.l.b16 %v2430
        %v3482 = vunpack.c.h.b16 %v2430
        %v3483 = vunpack.c.l.b16 %v2431
        %v3484 = vunpack.c.h.b16 %v2431
        %v3485 = vunpack.c.l.b16 %v2432
        %v3486 = vunpack.c.h.b16 %v2432
        %v3487 = vunpack.c.l.b16 %v2433
        %v3488 = vunpack.c.h.b16 %v2433
        %v3489 = vunpack.c.l.b16 %v2434
        %v3490 = vunpack.c.h.b16 %v2434
        %v3491 = vunpack.c.l.b16 %v2435
        %v3492 = vunpack.c.h.b16 %v2435
        %v3493 = vunpack.c.l.b16 %v2436
        %v3494 = vunpack.c.h.b16 %v2436
        %v3495 = vunpack.c.l.b16 %v2437
        %v3496 = vunpack.c.h.b16 %v2437
        %v3497 = vunpack.c.l.b16 %v2438
        %v3498 = vunpack.c.h.b16 %v2438
        %v3499 = vunpack.c.l.b16 %v2439
        %v3500 = vunpack.c.h.b16 %v2439
        %v3501 = vunpack.c.l.b16 %v2440
        %v3502 = vunpack.c.h.b16 %v2440
        %v3503 = vunpack.c.l.b16 %v2441
        %v3504 = vunpack.c.h.b16 %v2441
        %v3505 = vunpack.c.l.b16 %v2442
        %v3506 = vunpack.c.h.b16 %v2442
        %v3507 = vunpack.c.l.b16 %v2443
        %v3508 = vunpack.c.h.b16 %v2443
        %v3509 = vunpack.c.l.b16 %v2444
        %v3510 = vunpack.c.h.b16 %v2444
        %v3511 = vunpack.c.l.b16 %v2445
        %v3512 = vunpack.c.h.b16 %v2445
        %v3513 = vunpack.c.l.b16 %v2446
        %v3514 = vunpack.c.h.b16 %v2446
        %v3515 = vunpack.c.l.b16 %v2447
        %v3516 = vunpack.c.h.b16 %v2447
        %v3517 = vunpack.c.l.b16 %v2448
        %v3518 = vunpack.c.h.b16 %v2448
        %v3519 = vunpack.c.l.b16 %v2449
        %v3520 = vunpack.c.h.b16 %v2449
        %v3521 = vunpack.c.l.b16 %v2450
        %v3522 = vunpack.c.h.b16 %v2450
        %v3523 = vunpack.c.l.b16 %v2451
        %v3524 = vunpack.c.h.b16 %v2451
        %v3525 = vunpack.c.l.b16 %v2452
        %v3526 = vunpack.c.h.b16 %v2452
        %v3527 = vunpack.c.l.b16 %v2453
        %v3528 = vunpack.c.h.b16 %v2453
        %v3529 = vunpack.c.l.b16 %v2454
        %v3530 = vunpack.c.h.b16 %v2454
        %v3531 = vunpack.c.l.b16 %v2455
        %v3532 = vunpack.c.h.b16 %v2455
        %v3533 = vunpack.c.l.b16 %v2456
        %v3534 = vunpack.c.h.b16 %v2456
        %v3535 = vunpack.c.l.b16 %v2457
        %v3536 = vunpack.c.h.b16 %v2457
        %v3537 = vunpack.c.l.b16 %v2458
        %v3538 = vunpack.c.h.b16 %v2458
        %v3539 = vunpack.c.l.b16 %v2459
        %v3540 = vunpack.c.h.b16 %v2459
        %v3541 = vunpack.c.l.b16 %v2460
        %v3542 = vunpack.c.h.b16 %v2460
        %v3543 = vunpack.c.l.b16 %v2461
        %v3544 = vunpack.c.h.b16 %v2461
        %v3545 = vunpack.c.l.b16 %v2462
        %v3546 = vunpack.c.h.b16 %v2462
        %v3547 = vunpack.c.l.b16 %v2463
        %v3548 = vunpack.c.h.b16 %v2463
        %v3549 = vunpack.c.l.b16 %v2464
        %v3550 = vunpack.c.h.b16 %v2464
        %v3551 = vunpack.c.l.b16 %v2465
        %v3552 = vunpack.c.h.b16 %v2465
        %v3553 = vunpack.c.l.b16 %v2466
        %v3554 = vunpack.c.h.b16 %v2466
        %v3555 = vunpack.c.l.b16 %v2467
        %v3556 = vunpack.c.h.b16 %v2467
        %v3557 = vunpack.c.l.b16 %v2468
        %v3558 = vunpack.c.h.b16 %v2468
        %v3559 = vunpack.c.l.b16 %v2469
        %v3560 = vunpack.c.h.b16 %v2469
        %v3561 = vunpack.c.l.b16 %v2470
        %v3562 = vunpack.c.h.b16 %v2470
        %v3563 = vunpack.c.l.b16 %v2471
        %v3564 = vunpack.c.h.b16 %v2471
        %v3565 = vunpack.c.l.b16 %v2472
        %v3566 = vunpack.c.h.b16 %v2472
        %v3567 = vunpack.c.l.b16 %v2473
        %v3568 = vunpack.c.h.b16 %v2473
        %v3569 = vunpack.c.l.b16 %v2474
        %v3570 = vunpack.c.h.b16 %v2474
        %v3571 = vunpack.c.l.b16 %v2475
        %v3572 = vunpack.c.h.b16 %v2475
        %v3573 = vunpack.c.l.b16 %v2476
        %v3574 = vunpack.c.h.b16 %v2476
        %v3575 = vunpack.c.l.b16 %v2477
        %v3576 = vunpack.c.h.b16 %v2477
        %v3577 = vunpack.c.l.b16 %v2478
        %v3578 = vunpack.c.h.b16 %v2478
        %v3579 = vunpack.c.l.b16 %v2479
        %v3580 = vunpack.c.h.b16 %v2479
        %v3581 = vunpack.c.l.b16 %v2480
        %v3582 = vunpack.c.h.b16 %v2480
        %v3583 = vunpack.c.l.b16 %v2481
        %v3584 = vunpack.c.h.b16 %v2481
        %v3585 = vunpack.c.l.b16 %v2482
        %v3586 = vunpack.c.h.b16 %v2482
        %v3587 = vunpack.c.l.b16 %v2483
        %v3588 = vunpack.c.h.b16 %v2483
        %v3589 = vunpack.c.l.b16 %v2484
        %v3590 = vunpack.c.h.b16 %v2484
        %v3591 = vunpack.c.l.b16 %v2485
        %v3592 = vunpack.c.h.b16 %v2485
        %v3593 = vunpack.c.l.b16 %v2486
        %v3594 = vunpack.c.h.b16 %v2486
        %v3595 = vunpack.c.l.b16 %v2487
        %v3596 = vunpack.c.h.b16 %v2487
        %v3597 = vunpack.c.l.b16 %v2488
        %v3598 = vunpack.c.h.b16 %v2488
        %v3599 = vunpack.c.l.b16 %v2489
        %v3600 = vunpack.c.h.b16 %v2489
        %v3601 = vunpack.c.l.b16 %v2490
        %v3602 = vunpack.c.h.b16 %v2490
        %v3603 = vunpack.c.l.b16 %v2491
        %v3604 = vunpack.c.h.b16 %v2491
        %v3605 = vunpack.c.l.b16 %v2492
        %v3606 = vunpack.c.h.b16 %v2492
        %v3607 = vunpack.c.l.b16 %v2493
        %v3608 = vunpack.c.h.b16 %v2493
        %v3609 = vunpack.c.l.b16 %v2494
        %v3610 = vunpack.c.h.b16 %v2494
        %v3611 = vunpack.c.l.b16 %v2495
        %v3612 = vunpack.c.h.b16 %v2495
        %v3613 = vunpack.c.l.b16 %v2496
        %v3614 = vunpack.c.h.b16 %v2496
        %v3615 = vunpack.c.l.b16 %v2497
        %v3616 = vunpack.c.h.b16 %v2497
        %v3617 = vunpack.c.l.b16 %v2498
        %v3618 = vunpack.c.h.b16 %v2498
        %v3619 = vunpack.c.l.b16 %v2499
        %v3620 = vunpack.c.h.b16 %v2499
        %v3621 = vunpack.c.l.b16 %v2500
        %v3622 = vunpack.c.h.b16 %v2500
        %v3623 = vunpack.c.l.b16 %v2501
        %v3624 = vunpack.c.h.b16 %v2501
        %v3625 = vunpack.c.l.b16 %v2502
        %v3626 = vunpack.c.h.b16 %v2502
        %v3627 = vunpack.c.l.b16 %v2503
        %v3628 = vunpack.c.h.b16 %v2503
        %v3629 = vunpack.c.l.b16 %v2504
        %v3630 = vunpack.c.h.b16 %v2504
        %v3631 = vunpack.c.l.b16 %v2505
        %v3632 = vunpack.c.h.b16 %v2505
        %v3633 = vunpack.c.l.b16 %v2506
        %v3634 = vunpack.c.h.b16 %v2506
        %v3635 = vunpack.c.l.b16 %v2507
        %v3636 = vunpack.c.h.b16 %v2507
        %v3637 = vunpack.c.l.b16 %v2508
        %v3638 = vunpack.c.h.b16 %v2508
        %v3639 = vunpack.c.l.b16 %v2509
        %v3640 = vunpack.c.h.b16 %v2509
        %v3641 = vunpack.c.l.b16 %v2510
        %v3642 = vunpack.c.h.b16 %v2510
        %v3643 = vunpack.c.l.b16 %v2511
        %v3644 = vunpack.c.h.b16 %v2511
        %v3645 = vunpack.c.l.b16 %v2512
        %v3646 = vunpack.c.h.b16 %v2512
        %v3647 = vunpack.c.l.b16 %v2513
        %v3648 = vunpack.c.h.b16 %v2513
        %v3649 = vunpack.c.l.b16 %v2514
        %v3650 = vunpack.c.h.b16 %v2514
        %v3651 = vunpack.c.l.b16 %v2515
        %v3652 = vunpack.c.h.b16 %v2515
        %v3653 = vunpack.c.l.b16 %v2516
        %v3654 = vunpack.c.h.b16 %v2516
        %v3655 = vunpack.c.l.b16 %v2517
        %v3656 = vunpack.c.h.b16 %v2517
        %v3657 = vunpack.c.l.b16 %v2518
        %v3658 = vunpack.c.h.b16 %v2518
        %v3659 = vunpack.c.l.b16 %v2519
        %v3660 = vunpack.c.h.b16 %v2519
        %v3661 = vunpack.c.l.b16 %v2520
        %v3662 = vunpack.c.h.b16 %v2520
        %v3663 = vunpack.c.l.b16 %v2521
        %v3664 = vunpack.c.h.b16 %v2521
        %v3665 = vunpack.c.l.b16 %v2522
        %v3666 = vunpack.c.h.b16 %v2522
        %v3667 = vunpack.c.l.b16 %v2523
        %v3668 = vunpack.c.h.b16 %v2523
        %v3669 = vunpack.c.l.b16 %v2524
        %v3670 = vunpack.c.h.b16 %v2524
        %v3671 = vunpack.c.l.b16 %v2525
        %v3672 = vunpack.c.h.b16 %v2525
        %v3673 = vunpack.c.l.b16 %v2526
        %v3674 = vunpack.c.h.b16 %v2526
        %v3675 = vunpack.c.l.b16 %v2527
        %v3676 = vunpack.c.h.b16 %v2527
        %v3677 = vunpack.c.l.b16 %v2528
        %v3678 = vunpack.c.h.b16 %v2528
        %v3679 = vunpack.c.l.b16 %v2529
        %v3680 = vunpack.c.h.b16 %v2529
        %v3681 = vunpack.c.l.b16 %v2530
        %v3682 = vunpack.c.h.b16 %v2530
        %v3683 = vunpack.c.l.b16 %v2531
        %v3684 = vunpack.c.h.b16 %v2531
        %v3685 = vunpack.c.l.b16 %v2532
        %v3686 = vunpack.c.h.b16 %v2532
        %v3687 = vunpack.c.l.b16 %v2533
        %v3688 = vunpack.c.h.b16 %v2533
        %v3689 = vunpack.c.l.b16 %v2534
        %v3690 = vunpack.c.h.b16 %v2534
        %v3691 = vunpack.c.l.b16 %v2535
        %v3692 = vunpack.c.h.b16 %v2535
        %v3693 = vunpack.c.l.b16 %v2536
        %v3694 = vunpack.c.h.b16 %v2536
        %v3695 = vunpack.c.l.b16 %v2537
        %v3696 = vunpack.c.h.b16 %v2537
        %v3697 = vunpack.c.l.b16 %v2538
        %v3698 = vunpack.c.h.b16 %v2538
        %v3699 = vunpack.c.l.b16 %v2539
        %v3700 = vunpack.c.h.b16 %v2539
        %v3701 = vunpack.c.l.b16 %v2540
        %v3702 = vunpack.c.h.b16 %v2540
        %v3703 = vunpack.c.l.b16 %v2541
        %v3704 = vunpack.c.h.b16 %v2541
        %v3705 = vunpack.c.l.b16 %v2542
        %v3706 = vunpack.c.h.b16 %v2542
        %v3707 = vunpack.c.l.b16 %v2543
        %v3708 = vunpack.c.h.b16 %v2543
        %v3709 = vunpack.c.l.b16 %v2544
        %v3710 = vunpack.c.h.b16 %v2544
        %v3711 = vunpack.c.l.b16 %v2545
        %v3712 = vunpack.c.h.b16 %v2545
        %v3713 = vunpack.c.l.b16 %v2546
        %v3714 = vunpack.c.h.b16 %v2546
        %v3715 = vunpack.c.l.b16 %v2547
        %v3716 = vunpack.c.h.b16 %v2547
        %v3717 = vunpack.c.l.b16 %v2548
        %v3718 = vunpack.c.h.b16 %v2548
        %v3719 = vunpack.c.l.b16 %v2549
        %v3720 = vunpack.c.h.b16 %v2549
        %v3721 = vunpack.c.l.b16 %v2550
        %v3722 = vunpack.c.h.b16 %v2550
        %v3723 = vunpack.c.l.b16 %v2551
        %v3724 = vunpack.c.h.b16 %v2551
        %v3725 = vunpack.c.l.b16 %v2552
        %v3726 = vunpack.c.h.b16 %v2552
        %v3727 = vunpack.c.l.b16 %v2553
        %v3728 = vunpack.c.h.b16 %v2553
        %v3729 = vunpack.c.l.b16 %v2554
        %v3730 = vunpack.c.h.b16 %v2554
        %v3731 = vunpack.c.l.b16 %v2555
        %v3732 = vunpack.c.h.b16 %v2555
        %v3733 = vunpack.c.l.b16 %v2556
        %v3734 = vunpack.c.h.b16 %v2556
        %v3735 = vunpack.c.l.b16 %v2557
        %v3736 = vunpack.c.h.b16 %v2557
        %v3737 = vunpack.c.l.b16 %v2558
        %v3738 = vunpack.c.h.b16 %v2558
        %v3739 = vunpack.c.l.b16 %v2559
        %v3740 = vunpack.c.h.b16 %v2559
        %v3741 = vunpack.c.l.b16 %v2560
        %v3742 = vunpack.c.h.b16 %v2560
        %v3743 = vunpack.c.l.b16 %v2561
        %v3744 = vunpack.c.h.b16 %v2561
        %v3745 = vunpack.c.l.b16 %v2562
        %v3746 = vunpack.c.h.b16 %v2562
        %v3747 = vunpack.c.l.b16 %v2563
        %v3748 = vunpack.c.h.b16 %v2563
        %v3749 = vunpack.c.l.b16 %v2564
        %v3750 = vunpack.c.h.b16 %v2564
        %v3751 = vunpack.c.l.b16 %v2565
        %v3752 = vunpack.c.h.b16 %v2565
        %v3753 = vunpack.c.l.b16 %v2566
        %v3754 = vunpack.c.h.b16 %v2566
        %v3755 = vunpack.c.l.b16 %v2567
        %v3756 = vunpack.c.h.b16 %v2567
        %v3757 = vunpack.c.l.b16 %v2568
        %v3758 = vunpack.c.h.b16 %v2568
        %v3759 = vunpack.c.l.b16 %v2569
        %v3760 = vunpack.c.h.b16 %v2569
        %v3761 = vunpack.c.l.b16 %v2570
        %v3762 = vunpack.c.h.b16 %v2570
        %v3763 = vunpack.c.l.b16 %v2571
        %v3764 = vunpack.c.h.b16 %v2571
        %v3765 = vunpack.c.l.b16 %v2572
        %v3766 = vunpack.c.h.b16 %v2572
        %v3767 = vunpack.c.l.b16 %v2573
        %v3768 = vunpack.c.h.b16 %v2573
        %v3769 = vunpack.c.l.b16 %v2574
        %v3770 = vunpack.c.h.b16 %v2574
        %v3771 = vunpack.c.l.b16 %v2575
        %v3772 = vunpack.c.h.b16 %v2575
        %v3773 = vunpack.c.l.b16 %v2576
        %v3774 = vunpack.c.h.b16 %v2576
        %v3775 = vunpack.c.l.b16 %v2577
        %v3776 = vunpack.c.h.b16 %v2577
        %v3777 = vunpack.c.l.b16 %v2578
        %v3778 = vunpack.c.h.b16 %v2578
        %v3779 = vunpack.c.l.b16 %v2579
        %v3780 = vunpack.c.h.b16 %v2579
        %v3781 = vunpack.c.l.b16 %v2580
        %v3782 = vunpack.c.h.b16 %v2580
        %v3783 = vunpack.c.l.b16 %v2581
        %v3784 = vunpack.c.h.b16 %v2581
        %v3785 = vunpack.c.l.b16 %v2582
        %v3786 = vunpack.c.h.b16 %v2582
        %v3787 = vunpack.c.l.b16 %v2583
        %v3788 = vunpack.c.h.b16 %v2583
        %v3789 = vunpack.c.l.b16 %v2584
        %v3790 = vunpack.c.h.b16 %v2584
        %v3791 = vunpack.c.l.b16 %v2585
        %v3792 = vunpack.c.h.b16 %v2585
        %v3793 = vunpack.c.l.b16 %v2586
        %v3794 = vunpack.c.h.b16 %v2586
        %v3795 = vunpack.c.l.b16 %v2587
        %v3796 = vunpack.c.h.b16 %v2587
        %v3797 = vunpack.c.l.b16 %v2588
        %v3798 = vunpack.c.h.b16 %v2588
        %v3799 = vunpack.c.l.b16 %v2589
        %v3800 = vunpack.c.h.b16 %v2589
        %v3801 = vunpack.c.l.b16 %v2590
        %v3802 = vunpack.c.h.b16 %v2590
        %v3803 = vunpack.c.l.b16 %v2591
        %v3804 = vunpack.c.h.b16 %v2591
        %v3805 = vunpack.c.l.b16 %v2592
        %v3806 = vunpack.c.h.b16 %v2592
        %v3807 = vunpack.c.l.b16 %v2593
        %v3808 = vunpack.c.h.b16 %v2593
        %v3809 = vunpack.c.l.b16 %v2594
        %v3810 = vunpack.c.h.b16 %v2594
        %v3811 = vunpack.c.l.b16 %v2595
        %v3812 = vunpack.c.h.b16 %v2595
        %v3813 = vunpack.c.l.b16 %v2596
        %v3814 = vunpack.c.h.b16 %v2596
        %v3815 = vunpack.c.l.b16 %v2597
        %v3816 = vunpack.c.h.b16 %v2597
        %v3817 = vunpack.c.l.b16 %v2598
        %v3818 = vunpack.c.h.b16 %v2598
        %v3819 = vunpack.c.l.b16 %v2599
        %v3820 = vunpack.c.h.b16 %v2599
        %v3821 = vunpack.c.l.b16 %v2600
        %v3822 = vunpack.c.h.b16 %v2600
        %v3823 = vunpack.c.l.b16 %v2601
        %v3824 = vunpack.c.h.b16 %v2601
        %v3825 = vunpack.c.l.b16 %v2602
        %v3826 = vunpack.c.h.b16 %v2602
        %v3827 = vunpack.c.l.b16 %v2603
        %v3828 = vunpack.c.h.b16 %v2603
        %v3829 = vunpack.c.l.b16 %v2604
        %v3830 = vunpack.c.h.b16 %v2604
        %v3831 = vunpack.c.l.b16 %v2605
        %v3832 = vunpack.c.h.b16 %v2605
        %v3833 = vunpack.c.l.b16 %v2606
        %v3834 = vunpack.c.h.b16 %v2606
        %v3835 = vunpack.c.l.b16 %v2607
        %v3836 = vunpack.c.h.b16 %v2607
        %v3837 = vunpack.c.l.b16 %v2608
        %v3838 = vunpack.c.h.b16 %v2608
        %v3839 = vunpack.c.l.b16 %v2609
        %v3840 = vunpack.c.h.b16 %v2609
        %v3841 = vunpack.c.l.b16 %v2610
        %v3842 = vunpack.c.h.b16 %v2610
        %v3843 = vunpack.c.l.b16 %v2611
        %v3844 = vunpack.c.h.b16 %v2611
        %v3845 = vunpack.c.l.b16 %v2612
        %v3846 = vunpack.c.h.b16 %v2612
        %v3847 = vunpack.c.l.b16 %v2613
        %v3848 = vunpack.c.h.b16 %v2613
        %v3849 = vunpack.c.l.b16 %v2614
        %v3850 = vunpack.c.h.b16 %v2614
        %v3851 = vunpack.c.l.b16 %v2615
        %v3852 = vunpack.c.h.b16 %v2615
        %v3853 = vunpack.c.l.b16 %v2616
        %v3854 = vunpack.c.h.b16 %v2616
        %v3855 = vunpack.c.l.b16 %v2617
        %v3856 = vunpack.c.h.b16 %v2617
        %v3857 = vunpack.c.l.b16 %v2618
        %v3858 = vunpack.c.h.b16 %v2618
        %v3859 = vunpack.c.l.b16 %v2619
        %v3860 = vunpack.c.h.b16 %v2619
        %v3861 = vunpack.c.l.b16 %v2620
        %v3862 = vunpack.c.h.b16 %v2620
        %v3863 = vunpack.c.l.b16 %v2621
        %v3864 = vunpack.c.h.b16 %v2621
        %v3865 = vunpack.c.l.b16 %v2622
        %v3866 = vunpack.c.h.b16 %v2622
        %v3867 = vunpack.c.l.b16 %v2623
        %v3868 = vunpack.c.h.b16 %v2623
        %v3869 = vunpack.c.l.b16 %v2624
        %v3870 = vunpack.c.h.b16 %v2624
        %v3871 = vunpack.c.l.b16 %v2625
        %v3872 = vunpack.c.h.b16 %v2625
        %v3873 = vunpack.c.l.b16 %v2626
        %v3874 = vunpack.c.h.b16 %v2626
        %v3875 = vunpack.c.l.b16 %v2627
        %v3876 = vunpack.c.h.b16 %v2627
        %v3877 = vunpack.c.l.b16 %v2628
        %v3878 = vunpack.c.h.b16 %v2628
        %v3879 = vunpack.c.l.b16 %v2629
        %v3880 = vunpack.c.h.b16 %v2629
        %v3881 = vunpack.c.l.b16 %v2630
        %v3882 = vunpack.c.h.b16 %v2630
        %v3883 = vunpack.c.l.b16 %v2631
        %v3884 = vunpack.c.h.b16 %v2631
        %v3885 = vunpack.c.l.b16 %v2632
        %v3886 = vunpack.c.h.b16 %v2632
        %v3887 = vunpack.c.l.b16 %v2633
        %v3888 = vunpack.c.h.b16 %v2633
        %v3889 = vunpack.c.l.b16 %v2634
        %v3890 = vunpack.c.h.b16 %v2634
        %v3891 = vunpack.c.l.b16 %v2635
        %v3892 = vunpack.c.h.b16 %v2635
        %v3893 = vunpack.c.l.b16 %v2636
        %v3894 = vunpack.c.h.b16 %v2636
        %v3895 = vunpack.c.l.b16 %v2637
        %v3896 = vunpack.c.h.b16 %v2637
        %v3897 = vunpack.c.l.b16 %v2638
        %v3898 = vunpack.c.h.b16 %v2638
        %v3899 = vunpack.c.l.b16 %v2639
        %v3900 = vunpack.c.h.b16 %v2639
        %v3901 = vunpack.c.l.b16 %v2640
        %v3902 = vunpack.c.h.b16 %v2640
        %v3903 = vunpack.c.l.b16 %v2641
        %v3904 = vunpack.c.h.b16 %v2641
        %v3905 = vunpack.c.l.b16 %v2642
        %v3906 = vunpack.c.h.b16 %v2642
        %v3907 = vunpack.c.l.b16 %v2643
        %v3908 = vunpack.c.h.b16 %v2643
        %v3909 = vunpack.c.l.b16 %v2644
        %v3910 = vunpack.c.h.b16 %v2644
        %v3911 = vunpack.c.l.b16 %v2645
        %v3912 = vunpack.c.h.b16 %v2645
        %v3913 = vunpack.c.l.b16 %v2646
        %v3914 = vunpack.c.h.b16 %v2646
        %v3915 = vunpack.c.l.b16 %v2647
        %v3916 = vunpack.c.h.b16 %v2647
        %v3917 = vunpack.c.l.b16 %v2648
        %v3918 = vunpack.c.h.b16 %v2648
        %v3919 = vunpack.c.l.b16 %v2649
        %v3920 = vunpack.c.h.b16 %v2649
        %v3921 = vunpack.c.l.b16 %v2650
        %v3922 = vunpack.c.h.b16 %v2650
        %v3923 = vunpack.c.l.b16 %v2651
        %v3924 = vunpack.c.h.b16 %v2651
        %v3925 = vunpack.c.l.b16 %v2652
        %v3926 = vunpack.c.h.b16 %v2652
        %v3927 = vunpack.c.l.b16 %v2653
        %v3928 = vunpack.c.h.b16 %v2653
        %v3929 = vunpack.c.l.b16 %v2654
        %v3930 = vunpack.c.h.b16 %v2654
        %v3931 = vunpack.c.l.b16 %v2655
        %v3932 = vunpack.c.h.b16 %v2655
        %v3933 = vunpack.c.l.b16 %v2656
        %v3934 = vunpack.c.h.b16 %v2656
        %v3935 = vunpack.c.l.b16 %v2657
        %v3936 = vunpack.c.h.b16 %v2657
        %v3937 = vunpack.c.l.b16 %v2658
        %v3938 = vunpack.c.h.b16 %v2658
        %v3939 = vunpack.c.l.b16 %v2659
        %v3940 = vunpack.c.h.b16 %v2659
        %v3941 = vunpack.c.l.b16 %v2660
        %v3942 = vunpack.c.h.b16 %v2660
        %v3943 = vunpack.c.l.b16 %v2661
        %v3944 = vunpack.c.h.b16 %v2661
        %v3945 = vunpack.c.l.b16 %v2662
        %v3946 = vunpack.c.h.b16 %v2662
        %v3947 = vunpack.c.l.b16 %v2663
        %v3948 = vunpack.c.h.b16 %v2663
        %v3949 = vunpack.c.l.b16 %v2664
        %v3950 = vunpack.c.h.b16 %v2664
        %v3951 = vunpack.c.l.b16 %v2665
        %v3952 = vunpack.c.h.b16 %v2665
        %v3953 = vunpack.c.l.b16 %v2666
        %v3954 = vunpack.c.h.b16 %v2666
        %v3955 = vunpack.c.l.b16 %v2667
        %v3956 = vunpack.c.h.b16 %v2667
        %v3957 = vunpack.c.l.b16 %v2668
        %v3958 = vunpack.c.h.b16 %v2668
        %v3959 = vunpack.c.l.b16 %v2669
        %v3960 = vunpack.c.h.b16 %v2669
        %v3961 = vunpack.c.l.b16 %v2670
        %v3962 = vunpack.c.h.b16 %v2670
        %v3963 = vunpack.c.l.b16 %v2671
        %v3964 = vunpack.c.h.b16 %v2671
        %v3965 = vunpack.c.l.b16 %v2672
        %v3966 = vunpack.c.h.b16 %v2672
        %v3967 = vunpack.c.l.b16 %v2673
        %v3968 = vunpack.c.h.b16 %v2673
        %v3969 = vunpack.c.l.b16 %v2674
        %v3970 = vunpack.c.h.b16 %v2674
        %v3971 = vunpack.c.l.b16 %v2675
        %v3972 = vunpack.c.h.b16 %v2675
        %v3973 = vunpack.c.l.b16 %v2676
        %v3974 = vunpack.c.h.b16 %v2676
        %v3975 = vunpack.c.l.b16 %v2677
        %v3976 = vunpack.c.h.b16 %v2677
        %v3977 = vunpack.c.l.b16 %v2678
        %v3978 = vunpack.c.h.b16 %v2678
        %v3979 = vunpack.c.l.b16 %v2679
        %v3980 = vunpack.c.h.b16 %v2679
        %v3981 = vunpack.c.l.b16 %v2680
        %v3982 = vunpack.c.h.b16 %v2680
        %v3983 = vunpack.c.l.b16 %v2681
        %v3984 = vunpack.c.h.b16 %v2681
        %v3985 = vunpack.c.l.b16 %v2682
        %v3986 = vunpack.c.h.b16 %v2682
        %v3987 = vunpack.c.l.b16 %v2683
        %v3988 = vunpack.c.h.b16 %v2683
        %v3989 = vunpack.c.l.b16 %v2684
        %v3990 = vunpack.c.h.b16 %v2684
        %v3991 = vunpack.c.l.b16 %v2685
        %v3992 = vunpack.c.h.b16 %v2685
        %v3993 = vunpack.c.l.b16 %v2686
        %v3994 = vunpack.c.h.b16 %v2686
        %v3995 = vunpack.c.l.b16 %v2687
        %v3996 = vunpack.c.h.b16 %v2687
        %v3997 = vunpack.c.l.b16 %v2688
        %v3998 = vunpack.c.h.b16 %v2688
        %v3999 = vunpack.c.l.b16 %v2689
        %v4000 = vunpack.c.h.b16 %v2689
        %v4001 = vunpack.c.l.b16 %v2690
        %v4002 = vunpack.c.h.b16 %v2690
        %v4003 = vunpack.c.l.b16 %v2691
        %v4004 = vunpack.c.h.b16 %v2691
        %v4005 = vunpack.c.l.b16 %v2692
        %v4006 = vunpack.c.h.b16 %v2692
        %v4007 = vunpack.c.l.b16 %v2693
        %v4008 = vunpack.c.h.b16 %v2693
        %v4009 = vunpack.c.l.b16 %v2694
        %v4010 = vunpack.c.h.b16 %v2694
        %v4011 = vunpack.c.l.b16 %v2695
        %v4012 = vunpack.c.h.b16 %v2695
        %v4013 = vunpack.c.l.b16 %v2696
        %v4014 = vunpack.c.h.b16 %v2696
        %v4015 = vunpack.c.l.b16 %v2697
        %v4016 = vunpack.c.h.b16 %v2697
        %v4017 = vunpack.c.l.b16 %v2698
        %v4018 = vunpack.c.h.b16 %v2698
        %v4019 = vunpack.c.l.b16 %v2699
        %v4020 = vunpack.c.h.b16 %v2699
        %v4021 = vunpack.c.l.b16 %v2700
        %v4022 = vunpack.c.h.b16 %v2700
        %v4023 = vunpack.c.l.b16 %v2701
        %v4024 = vunpack.c.h.b16 %v2701
        %v4025 = vunpack.c.l.b16 %v2702
        %v4026 = vunpack.c.h.b16 %v2702
        %v4027 = vunpack.c.l.b16 %v2703
        %v4028 = vunpack.c.h.b16 %v2703
        %v4029 = vunpack.c.l.b16 %v2704
        %v4030 = vunpack.c.h.b16 %v2704
        %v4031 = vunpack.c.l.b16 %v2705
        %v4032 = vunpack.c.h.b16 %v2705
        %v4033 = vunpack.c.l.b16 %v2706
        %v4034 = vunpack.c.h.b16 %v2706
        %v4035 = vunpack.c.l.b16 %v2707
        %v4036 = vunpack.c.h.b16 %v2707
        %v4037 = vunpack.c.l.b16 %v2708
        %v4038 = vunpack.c.h.b16 %v2708
        %v4039 = vunpack.c.l.b16 %v2709
        %v4040 = vunpack.c.h.b16 %v2709
        %v4041 = vunpack.c.l.b16 %v2710
        %v4042 = vunpack.c.h.b16 %v2710
        %v4043 = vunpack.c.l.b16 %v2711
        %v4044 = vunpack.c.h.b16 %v2711
        %v4045 = vunpack.c.l.b16 %v2712
        %v4046 = vunpack.c.h.b16 %v2712
        %v4047 = vunpack.c.l.b16 %v2713
        %v4048 = vunpack.c.h.b16 %v2713
        %v4049 = vunpack.c.l.b16 %v2714
        %v4050 = vunpack.c.h.b16 %v2714
        %v4051 = vunpack.c.l.b16 %v2715
        %v4052 = vunpack.c.h.b16 %v2715
        %v4053 = vunpack.c.l.b16 %v2716
        %v4054 = vunpack.c.h.b16 %v2716
        %v4055 = vunpack.c.l.b16 %v2717
        %v4056 = vunpack.c.h.b16 %v2717
        %v4057 = vunpack.c.l.b16 %v2718
        %v4058 = vunpack.c.h.b16 %v2718
        %v4059 = vunpack.c.l.b16 %v2719
        %v4060 = vunpack.c.h.b16 %v2719
        %v4061 = vunpack.c.l.b16 %v2720
        %v4062 = vunpack.c.h.b16 %v2720
        %v4063 = vunpack.c.l.b16 %v2721
        %v4064 = vunpack.c.h.b16 %v2721
        %v4065 = vunpack.c.l.b16 %v2722
        %v4066 = vunpack.c.h.b16 %v2722
        %v4067 = vunpack.c.l.b16 %v2723
        %v4068 = vunpack.c.h.b16 %v2723
        %v4069 = vunpack.c.l.b16 %v2724
        %v4070 = vunpack.c.h.b16 %v2724
        %v4071 = vunpack.c.l.b16 %v2725
        %v4072 = vunpack.c.h.b16 %v2725
        %v4073 = vunpack.c.l.b16 %v2726
        %v4074 = vunpack.c.h.b16 %v2726
        %v4075 = vunpack.c.l.b16 %v2727
        %v4076 = vunpack.c.h.b16 %v2727
        %v4077 = vunpack.c.l.b16 %v2728
        %v4078 = vunpack.c.h.b16 %v2728
        %v4079 = vunpack.c.l.b16 %v2729
        %v4080 = vunpack.c.h.b16 %v2729
        %v4081 = vunpack.c.l.b16 %v2730
        %v4082 = vunpack.c.h.b16 %v2730
        %v4083 = vunpack.c.l.b16 %v2731
        %v4084 = vunpack.c.h.b16 %v2731
        %v4085 = vunpack.c.l.b16 %v2732
        %v4086 = vunpack.c.h.b16 %v2732
        %v4087 = vunpack.c.l.b16 %v2733
        %v4088 = vunpack.c.h.b16 %v2733
        %v4089 = vunpack.c.l.b16 %v2734
        %v4090 = vunpack.c.h.b16 %v2734
        %v4091 = vunpack.c.l.b16 %v2735
        %v4092 = vunpack.c.h.b16 %v2735
        %v4093 = vunpack.c.l.b16 %v2736
        %v4094 = vunpack.c.h.b16 %v2736
        %v4095 = vunpack.c.l.b16 %v2737
        %v4096 = vunpack.c.h.b16 %v2737
        %v4097 = vunpack.c.l.b16 %v2738
        %v4098 = vunpack.c.h.b16 %v2738
        %v4099 = vunpack.c.l.b16 %v2739
        %v4100 = vunpack.c.h.b16 %v2739
        %v4101 = vunpack.c.l.b16 %v2740
        %v4102 = vunpack.c.h.b16 %v2740
        %v4103 = vunpack.c.l.b16 %v2741
        %v4104 = vunpack.c.h.b16 %v2741
        %v4105 = vunpack.c.l.b16 %v2742
        %v4106 = vunpack.c.h.b16 %v2742
        %v4107 = vunpack.c.l.b16 %v2743
        %v4108 = vunpack.c.h.b16 %v2743
        %v4109 = vunpack.c.l.b16 %v2744
        %v4110 = vunpack.c.h.b16 %v2744
        %v4111 = vunpack.c.l.b16 %v2745
        %v4112 = vunpack.c.h.b16 %v2745
        %v4113 = vunpack.c.l.b16 %v2746
        %v4114 = vunpack.c.h.b16 %v2746
        %v4115 = vunpack.c.l.b16 %v2747
        %v4116 = vunpack.c.h.b16 %v2747
        %v4117 = vunpack.c.l.b16 %v2748
        %v4118 = vunpack.c.h.b16 %v2748
        %v4119 = vunpack.c.l.b16 %v2749
        %v4120 = vunpack.c.h.b16 %v2749
        %v4121 = vunpack.c.l.b16 %v2750
        %v4122 = vunpack.c.h.b16 %v2750
        %v4123 = vunpack.c.l.b16 %v2751
        %v4124 = vunpack.c.h.b16 %v2751
        %v4125 = vunpack.c.l.b16 %v2752
        %v4126 = vunpack.c.h.b16 %v2752
        %v4127 = vunpack.c.l.b16 %v2753
        %v4128 = vunpack.c.h.b16 %v2753
        %v4129 = vunpack.c.l.b16 %v2754
        %v4130 = vunpack.c.h.b16 %v2754
        %v4131 = vunpack.c.l.b16 %v2755
        %v4132 = vunpack.c.h.b16 %v2755
        %v4133 = vunpack.c.l.b16 %v2756
        %v4134 = vunpack.c.h.b16 %v2756
        %v4135 = vunpack.c.l.b16 %v2757
        %v4136 = vunpack.c.h.b16 %v2757
        %v4137 = vunpack.c.l.b16 %v2758
        %v4138 = vunpack.c.h.b16 %v2758
        %v4139 = vunpack.c.l.b16 %v2759
        %v4140 = vunpack.c.h.b16 %v2759
        %v4141 = vunpack.c.l.b16 %v2760
        %v4142 = vunpack.c.h.b16 %v2760
        %v4143 = vunpack.c.l.b16 %v2761
        %v4144 = vunpack.c.h.b16 %v2761
        %v4145 = vunpack.c.l.b16 %v2762
        %v4146 = vunpack.c.h.b16 %v2762
        %v4147 = vunpack.c.l.b16 %v2763
        %v4148 = vunpack.c.h.b16 %v2763
        %v4149 = vunpack.c.l.b16 %v2764
        %v4150 = vunpack.c.h.b16 %v2764
        %v4151 = vunpack.c.l.b16 %v2765
        %v4152 = vunpack.c.h.b16 %v2765
        %v4153 = vunpack.c.l.b16 %v2766
        %v4154 = vunpack.c.h.b16 %v2766
        %v4155 = vunpack.c.l.b16 %v2767
        %v4156 = vunpack.c.h.b16 %v2767
        %v4157 = vunpack.c.l.b16 %v2768
        %v4158 = vunpack.c.h.b16 %v2768
        %v4159 = vunpack.c.l.b16 %v2769
        %v4160 = vunpack.c.h.b16 %v2769
        %v4161 = vunpack.c.l.b16 %v2770
        %v4162 = vunpack.c.h.b16 %v2770
        %v4163 = vunpack.c.l.b16 %v2771
        %v4164 = vunpack.c.h.b16 %v2771
        %v4165 = vunpack.c.l.b16 %v2772
        %v4166 = vunpack.c.h.b16 %v2772
        %v4167 = vunpack.c.l.b16 %v2773
        %v4168 = vunpack.c.h.b16 %v2773
        %v4169 = vunpack.c.l.b16 %v2774
        %v4170 = vunpack.c.h.b16 %v2774
        %v4171 = vunpack.c.l.b16 %v2775
        %v4172 = vunpack.c.h.b16 %v2775
        %v4173 = vunpack.c.l.b16 %v2776
        %v4174 = vunpack.c.h.b16 %v2776
        %v4175 = vunpack.c.l.b16 %v2777
        %v4176 = vunpack.c.h.b16 %v2777
        %v4177 = vunpack.c.l.b16 %v2778
        %v4178 = vunpack.c.h.b16 %v2778
        %v4179 = vunpack.c.l.b16 %v2779
        %v4180 = vunpack.c.h.b16 %v2779
        %v4181 = vunpack.c.l.b16 %v2780
        %v4182 = vunpack.c.h.b16 %v2780
        %v4183 = vunpack.c.l.b16 %v2781
        %v4184 = vunpack.c.h.b16 %v2781
        %v4185 = vunpack.c.l.b16 %v2782
        %v4186 = vunpack.c.h.b16 %v2782
        %v4187 = vunpack.c.l.b16 %v2783
        %v4188 = vunpack.c.h.b16 %v2783
        %v4189 = vunpack.c.l.b16 %v2784
        %v4190 = vunpack.c.h.b16 %v2784
        %v4191 = vunpack.c.l.b16 %v2785
        %v4192 = vunpack.c.h.b16 %v2785
        %v4193 = vunpack.c.l.b16 %v2786
        %v4194 = vunpack.c.h.b16 %v2786
        %v4195 = vunpack.c.l.b16 %v2787
        %v4196 = vunpack.c.h.b16 %v2787
        %v4197 = vunpack.c.l.b16 %v2788
        %v4198 = vunpack.c.h.b16 %v2788
        %v4199 = vunpack.c.l.b16 %v2789
        %v4200 = vunpack.c.h.b16 %v2789
        %v4201 = vunpack.c.l.b16 %v2790
        %v4202 = vunpack.c.h.b16 %v2790
        %v4203 = vunpack.c.l.b16 %v2791
        %v4204 = vunpack.c.h.b16 %v2791
        %v4205 = vunpack.c.l.b16 %v2792
        %v4206 = vunpack.c.h.b16 %v2792
        %v4207 = vunpack.c.l.b16 %v2793
        %v4208 = vunpack.c.h.b16 %v2793
        %v4209 = vunpack.c.l.b16 %v2794
        %v4210 = vunpack.c.h.b16 %v2794
        %v4211 = vunpack.c.l.b16 %v2795
        %v4212 = vunpack.c.h.b16 %v2795
        %v4213 = vunpack.c.l.b16 %v2796
        %v4214 = vunpack.c.h.b16 %v2796
        %v4215 = vunpack.c.l.b16 %v2797
        %v4216 = vunpack.c.h.b16 %v2797
        %v4217 = vunpack.c.l.b16 %v2798
        %v4218 = vunpack.c.h.b16 %v2798
        %v4219 = vunpack.c.l.b16 %v2799
        %v4220 = vunpack.c.h.b16 %v2799
        %v4221 = vunpack.c.l.b16 %v2800
        %v4222 = vunpack.c.h.b16 %v2800
        %v4223 = vunpack.c.l.b16 %v2801
        %v4224 = vunpack.c.h.b16 %v2801
        %v4225 = vunpack.c.l.b16 %v2802
        %v4226 = vunpack.c.h.b16 %v2802
        %v4227 = vunpack.c.l.b16 %v2803
        %v4228 = vunpack.c.h.b16 %v2803
        %v4229 = vunpack.c.l.b16 %v2804
        %v4230 = vunpack.c.h.b16 %v2804
        %v4231 = vunpack.c.l.b16 %v2805
        %v4232 = vunpack.c.h.b16 %v2805
        %v4233 = vunpack.c.l.b16 %v2806
        %v4234 = vunpack.c.h.b16 %v2806
        %v4235 = vunpack.c.l.b16 %v2807
        %v4236 = vunpack.c.h.b16 %v2807
        %v4237 = vunpack.c.l.b16 %v2808
        %v4238 = vunpack.c.h.b16 %v2808
        %v4239 = vunpack.c.l.b16 %v2809
        %v4240 = vunpack.c.h.b16 %v2809
        %v4241 = vunpack.c.l.b16 %v2810
        %v4242 = vunpack.c.h.b16 %v2810
        %v4243 = vunpack.c.l.b16 %v2811
        %v4244 = vunpack.c.h.b16 %v2811
        %v4245 = vunpack.c.l.b16 %v2812
        %v4246 = vunpack.c.h.b16 %v2812
        %v4247 = vunpack.c.l.b16 %v2813
        %v4248 = vunpack.c.h.b16 %v2813
        %v4249 = vunpack.c.l.b16 %v2814
        %v4250 = vunpack.c.h.b16 %v2814
        %v4251 = vunpack.c.l.b16 %v2815
        %v4252 = vunpack.c.h.b16 %v2815
        %v4253 = vunpack.c.l.b16 %v2816
        %v4254 = vunpack.c.h.b16 %v2816
        %v4255 = vunpack.c.l.b16 %v2817
        %v4256 = vunpack.c.h.b16 %v2817
        %v4257 = vunpack.c.l.b16 %v2818
        %v4258 = vunpack.c.h.b16 %v2818
        %v4259 = vunpack.c.l.b16 %v2819
        %v4260 = vunpack.c.h.b16 %v2819
        %v4261 = vunpack.c.l.b16 %v2820
        %v4262 = vunpack.c.h.b16 %v2820
        %v4263 = vunpack.c.l.b16 %v2821
        %v4264 = vunpack.c.h.b16 %v2821
        %v4265 = vunpack.c.l.b16 %v2822
        %v4266 = vunpack.c.h.b16 %v2822
        %v4267 = vunpack.c.l.b16 %v2823
        %v4268 = vunpack.c.h.b16 %v2823
        %v4269 = vunpack.c.l.b16 %v2824
        %v4270 = vunpack.c.h.b16 %v2824
        %v4271 = vunpack.c.l.b16 %v2825
        %v4272 = vunpack.c.h.b16 %v2825
        %v4273 = vunpack.c.l.b16 %v2826
        %v4274 = vunpack.c.h.b16 %v2826
        %v4275 = vunpack.c.l.b16 %v2827
        %v4276 = vunpack.c.h.b16 %v2827
        %v4277 = vunpack.c.l.b16 %v2828
        %v4278 = vunpack.c.h.b16 %v2828
        %v4279 = vunpack.c.l.b16 %v2829
        %v4280 = vunpack.c.h.b16 %v2829
        %v4281 = vunpack.c.l.b16 %v2830
        %v4282 = vunpack.c.h.b16 %v2830
        %v4283 = vunpack.c.l.b16 %v2831
        %v4284 = vunpack.c.h.b16 %v2831
        %v4285 = vunpack.c.l.b16 %v2832
        %v4286 = vunpack.c.h.b16 %v2832
        %v4287 = vunpack.c.l.b16 %v2833
        %v4288 = vunpack.c.h.b16 %v2833
        %v4289 = vunpack.c.l.b16 %v2834
        %v4290 = vunpack.c.h.b16 %v2834
        %v4291 = vunpack.c.l.b16 %v2835
        %v4292 = vunpack.c.h.b16 %v2835
        %v4293 = vunpack.c.l.b16 %v2836
        %v4294 = vunpack.c.h.b16 %v2836
        %v4295 = vunpack.c.l.b16 %v2837
        %v4296 = vunpack.c.h.b16 %v2837
        %v4297 = vunpack.c.l.b16 %v2838
        %v4298 = vunpack.c.h.b16 %v2838
        %v4299 = vunpack.c.l.b16 %v2839
        %v4300 = vunpack.c.h.b16 %v2839
        %v4301 = vunpack.c.l.b16 %v2840
        %v4302 = vunpack.c.h.b16 %v2840
        %v4303 = vunpack.c.l.b16 %v2841
        %v4304 = vunpack.c.h.b16 %v2841
        %v4305 = vunpack.c.l.b16 %v2842
        %v4306 = vunpack.c.h.b16 %v2842
        %v4307 = vunpack.c.l.b16 %v2843
        %v4308 = vunpack.c.h.b16 %v2843
        %v4309 = vunpack.c.l.b16 %v2844
        %v4310 = vunpack.c.h.b16 %v2844
        %v4311 = vunpack.c.l.b16 %v2845
        %v4312 = vunpack.c.h.b16 %v2845
        %v4313 = vunpack.c.l.b16 %v2846
        %v4314 = vunpack.c.h.b16 %v2846
        %v4315 = vunpack.c.l.b16 %v2847
        %v4316 = vunpack.c.h.b16 %v2847
        %v4317 = vunpack.c.l.b16 %v2848
        %v4318 = vunpack.c.h.b16 %v2848
        %v4319 = vunpack.c.l.b16 %v2849
        %v4320 = vunpack.c.h.b16 %v2849
        %v4321 = vunpack.c.l.b16 %v2850
        %v4322 = vunpack.c.h.b16 %v2850
        %v4323 = vunpack.c.l.b16 %v2851
        %v4324 = vunpack.c.h.b16 %v2851
        %v4325 = vunpack.c.l.b16 %v2852
        %v4326 = vunpack.c.h.b16 %v2852
        %v4327 = vunpack.c.l.b16 %v2853
        %v4328 = vunpack.c.h.b16 %v2853
        %v4329 = vunpack.c.l.b16 %v2854
        %v4330 = vunpack.c.h.b16 %v2854
        %v4331 = vunpack.c.l.b16 %v2855
        %v4332 = vunpack.c.h.b16 %v2855
        %v4333 = vunpack.c.l.b16 %v2856
        %v4334 = vunpack.c.h.b16 %v2856
        %v4335 = vunpack.c.l.b16 %v2857
        %v4336 = vunpack.c.h.b16 %v2857
        %v4337 = vunpack.c.l.b16 %v2858
        %v4338 = vunpack.c.h.b16 %v2858
        %v4339 = vunpack.c.l.b16 %v2859
        %v4340 = vunpack.c.h.b16 %v2859
        %v4341 = vunpack.c.l.b16 %v2860
        %v4342 = vunpack.c.h.b16 %v2860
        %v4343 = vunpack.c.l.b16 %v2861
        %v4344 = vunpack.c.h.b16 %v2861
        %v4345 = vunpack.c.l.b16 %v2862
        %v4346 = vunpack.c.h.b16 %v2862
        %v4347 = vunpack.c.l.b16 %v2863
        %v4348 = vunpack.c.h.b16 %v2863
        %v4349 = vunpack.c.l.b16 %v2864
        %v4350 = vunpack.c.h.b16 %v2864
        %v4351 = vunpack.c.l.b16 %v2865
        %v4352 = vunpack.c.h.b16 %v2865
        %v4353 = vunpack.c.l.b16 %v2866
        %v4354 = vunpack.c.h.b16 %v2866
        %v4355 = vunpack.c.l.b16 %v2867
        %v4356 = vunpack.c.h.b16 %v2867
        %v4357 = vunpack.c.l.b16 %v2868
        %v4358 = vunpack.c.h.b16 %v2868
        %v4359 = vunpack.c.l.b16 %v2869
        %v4360 = vunpack.c.h.b16 %v2869
        %v4361 = vunpack.c.l.b16 %v2870
        %v4362 = vunpack.c.h.b16 %v2870
        %v4363 = vunpack.c.l.b16 %v2871
        %v4364 = vunpack.c.h.b16 %v2871
        %v4365 = vunpack.c.l.b16 %v2872
        %v4366 = vunpack.c.h.b16 %v2872
        %v4367 = vunpack.c.l.b16 %v2873
        %v4368 = vunpack.c.h.b16 %v2873
        %v4369 = vunpack.c.l.b16 %v2874
        %v4370 = vunpack.c.h.b16 %v2874
        %v4371 = vunpack.c.l.b16 %v2875
        %v4372 = vunpack.c.h.b16 %v2875
        %v4373 = vunpack.c.l.b16 %v2876
        %v4374 = vunpack.c.h.b16 %v2876
        %v4375 = vunpack.c.l.b16 %v2877
        %v4376 = vunpack.c.h.b16 %v2877
        %v4377 = vunpack.c.l.b16 %v2878
        %v4378 = vunpack.c.h.b16 %v2878
        %v4379 = vunpack.c.l.b16 %v2879
        %v4380 = vunpack.c.h.b16 %v2879
        %v4381 = vunpack.c.l.b16 %v2880
        %v4382 = vunpack.c.h.b16 %v2880
        %v4383 = vunpack.c.l.b16 %v2881
        %v4384 = vunpack.c.h.b16 %v2881
        %v4385 = vunpack.c.l.b16 %v2882
        %v4386 = vunpack.c.h.b16 %v2882
        %v4387 = vunpack.c.l.b16 %v2883
        %v4388 = vunpack.c.h.b16 %v2883
        %v4389 = vunpack.c.l.b16 %v2884
        %v4390 = vunpack.c.h.b16 %v2884
        %v4391 = vunpack.c.l.b16 %v2885
        %v4392 = vunpack.c.h.b16 %v2885
        %v4393 = vunpack.c.l.b16 %v2886
        %v4394 = vunpack.c.h.b16 %v2886
        %v4395 = vunpack.c.l.b16 %v2887
        %v4396 = vunpack.c.h.b16 %v2887
        %v4397 = vunpack.c.l.b16 %v2888
        %v4398 = vunpack.c.h.b16 %v2888
        %v4399 = vunpack.c.l.b16 %v2889
        %v4400 = vunpack.c.h.b16 %v2889
        %v4401 = vunpack.c.l.b16 %v2890
        %v4402 = vunpack.c.h.b16 %v2890
        %v4403 = vunpack.c.l.b16 %v2891
        %v4404 = vunpack.c.h.b16 %v2891
        %v4405 = vunpack.c.l.b16 %v2892
        %v4406 = vunpack.c.h.b16 %v2892
        %v4407 = vunpack.c.l.b16 %v2893
        %v4408 = vunpack.c.h.b16 %v2893
        %v4409 = vunpack.c.l.b16 %v2894
        %v4410 = vunpack.c.h.b16 %v2894
        %v4411 = vunpack.c.l.b16 %v2895
        %v4412 = vunpack.c.h.b16 %v2895
        %v4413 = vunpack.c.l.b16 %v2896
        %v4414 = vunpack.c.h.b16 %v2896
        %v4415 = vunpack.c.l.b16 %v2897
        %v4416 = vunpack.c.h.b16 %v2897
        %v4417 = vunpack.c.l.b16 %v2898
        %v4418 = vunpack.c.h.b16 %v2898
        %v4419 = vunpack.c.l.b16 %v2899
        %v4420 = vunpack.c.h.b16 %v2899
        %v4421 = vunpack.c.l.b16 %v2900
        %v4422 = vunpack.c.h.b16 %v2900
        %v4423 = vunpack.c.l.b16 %v2901
        %v4424 = vunpack.c.h.b16 %v2901
        %v4425 = vunpack.c.l.b16 %v2902
        %v4426 = vunpack.c.h.b16 %v2902
        %v4427 = vunpack.c.l.b16 %v2903
        %v4428 = vunpack.c.h.b16 %v2903
        %v4429 = vunpack.c.l.b16 %v2904
        %v4430 = vunpack.c.h.b16 %v2904
        %v4431 = vunpack.c.l.b16 %v2905
        %v4432 = vunpack.c.h.b16 %v2905
        %v4433 = vunpack.c.l.b16 %v2906
        %v4434 = vunpack.c.h.b16 %v2906
        %v4435 = vunpack.c.l.b16 %v2907
        %v4436 = vunpack.c.h.b16 %v2907
        %v4437 = vunpack.c.l.b16 %v2908
        %v4438 = vunpack.c.h.b16 %v2908
        %v4439 = vunpack.c.l.b16 %v2909
        %v4440 = vunpack.c.h.b16 %v2909
        %v4441 = vunpack.c.l.b16 %v2910
        %v4442 = vunpack.c.h.b16 %v2910
        %v4443 = vunpack.c.l.b16 %v2911
        %v4444 = vunpack.c.h.b16 %v2911
        %v4445 = vunpack.c.l.b16 %v2912
        %v4446 = vunpack.c.h.b16 %v2912
        %v4447 = vunpack.c.l.b16 %v2913
        %v4448 = vunpack.c.h.b16 %v2913
        %v4449 = vunpack.c.l.b16 %v2914
        %v4450 = vunpack.c.h.b16 %v2914
        %v4451 = vunpack.c.l.b16 %v2915
        %v4452 = vunpack.c.h.b16 %v2915
        %v4453 = vunpack.c.l.b16 %v2916
        %v4454 = vunpack.c.h.b16 %v2916
        %v4455 = vunpack.c.l.b16 %v2917
        %v4456 = vunpack.c.h.b16 %v2917
        %v4457 = vunpack.c.l.b16 %v2918
        %v4458 = vunpack.c.h.b16 %v2918
        %v4459 = vunpack.c.l.b16 %v2919
        %v4460 = vunpack.c.h.b16 %v2919
        %v4461 = vunpack.c.l.b16 %v2920
        %v4462 = vunpack.c.h.b16 %v2920
        %v4463 = vunpack.c.l.b16 %v2921
        %v4464 = vunpack.c.h.b16 %v2921
        %v4465 = vunpack.c.l.b16 %v2922
        %v4466 = vunpack.c.h.b16 %v2922
        %v4467 = vunpack.c.l.b16 %v2923
        %v4468 = vunpack.c.h.b16 %v2923
        %v4469 = vunpack.c.l.b16 %v2924
        %v4470 = vunpack.c.h.b16 %v2924
        %v4471 = vunpack.c.l.b16 %v2925
        %v4472 = vunpack.c.h.b16 %v2925
        %v4473 = vunpack.c.l.b16 %v2926
        %v4474 = vunpack.c.h.b16 %v2926
        %v4475 = vunpack.c.l.b16 %v2927
        %v4476 = vunpack.c.h.b16 %v2927
        %v4477 = vunpack.c.l.b16 %v2928
        %v4478 = vunpack.c.h.b16 %v2928
        %v4479 = vunpack.c.l.b16 %v2929
        %v4480 = vunpack.c.h.b16 %v2929
        %v4481 = vunpack.c.l.b16 %v2930
        %v4482 = vunpack.c.h.b16 %v2930
        %v4483 = vunpack.c.l.b16 %v2931
        %v4484 = vunpack.c.h.b16 %v2931
        %v4485 = vunpack.c.l.b16 %v2932
        %v4486 = vunpack.c.h.b16 %v2932
        %v4487 = vunpack.c.l.b16 %v2933
        %v4488 = vunpack.c.h.b16 %v2933
        %v4489 = vunpack.c.l.b16 %v2934
        %v4490 = vunpack.c.h.b16 %v2934
        %v4491 = vunpack.c.l.b16 %v2935
        %v4492 = vunpack.c.h.b16 %v2935
        %v4493 = vunpack.c.l.b16 %v2936
        %v4494 = vunpack.c.h.b16 %v2936
        %v4495 = vpack.c.b16 %v3475, %v3471
        %v4496 = vpack.c.b16 %v3476, %v3472
        %v4497 = vpack.c.b16 %v3477, %v3473
        %v4498 = vpack.c.b16 %v3478, %v3474
        %v4499 = vpack.c.b16 %v3483, %v3479
        %v4500 = vpack.c.b16 %v3484, %v3480
        %v4501 = vpack.c.b16 %v3485, %v3481
        %v4502 = vpack.c.b16 %v3486, %v3482
        %v4503 = vpack.c.b16 %v3491, %v3487
        %v4504 = vpack.c.b16 %v3492, %v3488
        %v4505 = vpack.c.b16 %v3493, %v3489
        %v4506 = vpack.c.b16 %v3494, %v3490
        %v4507 = vpack.c.b16 %v3499, %v3495
        %v4508 = vpack.c.b16 %v3500, %v3496
        %v4509 = vpack.c.b16 %v3501, %v3497
        %v4510 = vpack.c.b16 %v3502, %v3498
        %v4511 = vpack.c.b16 %v3507, %v3503
        %v4512 = vpack.c.b16 %v3508, %v3504
        %v4513 = vpack.c.b16 %v3509, %v3505
        %v4514 = vpack.c.b16 %v3510, %v3506
        %v4515 = vpack.c.b16 %v3515, %v3511
        %v4516 = vpack.c.b16 %v3516, %v3512
        %v4517 = vpack.c.b16 %v3517, %v3513
        %v4518 = vpack.c.b16 %v3518, %v3514
        %v4519 = vpack.c.b16 %v3523, %v3519
        %v4520 = vpack.c.b16 %v3524, %v3520
        %v4521 = vpack.c.b16 %v3525, %v3521
        %v4522 = vpack.c.b16 %v3526, %v3522
        %v4523 = vpack.c.b16 %v3531, %v3527
        %v4524 = vpack.c.b16 %v3532, %v3528
        %v4525 = vpack.c.b16 %v3533, %v3529
        %v4526 = vpack.c.b16 %v3534, %v3530
        %v4527 = vpack.c.b16 %v3539, %v3535
        %v4528 = vpack.c.b16 %v3540, %v3536
        %v4529 = vpack.c.b16 %v3541, %v3537
        %v4530 = vpack.c.b16 %v3542, %v3538
        %v4531 = vpack.c.b16 %v3547, %v3543
        %v4532 = vpack.c.b16 %v3548, %v3544
        %v4533 = vpack.c.b16 %v3549, %v3545
        %v4534 = vpack.c.b16 %v3550, %v3546
        %v4535 = vpack.c.b16 %v3555, %v3551
        %v4536 = vpack.c.b16 %v3556, %v3552
        %v4537 = vpack.c.b16 %v3557, %v3553
        %v4538 = vpack.c.b16 %v3558, %v3554
        %v4539 = vpack.c.b16 %v3563, %v3559
        %v4540 = vpack.c.b16 %v3564, %v3560
        %v4541 = vpack.c.b16 %v3565, %v3561
        %v4542 = vpack.c.b16 %v3566, %v3562
        %v4543 = vpack.c.b16 %v3571, %v3567
        %v4544 = vpack.c.b16 %v3572, %v3568
        %v4545 = vpack.c.b16 %v3573, %v3569
        %v4546 = vpack.c.b16 %v3574, %v3570
        %v4547 = vpack.c.b16 %v3579, %v3575
        %v4548 = vpack.c.b16 %v3580, %v3576
        %v4549 = vpack.c.b16 %v3581, %v3577
        %v4550 = vpack.c.b16 %v3582, %v3578
        %v4551 = vpack.c.b16 %v3587, %v3583
        %v4552 = vpack.c.b16 %v3588, %v3584
        %v4553 = vpack.c.b16 %v3589, %v3585
        %v4554 = vpack.c.b16 %v3590, %v3586
        %v4555 = vpack.c.b16 %v3595, %v3591
        %v4556 = vpack.c.b16 %v3596, %v3592
        %v4557 = vpack.c.b16 %v3597, %v3593
        %v4558 = vpack.c.b16 %v3598, %v3594
        %v4559 = vpack.c.b16 %v3603, %v3599
        %v4560 = vpack.c.b16 %v3604, %v3600
        %v4561 = vpack.c.b16 %v3605, %v3601
        %v4562 = vpack.c.b16 %v3606, %v3602
        %v4563 = vpack.c.b16 %v3611, %v3607
        %v4564 = vpack.c.b16 %v3612, %v3608
        %v4565 = vpack.c.b16 %v3613, %v3609
        %v4566 = vpack.c.b16 %v3614, %v3610
        %v4567 = vpack.c.b16 %v3619, %v3615
        %v4568 = vpack.c.b16 %v3620, %v3616
        %v4569 = vpack.c.b16 %v3621, %v3617
        %v4570 = vpack.c.b16 %v3622, %v3618
        %v4571 = vpack.c.b16 %v3627, %v3623
        %v4572 = vpack.c.b16 %v3628, %v3624
        %v4573 = vpack.c.b16 %v3629, %v3625
        %v4574 = vpack.c.b16 %v3630, %v3626
        %v4575 = vpack.c.b16 %v3635, %v3631
        %v4576 = vpack.c.b16 %v3636, %v3632
        %v4577 = vpack.c.b16 %v3637, %v3633
        %v4578 = vpack.c.b16 %v3638, %v3634
        %v4579 = vpack.c.b16 %v3643, %v3639
        %v4580 = vpack.c.b16 %v3644, %v3640
        %v4581 = vpack.c.b16 %v3645, %v3641
        %v4582 = vpack.c.b16 %v3646, %v3642
        %v4583 = vpack.c.b16 %v3651, %v3647
        %v4584 = vpack.c.b16 %v3652, %v3648
        %v4585 = vpack.c.b16 %v3653, %v3649
        %v4586 = vpack.c.b16 %v3654, %v3650
        %v4587 = vpack.c.b16 %v3659, %v3655
        %v4588 = vpack.c.b16 %v3660, %v3656
        %v4589 = vpack.c.b16 %v3661, %v3657
        %v4590 = vpack.c.b16 %v3662, %v3658
        %v4591 = vpack.c.b16 %v3667, %v3663
        %v4592 = vpack.c.b16 %v3668, %v3664
        %v4593 = vpack.c.b16 %v3669, %v3665
        %v4594 = vpack.c.b16 %v3670, %v3666
        %v4595 = vpack.c.b16 %v3675, %v3671
        %v4596 = vpack.c.b16 %v3676, %v3672
        %v4597 = vpack.c.b16 %v3677, %v3673
        %v4598 = vpack.c.b16 %v3678, %v3674
        %v4599 = vpack.c.b16 %v3683, %v3679
        %v4600 = vpack.c.b16 %v3684, %v3680
        %v4601 = vpack.c.b16 %v3685, %v3681
        %v4602 = vpack.c.b16 %v3686, %v3682
        %v4603 = vpack.c.b16 %v3691, %v3687
        %v4604 = vpack.c.b16 %v3692, %v3688
        %v4605 = vpack.c.b16 %v3693, %v3689
        %v4606 = vpack.c.b16 %v3694, %v3690
        %v4607 = vpack.c.b16 %v3699, %v3695
        %v4608 = vpack.c.b16 %v3700, %v3696
        %v4609 = vpack.c.b16 %v3701, %v3697
        %v4610 = vpack.c.b16 %v3702, %v3698
        %v4611 = vpack.c.b16 %v3707, %v3703
        %v4612 = vpack.c.b16 %v3708, %v3704
        %v4613 = vpack.c.b16 %v3709, %v3705
        %v4614 = vpack.c.b16 %v3710, %v3706
        %v4615 = vpack.c.b16 %v3715, %v3711
        %v4616 = vpack.c.b16 %v3716, %v3712
        %v4617 = vpack.c.b16 %v3717, %v3713
        %v4618 = vpack.c.b16 %v3718, %v3714
        %v4619 = vpack.c.b16 %v3723, %v3719
        %v4620 = vpack.c.b16 %v3724, %v3720
        %v4621 = vpack.c.b16 %v3725, %v3721
        %v4622 = vpack.c.b16 %v3726, %v3722
        %v4623 = vpack.c.b16 %v3731, %v3727
        %v4624 = vpack.c.b16 %v3732, %v3728
        %v4625 = vpack.c.b16 %v3733, %v3729
        %v4626 = vpack.c.b16 %v3734, %v3730
        %v4627 = vpack.c.b16 %v3739, %v3735
        %v4628 = vpack.c.b16 %v3740, %v3736
        %v4629 = vpack.c.b16 %v3741, %v3737
        %v4630 = vpack.c.b16 %v3742, %v3738
        %v4631 = vpack.c.b16 %v3747, %v3743
        %v4632 = vpack.c.b16 %v3748, %v3744
        %v4633 = vpack.c.b16 %v3749, %v3745
        %v4634 = vpack.c.b16 %v3750, %v3746
        %v4635 = vpack.c.b16 %v3755, %v3751
        %v4636 = vpack.c.b16 %v3756, %v3752
        %v4637 = vpack.c.b16 %v3757, %v3753
        %v4638 = vpack.c.b16 %v3758, %v3754
        %v4639 = vpack.c.b16 %v3763, %v3759
        %v4640 = vpack.c.b16 %v3764, %v3760
        %v4641 = vpack.c.b16 %v3765, %v3761
        %v4642 = vpack.c.b16 %v3766, %v3762
        %v4643 = vpack.c.b16 %v3771, %v3767
        %v4644 = vpack.c.b16 %v3772, %v3768
        %v4645 = vpack.c.b16 %v3773, %v3769
        %v4646 = vpack.c.b16 %v3774, %v3770
        %v4647 = vpack.c.b16 %v3779, %v3775
        %v4648 = vpack.c.b16 %v3780, %v3776
        %v4649 = vpack.c.b16 %v3781, %v3777
        %v4650 = vpack.c.b16 %v3782, %v3778
        %v4651 = vpack.c.b16 %v3787, %v3783
        %v4652 = vpack.c.b16 %v3788, %v3784
        %v4653 = vpack.c.b16 %v3789, %v3785
        %v4654 = vpack.c.b16 %v3790, %v3786
        %v4655 = vpack.c.b16 %v3795, %v3791
        %v4656 = vpack.c.b16 %v3796, %v3792
        %v4657 = vpack.c.b16 %v3797, %v3793
        %v4658 = vpack.c.b16 %v3798, %v3794
        %v4659 = vpack.c.b16 %v3803, %v3799
        %v4660 = vpack.c.b16 %v3804, %v3800
        %v4661 = vpack.c.b16 %v3805, %v3801
        %v4662 = vpack.c.b16 %v3806, %v3802
        %v4663 = vpack.c.b16 %v3811, %v3807
        %v4664 = vpack.c.b16 %v3812, %v3808
        %v4665 = vpack.c.b16 %v3813, %v3809
        %v4666 = vpack.c.b16 %v3814, %v3810
        %v4667 = vpack.c.b16 %v3819, %v3815
        %v4668 = vpack.c.b16 %v3820, %v3816
        %v4669 = vpack.c.b16 %v3821, %v3817
        %v4670 = vpack.c.b16 %v3822, %v3818
        %v4671 = vpack.c.b16 %v3827, %v3823
        %v4672 = vpack.c.b16 %v3828, %v3824
        %v4673 = vpack.c.b16 %v3829, %v3825
        %v4674 = vpack.c.b16 %v3830, %v3826
        %v4675 = vpack.c.b16 %v3835, %v3831
        %v4676 = vpack.c.b16 %v3836, %v3832
        %v4677 = vpack.c.b16 %v3837, %v3833
        %v4678 = vpack.c.b16 %v3838, %v3834
        %v4679 = vpack.c.b16 %v3843, %v3839
        %v4680 = vpack.c.b16 %v3844, %v3840
        %v4681 = vpack.c.b16 %v3845, %v3841
        %v4682 = vpack.c.b16 %v3846, %v3842
        %v4683 = vpack.c.b16 %v3851, %v3847
        %v4684 = vpack.c.b16 %v3852, %v3848
        %v4685 = vpack.c.b16 %v3853, %v3849
        %v4686 = vpack.c.b16 %v3854, %v3850
        %v4687 = vpack.c.b16 %v3859, %v3855
        %v4688 = vpack.c.b16 %v3860, %v3856
        %v4689 = vpack.c.b16 %v3861, %v3857
        %v4690 = vpack.c.b16 %v3862, %v3858
        %v4691 = vpack.c.b16 %v3867, %v3863
        %v4692 = vpack.c.b16 %v3868, %v3864
        %v4693 = vpack.c.b16 %v3869, %v3865
        %v4694 = vpack.c.b16 %v3870, %v3866
        %v4695 = vpack.c.b16 %v3875, %v3871
        %v4696 = vpack.c.b16 %v3876, %v3872
        %v4697 = vpack.c.b16 %v3877, %v3873
        %v4698 = vpack.c.b16 %v3878, %v3874
        %v4699 = vpack.c.b16 %v3883, %v3879
        %v4700 = vpack.c.b16 %v3884, %v3880
        %v4701 = vpack.c.b16 %v3885, %v3881
        %v4702 = vpack.c.b16 %v3886, %v3882
        %v4703 = vpack.c.b16 %v3891, %v3887
        %v4704 = vpack.c.b16 %v3892, %v3888
        %v4705 = vpack.c.b16 %v3893, %v3889
        %v4706 = vpack.c.b16 %v3894, %v3890
        %v4707 = vpack.c.b16 %v3899, %v3895
        %v4708 = vpack.c.b16 %v3900, %v3896
        %v4709 = vpack.c.b16 %v3901, %v3897
        %v4710 = vpack.c.b16 %v3902, %v3898
        %v4711 = vpack.c.b16 %v3907, %v3903
        %v4712 = vpack.c.b16 %v3908, %v3904
        %v4713 = vpack.c.b16 %v3909, %v3905
        %v4714 = vpack.c.b16 %v3910, %v3906
        %v4715 = vpack.c.b16 %v3915, %v3911
        %v4716 = vpack.c.b16 %v3916, %v3912
        %v4717 = vpack.c.b16 %v3917, %v3913
        %v4718 = vpack.c.b16 %v3918, %v3914
        %v4719 = vpack.c.b16 %v3923, %v3919
        %v4720 = vpack.c.b16 %v3924, %v3920
        %v4721 = vpack.c.b16 %v3925, %v3921
        %v4722 = vpack.c.b16 %v3926, %v3922
        %v4723 = vpack.c.b16 %v3931, %v3927
        %v4724 = vpack.c.b16 %v3932, %v3928
        %v4725 = vpack.c.b16 %v3933, %v3929
        %v4726 = vpack.c.b16 %v3934, %v3930
        %v4727 = vpack.c.b16 %v3939, %v3935
        %v4728 = vpack.c.b16 %v3940, %v3936
        %v4729 = vpack.c.b16 %v3941, %v3937
        %v4730 = vpack.c.b16 %v3942, %v3938
        %v4731 = vpack.c.b16 %v3947, %v3943
        %v4732 = vpack.c.b16 %v3948, %v3944
        %v4733 = vpack.c.b16 %v3949, %v3945
        %v4734 = vpack.c.b16 %v3950, %v3946
        %v4735 = vpack.c.b16 %v3955, %v3951
        %v4736 = vpack.c.b16 %v3956, %v3952
        %v4737 = vpack.c.b16 %v3957, %v3953
        %v4738 = vpack.c.b16 %v3958, %v3954
        %v4739 = vpack.c.b16 %v3963, %v3959
        %v4740 = vpack.c.b16 %v3964, %v3960
        %v4741 = vpack.c.b16 %v3965, %v3961
        %v4742 = vpack.c.b16 %v3966, %v3962
        %v4743 = vpack.c.b16 %v3971, %v3967
        %v4744 = vpack.c.b16 %v3972, %v3968
        %v4745 = vpack.c.b16 %v3973, %v3969
        %v4746 = vpack.c.b16 %v3974, %v3970
        %v4747 = vpack.c.b16 %v3979, %v3975
        %v4748 = vpack.c.b16 %v3980, %v3976
        %v4749 = vpack.c.b16 %v3981, %v3977
        %v4750 = vpack.c.b16 %v3982, %v3978
        %v4751 = vpack.c.b16 %v3987, %v3983
        %v4752 = vpack.c.b16 %v3988, %v3984
        %v4753 = vpack.c.b16 %v3989, %v3985
        %v4754 = vpack.c.b16 %v3990, %v3986
        %v4755 = vpack.c.b16 %v3995, %v3991
        %v4756 = vpack.c.b16 %v3996, %v3992
        %v4757 = vpack.c.b16 %v3997, %v3993
        %v4758 = vpack.c.b16 %v3998, %v3994
        %v4759 = vpack.c.b16 %v4003, %v3999
        %v4760 = vpack.c.b16 %v4004, %v4000
        %v4761 = vpack.c.b16 %v4005, %v4001
        %v4762 = vpack.c.b16 %v4006, %v4002
        %v4763 = vpack.c.b16 %v4011, %v4007
        %v4764 = vpack.c.b16 %v4012, %v4008
        %v4765 = vpack.c.b16 %v4013, %v4009
        %v4766 = vpack.c.b16 %v4014, %v4010
        %v4767 = vpack.c.b16 %v4019, %v4015
        %v4768 = vpack.c.b16 %v4020, %v4016
        %v4769 = vpack.c.b16 %v4021, %v4017
        %v4770 = vpack.c.b16 %v4022, %v4018
        %v4771 = vpack.c.b16 %v4027, %v4023
        %v4772 = vpack.c.b16 %v4028, %v4024
        %v4773 = vpack.c.b16 %v4029, %v4025
        %v4774 = vpack.c.b16 %v4030, %v4026
        %v4775 = vpack.c.b16 %v4035, %v4031
        %v4776 = vpack.c.b16 %v4036, %v4032
        %v4777 = vpack.c.b16 %v4037, %v4033
        %v4778 = vpack.c.b16 %v4038, %v4034
        %v4779 = vpack.c.b16 %v4043, %v4039
        %v4780 = vpack.c.b16 %v4044, %v4040
        %v4781 = vpack.c.b16 %v4045, %v4041
        %v4782 = vpack.c.b16 %v4046, %v4042
        %v4783 = vpack.c.b16 %v4051, %v4047
        %v4784 = vpack.c.b16 %v4052, %v4048
        %v4785 = vpack.c.b16 %v4053, %v4049
        %v4786 = vpack.c.b16 %v4054, %v4050
        %v4787 = vpack.c.b16 %v4059, %v4055
        %v4788 = vpack.c.b16 %v4060, %v4056
        %v4789 = vpack.c.b16 %v4061, %v4057
        %v4790 = vpack.c.b16 %v4062, %v4058
        %v4791 = vpack.c.b16 %v4067, %v4063
        %v4792 = vpack.c.b16 %v4068, %v4064
        %v4793 = vpack.c.b16 %v4069, %v4065
        %v4794 = vpack.c.b16 %v4070, %v4066
        %v4795 = vpack.c.b16 %v4075, %v4071
        %v4796 = vpack.c.b16 %v4076, %v4072
        %v4797 = vpack.c.b16 %v4077, %v4073
        %v4798 = vpack.c.b16 %v4078, %v4074
        %v4799 = vpack.c.b16 %v4083, %v4079
        %v4800 = vpack.c.b16 %v4084, %v4080
        %v4801 = vpack.c.b16 %v4085, %v4081
        %v4802 = vpack.c.b16 %v4086, %v4082
        %v4803 = vpack.c.b16 %v4091, %v4087
        %v4804 = vpack.c.b16 %v4092, %v4088
        %v4805 = vpack.c.b16 %v4093, %v4089
        %v4806 = vpack.c.b16 %v4094, %v4090
        %v4807 = vpack.c.b16 %v4099, %v4095
        %v4808 = vpack.c.b16 %v4100, %v4096
        %v4809 = vpack.c.b16 %v4101, %v4097
        %v4810 = vpack.c.b16 %v4102, %v4098
        %v4811 = vpack.c.b16 %v4107, %v4103
        %v4812 = vpack.c.b16 %v4108, %v4104
        %v4813 = vpack.c.b16 %v4109, %v4105
        %v4814 = vpack.c.b16 %v4110, %v4106
        %v4815 = vpack.c.b16 %v4115, %v4111
        %v4816 = vpack.c.b16 %v4116, %v4112
        %v4817 = vpack.c.b16 %v4117, %v4113
        %v4818 = vpack.c.b16 %v4118, %v4114
        %v4819 = vpack.c.b16 %v4123, %v4119
        %v4820 = vpack.c.b16 %v4124, %v4120
        %v4821 = vpack.c.b16 %v4125, %v4121
        %v4822 = vpack.c.b16 %v4126, %v4122
        %v4823 = vpack.c.b16 %v4131, %v4127
        %v4824 = vpack.c.b16 %v4132, %v4128
        %v4825 = vpack.c.b16 %v4133, %v4129
        %v4826 = vpack.c.b16 %v4134, %v4130
        %v4827 = vpack.c.b16 %v4139, %v4135
        %v4828 = vpack.c.b16 %v4140, %v4136
        %v4829 = vpack.c.b16 %v4141, %v4137
        %v4830 = vpack.c.b16 %v4142, %v4138
        %v4831 = vpack.c.b16 %v4147, %v4143
        %v4832 = vpack.c.b16 %v4148, %v4144
        %v4833 = vpack.c.b16 %v4149, %v4145
        %v4834 = vpack.c.b16 %v4150, %v4146
        %v4835 = vpack.c.b16 %v4155, %v4151
        %v4836 = vpack.c.b16 %v4156, %v4152
        %v4837 = vpack.c.b16 %v4157, %v4153
        %v4838 = vpack.c.b16 %v4158, %v4154
        %v4839 = vpack.c.b16 %v4163, %v4159
        %v4840 = vpack.c.b16 %v4164, %v4160
        %v4841 = vpack.c.b16 %v4165, %v4161
        %v4842 = vpack.c.b16 %v4166, %v4162
        %v4843 = vpack.c.b16 %v4171, %v4167
        %v4844 = vpack.c.b16 %v4172, %v4168
        %v4845 = vpack.c.b16 %v4173, %v4169
        %v4846 = vpack.c.b16 %v4174, %v4170
        %v4847 = vpack.c.b16 %v4179, %v4175
        %v4848 = vpack.c.b16 %v4180, %v4176
        %v4849 = vpack.c.b16 %v4181, %v4177
        %v4850 = vpack.c.b16 %v4182, %v4178
        %v4851 = vpack.c.b16 %v4187, %v4183
        %v4852 = vpack.c.b16 %v4188, %v4184
        %v4853 = vpack.c.b16 %v4189, %v4185
        %v4854 = vpack.c.b16 %v4190, %v4186
        %v4855 = vpack.c.b16 %v4195, %v4191
        %v4856 = vpack.c.b16 %v4196, %v4192
        %v4857 = vpack.c.b16 %v4197, %v4193
        %v4858 = vpack.c.b16 %v4198, %v4194
        %v4859 = vpack.c.b16 %v4203, %v4199
        %v4860 = vpack.c.b16 %v4204, %v4200
        %v4861 = vpack.c.b16 %v4205, %v4201
        %v4862 = vpack.c.b16 %v4206, %v4202
        %v4863 = vpack.c.b16 %v4211, %v4207
        %v4864 = vpack.c.b16 %v4212, %v4208
        %v4865 = vpack.c.b16 %v4213, %v4209
        %v4866 = vpack.c.b16 %v4214, %v4210
        %v4867 = vpack.c.b16 %v4219, %v4215
        %v4868 = vpack.c.b16 %v4220, %v4216
        %v4869 = vpack.c.b16 %v4221, %v4217
        %v4870 = vpack.c.b16 %v4222, %v4218
        %v4871 = vpack.c.b16 %v4227, %v4223
        %v4872 = vpack.c.b16 %v4228, %v4224
        %v4873 = vpack.c.b16 %v4229, %v4225
        %v4874 = vpack.c.b16 %v4230, %v4226
        %v4875 = vpack.c.b16 %v4235, %v4231
        %v4876 = vpack.c.b16 %v4236, %v4232
        %v4877 = vpack.c.b16 %v4237, %v4233
        %v4878 = vpack.c.b16 %v4238, %v4234
        %v4879 = vpack.c.b16 %v4243, %v4239
        %v4880 = vpack.c.b16 %v4244, %v4240
        %v4881 = vpack.c.b16 %v4245, %v4241
        %v4882 = vpack.c.b16 %v4246, %v4242
        %v4883 = vpack.c.b16 %v4251, %v4247
        %v4884 = vpack.c.b16 %v4252, %v4248
        %v4885 = vpack.c.b16 %v4253, %v4249
        %v4886 = vpack.c.b16 %v4254, %v4250
        %v4887 = vpack.c.b16 %v4259, %v4255
        %v4888 = vpack.c.b16 %v4260, %v4256
        %v4889 = vpack.c.b16 %v4261, %v4257
        %v4890 = vpack.c.b16 %v4262, %v4258
        %v4891 = vpack.c.b16 %v4267, %v4263
        %v4892 = vpack.c.b16 %v4268, %v4264
        %v4893 = vpack.c.b16 %v4269, %v4265
        %v4894 = vpack.c.b16 %v4270, %v4266
        %v4895 = vpack.c.b16 %v4275, %v4271
        %v4896 = vpack.c.b16 %v4276, %v4272
        %v4897 = vpack.c.b16 %v4277, %v4273
        %v4898 = vpack.c.b16 %v4278, %v4274
        %v4899 = vpack.c.b16 %v4283, %v4279
        %v4900 = vpack.c.b16 %v4284, %v4280
        %v4901 = vpack.c.b16 %v4285, %v4281
        %v4902 = vpack.c.b16 %v4286, %v4282
        %v4903 = vpack.c.b16 %v4291, %v4287
        %v4904 = vpack.c.b16 %v4292, %v4288
        %v4905 = vpack.c.b16 %v4293, %v4289
        %v4906 = vpack.c.b16 %v4294, %v4290
        %v4907 = vpack.c.b16 %v4299, %v4295
        %v4908 = vpack.c.b16 %v4300, %v4296
        %v4909 = vpack.c.b16 %v4301, %v4297
        %v4910 = vpack.c.b16 %v4302, %v4298
        %v4911 = vpack.c.b16 %v4307, %v4303
        %v4912 = vpack.c.b16 %v4308, %v4304
        %v4913 = vpack.c.b16 %v4309, %v4305
        %v4914 = vpack.c.b16 %v4310, %v4306
        %v4915 = vpack.c.b16 %v4315, %v4311
        %v4916 = vpack.c.b16 %v4316, %v4312
        %v4917 = vpack.c.b16 %v4317, %v4313
        %v4918 = vpack.c.b16 %v4318, %v4314
        %v4919 = vpack.c.b16 %v4323, %v4319
        %v4920 = vpack.c.b16 %v4324, %v4320
        %v4921 = vpack.c.b16 %v4325, %v4321
        %v4922 = vpack.c.b16 %v4326, %v4322
        %v4923 = vpack.c.b16 %v4331, %v4327
        %v4924 = vpack.c.b16 %v4332, %v4328
        %v4925 = vpack.c.b16 %v4333, %v4329
        %v4926 = vpack.c.b16 %v4334, %v4330
        %v4927 = vpack.c.b16 %v4339, %v4335
        %v4928 = vpack.c.b16 %v4340, %v4336
        %v4929 = vpack.c.b16 %v4341, %v4337
        %v4930 = vpack.c.b16 %v4342, %v4338
        %v4931 = vpack.c.b16 %v4347, %v4343
        %v4932 = vpack.c.b16 %v4348, %v4344
        %v4933 = vpack.c.b16 %v4349, %v4345
        %v4934 = vpack.c.b16 %v4350, %v4346
        %v4935 = vpack.c.b16 %v4355, %v4351
        %v4936 = vpack.c.b16 %v4356, %v4352
        %v4937 = vpack.c.b16 %v4357, %v4353
        %v4938 = vpack.c.b16 %v4358, %v4354
        %v4939 = vpack.c.b16 %v4363, %v4359
        %v4940 = vpack.c.b16 %v4364, %v4360
        %v4941 = vpack.c.b16 %v4365, %v4361
        %v4942 = vpack.c.b16 %v4366, %v4362
        %v4943 = vpack.c.b16 %v4371, %v4367
        %v4944 = vpack.c.b16 %v4372, %v4368
        %v4945 = vpack.c.b16 %v4373, %v4369
        %v4946 = vpack.c.b16 %v4374, %v4370
        %v4947 = vpack.c.b16 %v4379, %v4375
        %v4948 = vpack.c.b16 %v4380, %v4376
        %v4949 = vpack.c.b16 %v4381, %v4377
        %v4950 = vpack.c.b16 %v4382, %v4378
        %v4951 = vpack.c.b16 %v4387, %v4383
        %v4952 = vpack.c.b16 %v4388, %v4384
        %v4953 = vpack.c.b16 %v4389, %v4385
        %v4954 = vpack.c.b16 %v4390, %v4386
        %v4955 = vpack.c.b16 %v4395, %v4391
        %v4956 = vpack.c.b16 %v4396, %v4392
        %v4957 = vpack.c.b16 %v4397, %v4393
        %v4958 = vpack.c.b16 %v4398, %v4394
        %v4959 = vpack.c.b16 %v4403, %v4399
        %v4960 = vpack.c.b16 %v4404, %v4400
        %v4961 = vpack.c.b16 %v4405, %v4401
        %v4962 = vpack.c.b16 %v4406, %v4402
        %v4963 = vpack.c.b16 %v4411, %v4407
        %v4964 = vpack.c.b16 %v4412, %v4408
        %v4965 = vpack.c.b16 %v4413, %v4409
        %v4966 = vpack.c.b16 %v4414, %v4410
        %v4967 = vpack.c.b16 %v4419, %v4415
        %v4968 = vpack.c.b16 %v4420, %v4416
        %v4969 = vpack.c.b16 %v4421, %v4417
        %v4970 = vpack.c.b16 %v4422, %v4418
        %v4971 = vpack.c.b16 %v4427, %v4423
        %v4972 = vpack.c.b16 %v4428, %v4424
        %v4973 = vpack.c.b16 %v4429, %v4425
        %v4974 = vpack.c.b16 %v4430, %v4426
        %v4975 = vpack.c.b16 %v4435, %v4431
        %v4976 = vpack.c.b16 %v4436, %v4432
        %v4977 = vpack.c.b16 %v4437, %v4433
        %v4978 = vpack.c.b16 %v4438, %v4434
        %v4979 = vpack.c.b16 %v4443, %v4439
        %v4980 = vpack.c.b16 %v4444, %v4440
        %v4981 = vpack.c.b16 %v4445, %v4441
        %v4982 = vpack.c.b16 %v4446, %v4442
        %v4983 = vpack.c.b16 %v4451, %v4447
        %v4984 = vpack.c.b16 %v4452, %v4448
        %v4985 = vpack.c.b16 %v4453, %v4449
        %v4986 = vpack.c.b16 %v4454, %v4450
        %v4987 = vpack.c.b16 %v4459, %v4455
        %v4988 = vpack.c.b16 %v4460, %v4456
        %v4989 = vpack.c.b16 %v4461, %v4457
        %v4990 = vpack.c.b16 %v4462, %v4458
        %v4991 = vpack.c.b16 %v4467, %v4463
        %v4992 = vpack.c.b16 %v4468, %v4464
        %v4993 = vpack.c.b16 %v4469, %v4465
        %v4994 = vpack.c.b16 %v4470, %v4466
        %v4995 = vpack.c.b16 %v4475, %v4471
        %v4996 = vpack.c.b16 %v4476, %v4472
        %v4997 = vpack.c.b16 %v4477, %v4473
        %v4998 = vpack.c.b16 %v4478, %v4474
        %v4999 = vpack.c.b16 %v4483, %v4479
        %v5000 = vpack.c.b16 %v4484, %v4480
        %v5001 = vpack.c.b16 %v4485, %v4481
        %v5002 = vpack.c.b16 %v4486, %v4482
        %v5003 = vpack.c.b16 %v4491, %v4487
        %v5004 = vpack.c.b16 %v4492, %v4488
        %v5005 = vpack.c.b16 %v4493, %v4489
        %v5006 = vpack.c.b16 %v4494, %v4490
        %5519 = vmatprep.subr.bf16.mxu0 %v4496
        %5520 = vmatpush1.bf16.msra.mxu0 %v4495
        %5521 = vmatprep.subr.bf16.mxu0 %v4500
        %5522 = vmatpush1.bf16.msra.mxu0 %v4499
        %5523 = vmatprep.subr.bf16.mxu0 %v4504
        %5524 = vmatpush1.bf16.msra.mxu0 %v4503
        %5525 = vmatprep.subr.bf16.mxu0 %v4508
        %5526 = vmatpush1.bf16.msra.mxu0 %v4507
        %5527 = vmatprep.subr.bf16.mxu0 %v4512
        %5528 = vmatpush1.bf16.msra.mxu0 %v4511
        %5529 = vmatprep.subr.bf16.mxu0 %v4516
        %5530 = vmatpush1.bf16.msra.mxu0 %v4515
        %5531 = vmatprep.subr.bf16.mxu0 %v4520
        %5532 = vmatpush1.bf16.msra.mxu0 %v4519
        %5533 = vmatprep.subr.bf16.mxu0 %v4524
        %5534 = vmatpush1.bf16.msra.mxu0 %v4523
        %5535 = vmatprep.subr.bf16.mxu0 %v4528
        %5536 = vmatpush1.bf16.msra.mxu0 %v4527
        %5537 = vmatprep.subr.bf16.mxu0 %v4532
        %5538 = vmatpush1.bf16.msra.mxu0 %v4531
        %5539 = vmatprep.subr.bf16.mxu0 %v4536
        %5540 = vmatpush1.bf16.msra.mxu0 %v4535
        %5541 = vmatprep.subr.bf16.mxu0 %v4540
        %5542 = vmatpush1.bf16.msra.mxu0 %v4539
        %5543 = vmatprep.subr.bf16.mxu0 %v4544
        %5544 = vmatpush1.bf16.msra.mxu0 %v4543
        %5545 = vmatprep.subr.bf16.mxu0 %v4548
        %5546 = vmatpush1.bf16.msra.mxu0 %v4547
        %5547 = vmatprep.subr.bf16.mxu0 %v4552
        %5548 = vmatpush1.bf16.msra.mxu0 %v4551
        %5549 = vmatprep.subr.bf16.mxu0 %v4556
        %5550 = vmatpush1.bf16.msra.mxu0 %v4555
        %5551 = vmatprep.mubr.bf16.mxu0 %v774
        %5552 = vmatmul.mubr.bf16.gmra.mrb[0].mxu0 %v773
        %v5553 = vpop.f32.mrb[0].mxu0
        %v5554 = vadd.f32 %v2942, %v5553
        %v5555 = vpop.f32.mrb[0].mxu0
        %v5556 = vadd.f32 %v2946, %v5555
        %v5557 = vpop.f32.mrb[0].mxu0
        %v5558 = vpop.f32.mrb[0].mxu0
        %5559 = vdwg.mxu0
        %5560 = vmatprep.subr.bf16.mxu0 %v4560
        %5561 = vmatpush1.bf16.msra.mxu0 %v4559
        %5562 = vmatprep.subr.bf16.mxu0 %v4564
        %5563 = vmatpush1.bf16.msra.mxu0 %v4563
        %5564 = vmatprep.subr.bf16.mxu0 %v4568
        %5565 = vmatpush1.bf16.msra.mxu0 %v4567
        %5566 = vmatprep.subr.bf16.mxu0 %v4572
        %5567 = vmatpush1.bf16.msra.mxu0 %v4571
        %5568 = vmatprep.subr.bf16.mxu0 %v4576
        %5569 = vmatpush1.bf16.msra.mxu0 %v4575
        %5570 = vmatprep.subr.bf16.mxu0 %v4580
        %5571 = vmatpush1.bf16.msra.mxu0 %v4579
        %5572 = vmatprep.subr.bf16.mxu0 %v4584
        %5573 = vmatpush1.bf16.msra.mxu0 %v4583
        %5574 = vmatprep.subr.bf16.mxu0 %v4588
        %5575 = vmatpush1.bf16.msra.mxu0 %v4587
        %5576 = vmatprep.subr.bf16.mxu0 %v4592
        %5577 = vmatpush1.bf16.msra.mxu0 %v4591
        %5578 = vmatprep.subr.bf16.mxu0 %v4596
        %5579 = vmatpush1.bf16.msra.mxu0 %v4595
        %5580 = vmatprep.subr.bf16.mxu0 %v4600
        %5581 = vmatpush1.bf16.msra.mxu0 %v4599
        %5582 = vmatprep.subr.bf16.mxu0 %v4604
        %5583 = vmatpush1.bf16.msra.mxu0 %v4603
        %5584 = vmatprep.subr.bf16.mxu0 %v4608
        %5585 = vmatpush1.bf16.msra.mxu0 %v4607
        %5586 = vmatprep.subr.bf16.mxu0 %v4612
        %5587 = vmatpush1.bf16.msra.mxu0 %v4611
        %5588 = vmatprep.subr.bf16.mxu0 %v4616
        %5589 = vmatpush1.bf16.msra.mxu0 %v4615
        %5590 = vmatprep.subr.bf16.mxu0 %v4620
        %5591 = vmatpush1.bf16.msra.mxu0 %v4619
        %5592 = vmatprep.mubr.bf16.mxu0 %v776
        %5593 = vmatmul.mubr.bf16.gmra.mrb[0].mxu0 %v775
        %v5594 = vpop.f32.mrb[0].mxu0
        %v5595 = vadd.f32 %v5554, %v5594
        %v5596 = vpop.f32.mrb[0].mxu0
        %v5597 = vadd.f32 %v5556, %v5596
        %v5598 = vpop.f32.mrb[0].mxu0
        %v5599 = vpop.f32.mrb[0].mxu0
        %5600 = vdwg.mxu0
        %5601 = vmatprep.subr.bf16.mxu0 %v4624
        %5602 = vmatpush1.bf16.msra.mxu0 %v4623
        %5603 = vmatprep.subr.bf16.mxu0 %v4628
        %5604 = vmatpush1.bf16.msra.mxu0 %v4627
        %5605 = vmatprep.subr.bf16.mxu0 %v4632
        %5606 = vmatpush1.bf16.msra.mxu0 %v4631
        %5607 = vmatprep.subr.bf16.mxu0 %v4636
        %5608 = vmatpush1.bf16.msra.mxu0 %v4635
        %5609 = vmatprep.subr.bf16.mxu0 %v4640
        %5610 = vmatpush1.bf16.msra.mxu0 %v4639
        %5611 = vmatprep.subr.bf16.mxu0 %v4644
        %5612 = vmatpush1.bf16.msra.mxu0 %v4643
        %5613 = vmatprep.subr.bf16.mxu0 %v4648
        %5614 = vmatpush1.bf16.msra.mxu0 %v4647
        %5615 = vmatprep.subr.bf16.mxu0 %v4652
        %5616 = vmatpush1.bf16.msra.mxu0 %v4651
        %5617 = vmatprep.subr.bf16.mxu0 %v4656
        %5618 = vmatpush1.bf16.msra.mxu0 %v4655
        %5619 = vmatprep.subr.bf16.mxu0 %v4660
        %5620 = vmatpush1.bf16.msra.mxu0 %v4659
        %5621 = vmatprep.subr.bf16.mxu0 %v4664
        %5622 = vmatpush1.bf16.msra.mxu0 %v4663
        %5623 = vmatprep.subr.bf16.mxu0 %v4668
        %5624 = vmatpush1.bf16.msra.mxu0 %v4667
        %5625 = vmatprep.subr.bf16.mxu0 %v4672
        %5626 = vmatpush1.bf16.msra.mxu0 %v4671
        %5627 = vmatprep.subr.bf16.mxu0 %v4676
        %5628 = vmatpush1.bf16.msra.mxu0 %v4675
        %5629 = vmatprep.subr.bf16.mxu0 %v4680
        %5630 = vmatpush1.bf16.msra.mxu0 %v4679
        %5631 = vmatprep.subr.bf16.mxu0 %v4684
        %5632 = vmatpush1.bf16.msra.mxu0 %v4683
        %5633 = vmatprep.mubr.bf16.mxu0 %v778
        %5634 = vmatmul.mubr.bf16.gmra.mrb[0].mxu0 %v777
        %v5635 = vpop.f32.mrb[0].mxu0
        %v5636 = vadd.f32 %v5595, %v5635
        %v5637 = vpop.f32.mrb[0].mxu0
        %v5638 = vadd.f32 %v5597, %v5637
        %v5639 = vpop.f32.mrb[0].mxu0
        %v5640 = vpop.f32.mrb[0].mxu0
        %5641 = vdwg.mxu0
        %5642 = vmatprep.subr.bf16.mxu0 %v4688
        %5643 = vmatpush1.bf16.msra.mxu0 %v4687
        %5644 = vmatprep.subr.bf16.mxu0 %v4692
        %5645 = vmatpush1.bf16.msra.mxu0 %v4691
        %5646 = vmatprep.subr.bf16.mxu0 %v4696
        %5647 = vmatpush1.bf16.msra.mxu0 %v4695
        %5648 = vmatprep.subr.bf16.mxu0 %v4700
        %5649 = vmatpush1.bf16.msra.mxu0 %v4699
        %5650 = vmatprep.subr.bf16.mxu0 %v4704
        %5651 = vmatpush1.bf16.msra.mxu0 %v4703
        %5652 = vmatprep.subr.bf16.mxu0 %v4708
        %5653 = vmatpush1.bf16.msra.mxu0 %v4707
        %5654 = vmatprep.subr.bf16.mxu0 %v4712
        %5655 = vmatpush1.bf16.msra.mxu0 %v4711
        %5656 = vmatprep.subr.bf16.mxu0 %v4716
        %5657 = vmatpush1.bf16.msra.mxu0 %v4715
        %5658 = vmatprep.subr.bf16.mxu0 %v4720
        %5659 = vmatpush1.bf16.msra.mxu0 %v4719
        %5660 = vmatprep.subr.bf16.mxu0 %v4724
        %5661 = vmatpush1.bf16.msra.mxu0 %v4723
        %5662 = vmatprep.subr.bf16.mxu0 %v4728
        %5663 = vmatpush1.bf16.msra.mxu0 %v4727
        %5664 = vmatprep.subr.bf16.mxu0 %v4732
        %5665 = vmatpush1.bf16.msra.mxu0 %v4731
        %5666 = vmatprep.subr.bf16.mxu0 %v4736
        %5667 = vmatpush1.bf16.msra.mxu0 %v4735
        %5668 = vmatprep.subr.bf16.mxu0 %v4740
        %5669 = vmatpush1.bf16.msra.mxu0 %v4739
        %5670 = vmatprep.subr.bf16.mxu0 %v4744
        %5671 = vmatpush1.bf16.msra.mxu0 %v4743
        %5672 = vmatprep.subr.bf16.mxu0 %v4748
        %5673 = vmatpush1.bf16.msra.mxu0 %v4747
        %5674 = vmatprep.mubr.bf16.mxu0 %v780
        %5675 = vmatmul.mubr.bf16.gmra.mrb[0].mxu0 %v779
        %v5676 = vpop.f32.mrb[0].mxu0
        %v5677 = vadd.f32 %v5636, %v5676
        %v5678 = vpop.f32.mrb[0].mxu0
        %v5679 = vadd.f32 %v5638, %v5678
        %v5680 = vpop.f32.mrb[0].mxu0
        %v5681 = vpop.f32.mrb[0].mxu0
        %5682 = vdwg.mxu0
        %5683 = vmatprep.subr.bf16.mxu0 %v4752
        %5684 = vmatpush1.bf16.msra.mxu0 %v4751
        %5685 = vmatprep.subr.bf16.mxu0 %v4756
        %5686 = vmatpush1.bf16.msra.mxu0 %v4755
        %5687 = vmatprep.subr.bf16.mxu0 %v4760
        %5688 = vmatpush1.bf16.msra.mxu0 %v4759
        %5689 = vmatprep.subr.bf16.mxu0 %v4764
        %5690 = vmatpush1.bf16.msra.mxu0 %v4763
        %5691 = vmatprep.subr.bf16.mxu0 %v4768
        %5692 = vmatpush1.bf16.msra.mxu0 %v4767
        %5693 = vmatprep.subr.bf16.mxu0 %v4772
        %5694 = vmatpush1.bf16.msra.mxu0 %v4771
        %5695 = vmatprep.subr.bf16.mxu0 %v4776
        %5696 = vmatpush1.bf16.msra.mxu0 %v4775
        %5697 = vmatprep.subr.bf16.mxu0 %v4780
        %5698 = vmatpush1.bf16.msra.mxu0 %v4779
        %5699 = vmatprep.subr.bf16.mxu0 %v4784
        %5700 = vmatpush1.bf16.msra.mxu0 %v4783
        %5701 = vmatprep.subr.bf16.mxu0 %v4788
        %5702 = vmatpush1.bf16.msra.mxu0 %v4787
        %5703 = vmatprep.subr.bf16.mxu0 %v4792
        %5704 = vmatpush1.bf16.msra.mxu0 %v4791
        %5705 = vmatprep.subr.bf16.mxu0 %v4796
        %5706 = vmatpush1.bf16.msra.mxu0 %v4795
        %5707 = vmatprep.subr.bf16.mxu0 %v4800
        %5708 = vmatpush1.bf16.msra.mxu0 %v4799
        %5709 = vmatprep.subr.bf16.mxu0 %v4804
        %5710 = vmatpush1.bf16.msra.mxu0 %v4803
        %5711 = vmatprep.subr.bf16.mxu0 %v4808
        %5712 = vmatpush1.bf16.msra.mxu0 %v4807
        %5713 = vmatprep.subr.bf16.mxu0 %v4812
        %5714 = vmatpush1.bf16.msra.mxu0 %v4811
        %5715 = vmatprep.mubr.bf16.mxu0 %v782
        %5716 = vmatmul.mubr.bf16.gmra.mrb[0].mxu0 %v781
        %v5717 = vpop.f32.mrb[0].mxu0
        %v5718 = vadd.f32 %v5677, %v5717
        %v5719 = vpop.f32.mrb[0].mxu0
        %v5720 = vadd.f32 %v5679, %v5719
        %v5721 = vpop.f32.mrb[0].mxu0
        %v5722 = vpop.f32.mrb[0].mxu0
        %5723 = vdwg.mxu0
        %5724 = vmatprep.subr.bf16.mxu0 %v4816
        %5725 = vmatpush1.bf16.msra.mxu0 %v4815
        %5726 = vmatprep.subr.bf16.mxu0 %v4820
        %5727 = vmatpush1.bf16.msra.mxu0 %v4819
        %5728 = vmatprep.subr.bf16.mxu0 %v4824
        %5729 = vmatpush1.bf16.msra.mxu0 %v4823
        %5730 = vmatprep.subr.bf16.mxu0 %v4828
        %5731 = vmatpush1.bf16.msra.mxu0 %v4827
        %5732 = vmatprep.subr.bf16.mxu0 %v4832
        %5733 = vmatpush1.bf16.msra.mxu0 %v4831
        %5734 = vmatprep.subr.bf16.mxu0 %v4836
        %5735 = vmatpush1.bf16.msra.mxu0 %v4835
        %5736 = vmatprep.subr.bf16.mxu0 %v4840
        %5737 = vmatpush1.bf16.msra.mxu0 %v4839
        %5738 = vmatprep.subr.bf16.mxu0 %v4844
        %5739 = vmatpush1.bf16.msra.mxu0 %v4843
        %5740 = vmatprep.subr.bf16.mxu0 %v4848
        %5741 = vmatpush1.bf16.msra.mxu0 %v4847
        %5742 = vmatprep.subr.bf16.mxu0 %v4852
        %5743 = vmatpush1.bf16.msra.mxu0 %v4851
        %5744 = vmatprep.subr.bf16.mxu0 %v4856
        %5745 = vmatpush1.bf16.msra.mxu0 %v4855
        %5746 = vmatprep.subr.bf16.mxu0 %v4860
        %5747 = vmatpush1.bf16.msra.mxu0 %v4859
        %5748 = vmatprep.subr.bf16.mxu0 %v4864
        %5749 = vmatpush1.bf16.msra.mxu0 %v4863
        %5750 = vmatprep.subr.bf16.mxu0 %v4868
        %5751 = vmatpush1.bf16.msra.mxu0 %v4867
        %5752 = vmatprep.subr.bf16.mxu0 %v4872
        %5753 = vmatpush1.bf16.msra.mxu0 %v4871
        %5754 = vmatprep.subr.bf16.mxu0 %v4876
        %5755 = vmatpush1.bf16.msra.mxu0 %v4875
        %5756 = vmatprep.mubr.bf16.mxu0 %v784
        %5757 = vmatmul.mubr.bf16.gmra.mrb[0].mxu0 %v783
        %v5758 = vpop.f32.mrb[0].mxu0
        %v5759 = vadd.f32 %v5718, %v5758
        %v5760 = vpop.f32.mrb[0].mxu0
        %v5761 = vadd.f32 %v5720, %v5760
        %v5762 = vpop.f32.mrb[0].mxu0
        %v5763 = vpop.f32.mrb[0].mxu0
        %5764 = vdwg.mxu0
        %5765 = vmatprep.subr.bf16.mxu0 %v4880
        %5766 = vmatpush1.bf16.msra.mxu0 %v4879
        %5767 = vmatprep.subr.bf16.mxu0 %v4884
        %5768 = vmatpush1.bf16.msra.mxu0 %v4883
        %5769 = vmatprep.subr.bf16.mxu0 %v4888
        %5770 = vmatpush1.bf16.msra.mxu0 %v4887
        %5771 = vmatprep.subr.bf16.mxu0 %v4892
        %5772 = vmatpush1.bf16.msra.mxu0 %v4891
        %5773 = vmatprep.subr.bf16.mxu0 %v4896
        %5774 = vmatpush1.bf16.msra.mxu0 %v4895
        %5775 = vmatprep.subr.bf16.mxu0 %v4900
        %5776 = vmatpush1.bf16.msra.mxu0 %v4899
        %5777 = vmatprep.subr.bf16.mxu0 %v4904
        %5778 = vmatpush1.bf16.msra.mxu0 %v4903
        %5779 = vmatprep.subr.bf16.mxu0 %v4908
        %5780 = vmatpush1.bf16.msra.mxu0 %v4907
        %5781 = vmatprep.subr.bf16.mxu0 %v4912
        %5782 = vmatpush1.bf16.msra.mxu0 %v4911
        %5783 = vmatprep.subr.bf16.mxu0 %v4916
        %5784 = vmatpush1.bf16.msra.mxu0 %v4915
        %5785 = vmatprep.subr.bf16.mxu0 %v4920
        %5786 = vmatpush1.bf16.msra.mxu0 %v4919
        %5787 = vmatprep.subr.bf16.mxu0 %v4924
        %5788 = vmatpush1.bf16.msra.mxu0 %v4923
        %5789 = vmatprep.subr.bf16.mxu0 %v4928
        %5790 = vmatpush1.bf16.msra.mxu0 %v4927
        %5791 = vmatprep.subr.bf16.mxu0 %v4932
        %5792 = vmatpush1.bf16.msra.mxu0 %v4931
        %5793 = vmatprep.subr.bf16.mxu0 %v4936
        %5794 = vmatpush1.bf16.msra.mxu0 %v4935
        %5795 = vmatprep.subr.bf16.mxu0 %v4940
        %5796 = vmatpush1.bf16.msra.mxu0 %v4939
        %5797 = vmatprep.mubr.bf16.mxu0 %v786
        %5798 = vmatmul.mubr.bf16.gmra.mrb[0].mxu0 %v785
        %v5799 = vpop.f32.mrb[0].mxu0
        %v5800 = vadd.f32 %v5759, %v5799
        %v5801 = vpop.f32.mrb[0].mxu0
        %v5802 = vadd.f32 %v5761, %v5801
        %v5803 = vpop.f32.mrb[0].mxu0
        %v5804 = vpop.f32.mrb[0].mxu0
        %5805 = vdwg.mxu0
        %5806 = vmatprep.subr.bf16.mxu0 %v4944
        %5807 = vmatpush1.bf16.msra.mxu0 %v4943
        %5808 = vmatprep.subr.bf16.mxu0 %v4948
        %5809 = vmatpush1.bf16.msra.mxu0 %v4947
        %5810 = vmatprep.subr.bf16.mxu0 %v4952
        %5811 = vmatpush1.bf16.msra.mxu0 %v4951
        %5812 = vmatprep.subr.bf16.mxu0 %v4956
        %5813 = vmatpush1.bf16.msra.mxu0 %v4955
        %5814 = vmatprep.subr.bf16.mxu0 %v4960
        %5815 = vmatpush1.bf16.msra.mxu0 %v4959
        %5816 = vmatprep.subr.bf16.mxu0 %v4964
        %5817 = vmatpush1.bf16.msra.mxu0 %v4963
        %5818 = vmatprep.subr.bf16.mxu0 %v4968
        %5819 = vmatpush1.bf16.msra.mxu0 %v4967
        %5820 = vmatprep.subr.bf16.mxu0 %v4972
        %5821 = vmatpush1.bf16.msra.mxu0 %v4971
        %5822 = vmatprep.subr.bf16.mxu0 %v4976
        %5823 = vmatpush1.bf16.msra.mxu0 %v4975
        %5824 = vmatprep.subr.bf16.mxu0 %v4980
        %5825 = vmatpush1.bf16.msra.mxu0 %v4979
        %5826 = vmatprep.subr.bf16.mxu0 %v4984
        %5827 = vmatpush1.bf16.msra.mxu0 %v4983
        %5828 = vmatprep.subr.bf16.mxu0 %v4988
        %5829 = vmatpush1.bf16.msra.mxu0 %v4987
        %5830 = vmatprep.subr.bf16.mxu0 %v4992
        %5831 = vmatpush1.bf16.msra.mxu0 %v4991
        %5832 = vmatprep.subr.bf16.mxu0 %v4996
        %5833 = vmatpush1.bf16.msra.mxu0 %v4995
        %5834 = vmatprep.subr.bf16.mxu0 %v5000
        %5835 = vmatpush1.bf16.msra.mxu0 %v4999
        %5836 = vmatprep.subr.bf16.mxu0 %v5004
        %5837 = vmatpush1.bf16.msra.mxu0 %v5003
        %5838 = vmatprep.mubr.bf16.mxu0 %v788
        %5839 = vmatmul.mubr.bf16.gmra.mrb[0].mxu0 %v787
        %v5840 = vpop.f32.mrb[0].mxu0
        %v5841 = vadd.f32 %v5800, %v5840
        %v5842 = vpop.f32.mrb[0].mxu0
        %v5843 = vadd.f32 %v5802, %v5842
        %v5844 = vpop.f32.mrb[0].mxu0
        %v5845 = vpop.f32.mrb[0].mxu0
        %5846 = vdwg.mxu0
        %5847 = vmatprep.subr.bf16.mxu0 %v4498
        %5848 = vmatpush1.bf16.msra.mxu0 %v4497
        %5849 = vmatprep.subr.bf16.mxu0 %v4502
        %5850 = vmatpush1.bf16.msra.mxu0 %v4501
        %5851 = vmatprep.subr.bf16.mxu0 %v4506
        %5852 = vmatpush1.bf16.msra.mxu0 %v4505
        %5853 = vmatprep.subr.bf16.mxu0 %v4510
        %5854 = vmatpush1.bf16.msra.mxu0 %v4509
        %5855 = vmatprep.subr.bf16.mxu0 %v4514
        %5856 = vmatpush1.bf16.msra.mxu0 %v4513
        %5857 = vmatprep.subr.bf16.mxu0 %v4518
        %5858 = vmatpush1.bf16.msra.mxu0 %v4517
        %5859 = vmatprep.subr.bf16.mxu0 %v4522
        %5860 = vmatpush1.bf16.msra.mxu0 %v4521
        %5861 = vmatprep.subr.bf16.mxu0 %v4526
        %5862 = vmatpush1.bf16.msra.mxu0 %v4525
        %5863 = vmatprep.subr.bf16.mxu0 %v4530
        %5864 = vmatpush1.bf16.msra.mxu0 %v4529
        %5865 = vmatprep.subr.bf16.mxu0 %v4534
        %5866 = vmatpush1.bf16.msra.mxu0 %v4533
        %5867 = vmatprep.subr.bf16.mxu0 %v4538
        %5868 = vmatpush1.bf16.msra.mxu0 %v4537
        %5869 = vmatprep.subr.bf16.mxu0 %v4542
        %5870 = vmatpush1.bf16.msra.mxu0 %v4541
        %5871 = vmatprep.subr.bf16.mxu0 %v4546
        %5872 = vmatpush1.bf16.msra.mxu0 %v4545
        %5873 = vmatprep.subr.bf16.mxu0 %v4550
        %5874 = vmatpush1.bf16.msra.mxu0 %v4549
        %5875 = vmatprep.subr.bf16.mxu0 %v4554
        %5876 = vmatpush1.bf16.msra.mxu0 %v4553
        %5877 = vmatprep.subr.bf16.mxu0 %v4558
        %5878 = vmatpush1.bf16.msra.mxu0 %v4557
        %5879 = vmatprep.mubr.bf16.mxu0 %v774
        %5880 = vmatmul.mubr.bf16.gmra.mrb[0].mxu0 %v773
        %v5881 = vpop.f32.mrb[0].mxu0
        %v5882 = vadd.f32 %v2950, %v5881
        %v5883 = vpop.f32.mrb[0].mxu0
        %v5884 = vadd.f32 %v2954, %v5883
        %v5885 = vpop.f32.mrb[0].mxu0
        %v5886 = vpop.f32.mrb[0].mxu0
        %5887 = vdwg.mxu0
        %5888 = vmatprep.subr.bf16.mxu0 %v4562
        %5889 = vmatpush1.bf16.msra.mxu0 %v4561
        %5890 = vmatprep.subr.bf16.mxu0 %v4566
        %5891 = vmatpush1.bf16.msra.mxu0 %v4565
        %5892 = vmatprep.subr.bf16.mxu0 %v4570
        %5893 = vmatpush1.bf16.msra.mxu0 %v4569
        %5894 = vmatprep.subr.bf16.mxu0 %v4574
        %5895 = vmatpush1.bf16.msra.mxu0 %v4573
        %5896 = vmatprep.subr.bf16.mxu0 %v4578
        %5897 = vmatpush1.bf16.msra.mxu0 %v4577
        %5898 = vmatprep.subr.bf16.mxu0 %v4582
        %5899 = vmatpush1.bf16.msra.mxu0 %v4581
        %5900 = vmatprep.subr.bf16.mxu0 %v4586
        %5901 = vmatpush1.bf16.msra.mxu0 %v4585
        %5902 = vmatprep.subr.bf16.mxu0 %v4590
        %5903 = vmatpush1.bf16.msra.mxu0 %v4589
        %5904 = vmatprep.subr.bf16.mxu0 %v4594
        %5905 = vmatpush1.bf16.msra.mxu0 %v4593
        %5906 = vmatprep.subr.bf16.mxu0 %v4598
        %5907 = vmatpush1.bf16.msra.mxu0 %v4597
        %5908 = vmatprep.subr.bf16.mxu0 %v4602
        %5909 = vmatpush1.bf16.msra.mxu0 %v4601
        %5910 = vmatprep.subr.bf16.mxu0 %v4606
        %5911 = vmatpush1.bf16.msra.mxu0 %v4605
        %5912 = vmatprep.subr.bf16.mxu0 %v4610
        %5913 = vmatpush1.bf16.msra.mxu0 %v4609
        %5914 = vmatprep.subr.bf16.mxu0 %v4614
        %5915 = vmatpush1.bf16.msra.mxu0 %v4613
        %5916 = vmatprep.subr.bf16.mxu0 %v4618
        %5917 = vmatpush1.bf16.msra.mxu0 %v4617
        %5918 = vmatprep.subr.bf16.mxu0 %v4622
        %5919 = vmatpush1.bf16.msra.mxu0 %v4621
        %5920 = vmatprep.mubr.bf16.mxu0 %v776
        %5921 = vmatmul.mubr.bf16.gmra.mrb[0].mxu0 %v775
        %v5922 = vpop.f32.mrb[0].mxu0
        %v5923 = vadd.f32 %v5882, %v5922
        %v5924 = vpop.f32.mrb[0].mxu0
        %v5925 = vadd.f32 %v5884, %v5924
        %v5926 = vpop.f32.mrb[0].mxu0
        %v5927 = vpop.f32.mrb[0].mxu0
        %5928 = vdwg.mxu0
        %5929 = vmatprep.subr.bf16.mxu0 %v4626
        %5930 = vmatpush1.bf16.msra.mxu0 %v4625
        %5931 = vmatprep.subr.bf16.mxu0 %v4630
        %5932 = vmatpush1.bf16.msra.mxu0 %v4629
        %5933 = vmatprep.subr.bf16.mxu0 %v4634
        %5934 = vmatpush1.bf16.msra.mxu0 %v4633
        %5935 = vmatprep.subr.bf16.mxu0 %v4638
        %5936 = vmatpush1.bf16.msra.mxu0 %v4637
        %5937 = vmatprep.subr.bf16.mxu0 %v4642
        %5938 = vmatpush1.bf16.msra.mxu0 %v4641
        %5939 = vmatprep.subr.bf16.mxu0 %v4646
        %5940 = vmatpush1.bf16.msra.mxu0 %v4645
        %5941 = vmatprep.subr.bf16.mxu0 %v4650
        %5942 = vmatpush1.bf16.msra.mxu0 %v4649
        %5943 = vmatprep.subr.bf16.mxu0 %v4654
        %5944 = vmatpush1.bf16.msra.mxu0 %v4653
        %5945 = vmatprep.subr.bf16.mxu0 %v4658
        %5946 = vmatpush1.bf16.msra.mxu0 %v4657
        %5947 = vmatprep.subr.bf16.mxu0 %v4662
        %5948 = vmatpush1.bf16.msra.mxu0 %v4661
        %5949 = vmatprep.subr.bf16.mxu0 %v4666
        %5950 = vmatpush1.bf16.msra.mxu0 %v4665
        %5951 = vmatprep.subr.bf16.mxu0 %v4670
        %5952 = vmatpush1.bf16.msra.mxu0 %v4669
        %5953 = vmatprep.subr.bf16.mxu0 %v4674
        %5954 = vmatpush1.bf16.msra.mxu0 %v4673
        %5955 = vmatprep.subr.bf16.mxu0 %v4678
        %5956 = vmatpush1.bf16.msra.mxu0 %v4677
        %5957 = vmatprep.subr.bf16.mxu0 %v4682
        %5958 = vmatpush1.bf16.msra.mxu0 %v4681
        %5959 = vmatprep.subr.bf16.mxu0 %v4686
        %5960 = vmatpush1.bf16.msra.mxu0 %v4685
        %5961 = vmatprep.mubr.bf16.mxu0 %v778
        %5962 = vmatmul.mubr.bf16.gmra.mrb[0].mxu0 %v777
        %v5963 = vpop.f32.mrb[0].mxu0
        %v5964 = vadd.f32 %v5923, %v5963
        %v5965 = vpop.f32.mrb[0].mxu0
        %v5966 = vadd.f32 %v5925, %v5965
        %v5967 = vpop.f32.mrb[0].mxu0
        %v5968 = vpop.f32.mrb[0].mxu0
        %5969 = vdwg.mxu0
        %5970 = vmatprep.subr.bf16.mxu0 %v4690
        %5971 = vmatpush1.bf16.msra.mxu0 %v4689
        %5972 = vmatprep.subr.bf16.mxu0 %v4694
        %5973 = vmatpush1.bf16.msra.mxu0 %v4693
        %5974 = vmatprep.subr.bf16.mxu0 %v4698
        %5975 = vmatpush1.bf16.msra.mxu0 %v4697
        %5976 = vmatprep.subr.bf16.mxu0 %v4702
        %5977 = vmatpush1.bf16.msra.mxu0 %v4701
        %5978 = vmatprep.subr.bf16.mxu0 %v4706
        %5979 = vmatpush1.bf16.msra.mxu0 %v4705
        %5980 = vmatprep.subr.bf16.mxu0 %v4710
        %5981 = vmatpush1.bf16.msra.mxu0 %v4709
        %5982 = vmatprep.subr.bf16.mxu0 %v4714
        %5983 = vmatpush1.bf16.msra.mxu0 %v4713
        %5984 = vmatprep.subr.bf16.mxu0 %v4718
        %5985 = vmatpush1.bf16.msra.mxu0 %v4717
        %5986 = vmatprep.subr.bf16.mxu0 %v4722
        %5987 = vmatpush1.bf16.msra.mxu0 %v4721
        %5988 = vmatprep.subr.bf16.mxu0 %v4726
        %5989 = vmatpush1.bf16.msra.mxu0 %v4725
        %5990 = vmatprep.subr.bf16.mxu0 %v4730
        %5991 = vmatpush1.bf16.msra.mxu0 %v4729
        %5992 = vmatprep.subr.bf16.mxu0 %v4734
        %5993 = vmatpush1.bf16.msra.mxu0 %v4733
        %5994 = vmatprep.subr.bf16.mxu0 %v4738
        %5995 = vmatpush1.bf16.msra.mxu0 %v4737
        %5996 = vmatprep.subr.bf16.mxu0 %v4742
        %5997 = vmatpush1.bf16.msra.mxu0 %v4741
        %5998 = vmatprep.subr.bf16.mxu0 %v4746
        %5999 = vmatpush1.bf16.msra.mxu0 %v4745
        %6000 = vmatprep.subr.bf16.mxu0 %v4750
        %6001 = vmatpush1.bf16.msra.mxu0 %v4749
        %6002 = vmatprep.mubr.bf16.mxu0 %v780
        %6003 = vmatmul.mubr.bf16.gmra.mrb[0].mxu0 %v779
        %v6004 = vpop.f32.mrb[0].mxu0
        %v6005 = vadd.f32 %v5964, %v6004
        %v6006 = vpop.f32.mrb[0].mxu0
        %v6007 = vadd.f32 %v5966, %v6006
        %v6008 = vpop.f32.mrb[0].mxu0
        %v6009 = vpop.f32.mrb[0].mxu0
        %6010 = vdwg.mxu0
        %6011 = vmatprep.subr.bf16.mxu0 %v4754
        %6012 = vmatpush1.bf16.msra.mxu0 %v4753
        %6013 = vmatprep.subr.bf16.mxu0 %v4758
        %6014 = vmatpush1.bf16.msra.mxu0 %v4757
        %6015 = vmatprep.subr.bf16.mxu0 %v4762
        %6016 = vmatpush1.bf16.msra.mxu0 %v4761
        %6017 = vmatprep.subr.bf16.mxu0 %v4766
        %6018 = vmatpush1.bf16.msra.mxu0 %v4765
        %6019 = vmatprep.subr.bf16.mxu0 %v4770
        %6020 = vmatpush1.bf16.msra.mxu0 %v4769
        %6021 = vmatprep.subr.bf16.mxu0 %v4774
        %6022 = vmatpush1.bf16.msra.mxu0 %v4773
        %6023 = vmatprep.subr.bf16.mxu0 %v4778
        %6024 = vmatpush1.bf16.msra.mxu0 %v4777
        %6025 = vmatprep.subr.bf16.mxu0 %v4782
        %6026 = vmatpush1.bf16.msra.mxu0 %v4781
        %6027 = vmatprep.subr.bf16.mxu0 %v4786
        %6028 = vmatpush1.bf16.msra.mxu0 %v4785
        %6029 = vmatprep.subr.bf16.mxu0 %v4790
        %6030 = vmatpush1.bf16.msra.mxu0 %v4789
        %6031 = vmatprep.subr.bf16.mxu0 %v4794
        %6032 = vmatpush1.bf16.msra.mxu0 %v4793
        %6033 = vmatprep.subr.bf16.mxu0 %v4798
        %6034 = vmatpush1.bf16.msra.mxu0 %v4797
        %6035 = vmatprep.subr.bf16.mxu0 %v4802
        %6036 = vmatpush1.bf16.msra.mxu0 %v4801
        %6037 = vmatprep.subr.bf16.mxu0 %v4806
        %6038 = vmatpush1.bf16.msra.mxu0 %v4805
        %6039 = vmatprep.subr.bf16.mxu0 %v4810
        %6040 = vmatpush1.bf16.msra.mxu0 %v4809
        %6041 = vmatprep.subr.bf16.mxu0 %v4814
        %6042 = vmatpush1.bf16.msra.mxu0 %v4813
        %6043 = vmatprep.mubr.bf16.mxu0 %v782
        %6044 = vmatmul.mubr.bf16.gmra.mrb[0].mxu0 %v781
        %v6045 = vpop.f32.mrb[0].mxu0
        %v6046 = vadd.f32 %v6005, %v6045
        %v6047 = vpop.f32.mrb[0].mxu0
        %v6048 = vadd.f32 %v6007, %v6047
        %v6049 = vpop.f32.mrb[0].mxu0
        %v6050 = vpop.f32.mrb[0].mxu0
        %6051 = vdwg.mxu0
        %6052 = vmatprep.subr.bf16.mxu0 %v4818
        %6053 = vmatpush1.bf16.msra.mxu0 %v4817
        %6054 = vmatprep.subr.bf16.mxu0 %v4822
        %6055 = vmatpush1.bf16.msra.mxu0 %v4821
        %6056 = vmatprep.subr.bf16.mxu0 %v4826
        %6057 = vmatpush1.bf16.msra.mxu0 %v4825
        %6058 = vmatprep.subr.bf16.mxu0 %v4830
        %6059 = vmatpush1.bf16.msra.mxu0 %v4829
        %6060 = vmatprep.subr.bf16.mxu0 %v4834
        %6061 = vmatpush1.bf16.msra.mxu0 %v4833
        %6062 = vmatprep.subr.bf16.mxu0 %v4838
        %6063 = vmatpush1.bf16.msra.mxu0 %v4837
        %6064 = vmatprep.subr.bf16.mxu0 %v4842
        %6065 = vmatpush1.bf16.msra.mxu0 %v4841
        %6066 = vmatprep.subr.bf16.mxu0 %v4846
        %6067 = vmatpush1.bf16.msra.mxu0 %v4845
        %6068 = vmatprep.subr.bf16.mxu0 %v4850
        %6069 = vmatpush1.bf16.msra.mxu0 %v4849
        %6070 = vmatprep.subr.bf16.mxu0 %v4854
        %6071 = vmatpush1.bf16.msra.mxu0 %v4853
        %6072 = vmatprep.subr.bf16.mxu0 %v4858
        %6073 = vmatpush1.bf16.msra.mxu0 %v4857
        %6074 = vmatprep.subr.bf16.mxu0 %v4862
        %6075 = vmatpush1.bf16.msra.mxu0 %v4861
        %6076 = vmatprep.subr.bf16.mxu0 %v4866
        %6077 = vmatpush1.bf16.msra.mxu0 %v4865
        %6078 = vmatprep.subr.bf16.mxu0 %v4870
        %6079 = vmatpush1.bf16.msra.mxu0 %v4869
        %6080 = vmatprep.subr.bf16.mxu0 %v4874
        %6081 = vmatpush1.bf16.msra.mxu0 %v4873
        %6082 = vmatprep.subr.bf16.mxu0 %v4878
        %6083 = vmatpush1.bf16.msra.mxu0 %v4877
        %6084 = vmatprep.mubr.bf16.mxu0 %v784
        %6085 = vmatmul.mubr.bf16.gmra.mrb[0].mxu0 %v783
        %v6086 = vpop.f32.mrb[0].mxu0
        %v6087 = vadd.f32 %v6046, %v6086
        %v6088 = vpop.f32.mrb[0].mxu0
        %v6089 = vadd.f32 %v6048, %v6088
        %v6090 = vpop.f32.mrb[0].mxu0
        %v6091 = vpop.f32.mrb[0].mxu0
        %6092 = vdwg.mxu0
        %6093 = vmatprep.subr.bf16.mxu0 %v4882
        %6094 = vmatpush1.bf16.msra.mxu0 %v4881
        %6095 = vmatprep.subr.bf16.mxu0 %v4886
        %6096 = vmatpush1.bf16.msra.mxu0 %v4885
        %6097 = vmatprep.subr.bf16.mxu0 %v4890
        %6098 = vmatpush1.bf16.msra.mxu0 %v4889
        %6099 = vmatprep.subr.bf16.mxu0 %v4894
        %6100 = vmatpush1.bf16.msra.mxu0 %v4893
        %6101 = vmatprep.subr.bf16.mxu0 %v4898
        %6102 = vmatpush1.bf16.msra.mxu0 %v4897
        %6103 = vmatprep.subr.bf16.mxu0 %v4902
        %6104 = vmatpush1.bf16.msra.mxu0 %v4901
        %6105 = vmatprep.subr.bf16.mxu0 %v4906
        %6106 = vmatpush1.bf16.msra.mxu0 %v4905
        %6107 = vmatprep.subr.bf16.mxu0 %v4910
        %6108 = vmatpush1.bf16.msra.mxu0 %v4909
        %6109 = vmatprep.subr.bf16.mxu0 %v4914
        %6110 = vmatpush1.bf16.msra.mxu0 %v4913
        %6111 = vmatprep.subr.bf16.mxu0 %v4918
        %6112 = vmatpush1.bf16.msra.mxu0 %v4917
        %6113 = vmatprep.subr.bf16.mxu0 %v4922
        %6114 = vmatpush1.bf16.msra.mxu0 %v4921
        %6115 = vmatprep.subr.bf16.mxu0 %v4926
        %6116 = vmatpush1.bf16.msra.mxu0 %v4925
        %6117 = vmatprep.subr.bf16.mxu0 %v4930
        %6118 = vmatpush1.bf16.msra.mxu0 %v4929
        %6119 = vmatprep.subr.bf16.mxu0 %v4934
        %6120 = vmatpush1.bf16.msra.mxu0 %v4933
        %6121 = vmatprep.subr.bf16.mxu0 %v4938
        %6122 = vmatpush1.bf16.msra.mxu0 %v4937
        %6123 = vmatprep.subr.bf16.mxu0 %v4942
        %6124 = vmatpush1.bf16.msra.mxu0 %v4941
        %6125 = vmatprep.mubr.bf16.mxu0 %v786
        %6126 = vmatmul.mubr.bf16.gmra.mrb[0].mxu0 %v785
        %v6127 = vpop.f32.mrb[0].mxu0
        %v6128 = vadd.f32 %v6087, %v6127
        %v6129 = vpop.f32.mrb[0].mxu0
        %v6130 = vadd.f32 %v6089, %v6129
        %v6131 = vpop.f32.mrb[0].mxu0
        %v6132 = vpop.f32.mrb[0].mxu0
        %6133 = vdwg.mxu0
        %6134 = vmatprep.subr.bf16.mxu0 %v4946
        %6135 = vmatpush1.bf16.msra.mxu0 %v4945
        %6136 = vmatprep.subr.bf16.mxu0 %v4950
        %6137 = vmatpush1.bf16.msra.mxu0 %v4949
        %6138 = vmatprep.subr.bf16.mxu0 %v4954
        %6139 = vmatpush1.bf16.msra.mxu0 %v4953
        %6140 = vmatprep.subr.bf16.mxu0 %v4958
        %6141 = vmatpush1.bf16.msra.mxu0 %v4957
        %6142 = vmatprep.subr.bf16.mxu0 %v4962
        %6143 = vmatpush1.bf16.msra.mxu0 %v4961
        %6144 = vmatprep.subr.bf16.mxu0 %v4966
        %6145 = vmatpush1.bf16.msra.mxu0 %v4965
        %6146 = vmatprep.subr.bf16.mxu0 %v4970
        %6147 = vmatpush1.bf16.msra.mxu0 %v4969
        %6148 = vmatprep.subr.bf16.mxu0 %v4974
        %6149 = vmatpush1.bf16.msra.mxu0 %v4973
        %6150 = vmatprep.subr.bf16.mxu0 %v4978
        %6151 = vmatpush1.bf16.msra.mxu0 %v4977
        %6152 = vmatprep.subr.bf16.mxu0 %v4982
        %6153 = vmatpush1.bf16.msra.mxu0 %v4981
        %6154 = vmatprep.subr.bf16.mxu0 %v4986
        %6155 = vmatpush1.bf16.msra.mxu0 %v4985
        %6156 = vmatprep.subr.bf16.mxu0 %v4990
        %6157 = vmatpush1.bf16.msra.mxu0 %v4989
        %6158 = vmatprep.subr.bf16.mxu0 %v4994
        %6159 = vmatpush1.bf16.msra.mxu0 %v4993
        %6160 = vmatprep.subr.bf16.mxu0 %v4998
        %6161 = vmatpush1.bf16.msra.mxu0 %v4997
        %6162 = vmatprep.subr.bf16.mxu0 %v5002
        %6163 = vmatpush1.bf16.msra.mxu0 %v5001
        %6164 = vmatprep.subr.bf16.mxu0 %v5006
        %6165 = vmatpush1.bf16.msra.mxu0 %v5005
        %6166 = vmatprep.mubr.bf16.mxu0 %v788
        %6167 = vmatmul.mubr.bf16.gmra.mrb[0].mxu0 %v787
        %v6168 = vpop.f32.mrb[0].mxu0
        %v6169 = vadd.f32 %v6128, %v6168
        %v6170 = vpop.f32.mrb[0].mxu0
        %v6171 = vadd.f32 %v6130, %v6170
        %v6172 = vpop.f32.mrb[0].mxu0
        %v6173 = vpop.f32.mrb[0].mxu0
        %6174 = vdwg.mxu0
        %v6179 = vcombine.low %v5841, %v5843
        %v6180 = vcombine.low %v6169, %v6171
        %v6182 = vunpack.c.l.s4 1966171168
        %v6183 = vunpack.c.0.s8 %v6182
        %v6184 = vlaneseq
        %v6185 = vshrl.u32 %v6184, 7
        %v6186 = vsub.s32 %v6183, %v6185
        %v6187 = vrot.slane %v6179, %v6186
        %v6189 = vunpack.c.l.s4 1966171168
        %v6190 = vunpack.c.0.s8 %v6189
        %v6191 = vlaneseq
        %v6192 = vshrl.u32 %v6191, 7
        %v6193 = vsub.s32 %v6190, %v6192
        %v6194 = vrot.slane %v6180, %v6193
        %v6195 = vcombine.low %v6187, %v6194
        %v6196 = vcombine.high %v6187, %v6194
        %v6198 = vunpack.c.l.s4 1966171168
        %v6199 = vunpack.c.0.s8 %v6198
        %v6200 = vlaneseq
        %v6201 = vshrl.u32 %v6200, 7
        %v6202 = vsub.s32 %v6199, %v6201
        %v6203 = vrot.slane %v6195, %v6202
        %v6205 = vunpack.c.l.s4 1966171168
        %v6206 = vunpack.c.0.s8 %v6205
        %v6207 = vlaneseq
        %v6208 = vshrl.u32 %v6207, 7
        %v6209 = vsub.s32 %v6206, %v6208
        %v6210 = vrot.slane %v6196, %v6209
        %v6211 = vlaneseq
        %v6212 = vshrl.u32 %v6211, 7
        %v6213 = vsub.s32 0, %v6212
        %v6214 = vrot.slane %v6203, %v6213
        %v6215 = vlaneseq
        %v6216 = vshrl.u32 %v6215, 7
        %v6217 = vsub.s32 1, %v6216
        %v6218 = vrot.slane %v6203, %v6217
        %v6219 = vlaneseq
        %v6220 = vshrl.u32 %v6219, 7
        %v6221 = vsub.s32 2, %v6220
        %v6222 = vrot.slane %v6203, %v6221
        %v6223 = vlaneseq
        %v6224 = vshrl.u32 %v6223, 7
        %v6225 = vsub.s32 3, %v6224
        %v6226 = vrot.slane %v6203, %v6225
        %v6227 = vlaneseq
        %v6228 = vshrl.u32 %v6227, 7
        %v6229 = vsub.s32 0, %v6228
        %v6230 = vrot.slane %v6210, %v6229
        %v6231 = vlaneseq
        %v6232 = vshrl.u32 %v6231, 7
        %v6233 = vsub.s32 1, %v6232
        %v6234 = vrot.slane %v6210, %v6233
        %v6235 = vlaneseq
        %v6236 = vshrl.u32 %v6235, 7
        %v6237 = vsub.s32 2, %v6236
        %v6238 = vrot.slane %v6210, %v6237
        %v6239 = vlaneseq
        %v6240 = vshrl.u32 %v6239, 7
        %v6241 = vsub.s32 3, %v6240
        %v6242 = vrot.slane %v6210, %v6241
        %v6251 = vadd.f32 %v2374, %v6214
        %v6252 = vadd.f32 %v2376, %v6218
        %v6253 = vadd.f32 %v2417, %v6222
        %v6254 = vadd.f32 %v2419, %v6226
        %v6255 = vadd.f32 %v2378, %v6230
        %v6256 = vadd.f32 %v2380, %v6234
        %v6257 = vadd.f32 %v2421, %v6238
        %v6258 = vadd.f32 %v2423, %v6242
        %v6259 = vmax.f32 %v6251, 0.0
        %v6260 = vmax.f32 %v6252, 0.0
        %v6261 = vmax.f32 %v6253, 0.0
        %v6262 = vmax.f32 %v6254, 0.0
        %v6263 = vmax.f32 %v6255, 0.0
        %v6264 = vmax.f32 %v6256, 0.0
        %v6265 = vmax.f32 %v6257, 0.0
        %v6266 = vmax.f32 %v6258, 0.0
        %v6267 = vld [vmem:[#allocation2] sm:$0xff]
        %v6268 = vld [vmem:[#allocation2 + $0x8] sm:$0xff]
        %v6269 = vpack.c.bf16 %v6263, %v6259
        %v6270 = vpack.c.bf16 %v6264, %v6260
        %v6271 = vpack.c.bf16 %v6265, %v6261
        %v6272 = vpack.c.bf16 %v6266, %v6262
        %v6273 = vld [vmem:[%s675] sm:$0xf]
        %v6274 = vld [vmem:[%s675 + $0x4] sm:$0xf]
        %v6275 = vld [vmem:[%s675 + $0x8] sm:$0xf]
        %v6276 = vld [vmem:[%s675 + $0xc] sm:$0xf]
        %v6277 = vld [vmem:[%s675 + $0x10] sm:$0xf]
        %v6278 = vld [vmem:[%s675 + $0x14] sm:$0xf]
        %v6279 = vld [vmem:[%s675 + $0x18] sm:$0xf]
        %v6280 = vld [vmem:[%s675 + $0x1c] sm:$0xf]
        %v6281 = vld [vmem:[%s675 + $0x20] sm:$0xf]
        %v6282 = vld [vmem:[%s675 + $0x24] sm:$0xf]
        %v6283 = vld [vmem:[%s675 + $0x28] sm:$0xf]
        %v6284 = vld [vmem:[%s675 + $0x2c] sm:$0xf]
        %v6285 = vld [vmem:[%s675 + $0x30] sm:$0xf]
        %v6286 = vld [vmem:[%s675 + $0x34] sm:$0xf]
        %v6287 = vld [vmem:[%s675 + $0x38] sm:$0xf]
        %v6288 = vld [vmem:[%s675 + $0x3c] sm:$0xf]
        %v6289 = vld [vmem:[%s675 + $0x40] sm:$0xf]
        %v6290 = vld [vmem:[%s675 + $0x44] sm:$0xf]
        %v6291 = vld [vmem:[%s675 + $0x48] sm:$0xf]
        %v6292 = vld [vmem:[%s675 + $0x4c] sm:$0xf]
        %v6293 = vld [vmem:[%s675 + $0x50] sm:$0xf]
        %v6294 = vld [vmem:[%s675 + $0x54] sm:$0xf]
        %v6295 = vld [vmem:[%s675 + $0x58] sm:$0xf]
        %v6296 = vld [vmem:[%s675 + $0x5c] sm:$0xf]
        %v6297 = vld [vmem:[%s675 + $0x60] sm:$0xf]
        %v6298 = vld [vmem:[%s675 + $0x64] sm:$0xf]
        %v6299 = vld [vmem:[%s675 + $0x68] sm:$0xf]
        %v6300 = vld [vmem:[%s675 + $0x6c] sm:$0xf]
        %v6301 = vld [vmem:[%s675 + $0x70] sm:$0xf]
        %v6302 = vld [vmem:[%s675 + $0x74] sm:$0xf]
        %v6303 = vld [vmem:[%s675 + $0x78] sm:$0xf]
        %v6304 = vld [vmem:[%s675 + $0x7c] sm:$0xf]
        %v6305 = vld [vmem:[%s675 + $0x80] sm:$0xf]
        %v6306 = vld [vmem:[%s675 + $0x84] sm:$0xf]
        %v6307 = vld [vmem:[%s675 + $0x88] sm:$0xf]
        %v6308 = vld [vmem:[%s675 + $0x8c] sm:$0xf]
        %v6309 = vld [vmem:[%s675 + $0x90] sm:$0xf]
        %v6310 = vld [vmem:[%s675 + $0x94] sm:$0xf]
        %v6311 = vld [vmem:[%s675 + $0x98] sm:$0xf]
        %v6312 = vld [vmem:[%s675 + $0x9c] sm:$0xf]
        %v6313 = vld [vmem:[%s675 + $0xa0] sm:$0xf]
        %v6314 = vld [vmem:[%s675 + $0xa4] sm:$0xf]
        %v6315 = vld [vmem:[%s675 + $0xa8] sm:$0xf]
        %v6316 = vld [vmem:[%s675 + $0xac] sm:$0xf]
        %v6317 = vld [vmem:[%s675 + $0xb0] sm:$0xf]
        %v6318 = vld [vmem:[%s675 + $0xb4] sm:$0xf]
        %v6319 = vld [vmem:[%s675 + $0xb8] sm:$0xf]
        %v6320 = vld [vmem:[%s675 + $0xbc] sm:$0xf]
        %v6321 = vld [vmem:[%s675 + $0xc0] sm:$0xf]
        %v6322 = vld [vmem:[%s675 + $0xc4] sm:$0xf]
        %v6323 = vld [vmem:[%s675 + $0xc8] sm:$0xf]
        %v6324 = vld [vmem:[%s675 + $0xcc] sm:$0xf]
        %v6325 = vld [vmem:[%s675 + $0xd0] sm:$0xf]
        %v6326 = vld [vmem:[%s675 + $0xd4] sm:$0xf]
        %v6327 = vld [vmem:[%s675 + $0xd8] sm:$0xf]
        %v6328 = vld [vmem:[%s675 + $0xdc] sm:$0xf]
        %v6329 = vld [vmem:[%s675 + $0xe0] sm:$0xf]
        %v6330 = vld [vmem:[%s675 + $0xe4] sm:$0xf]
        %v6331 = vld [vmem:[%s675 + $0xe8] sm:$0xf]
        %v6332 = vld [vmem:[%s675 + $0xec] sm:$0xf]
        %v6333 = vld [vmem:[%s675 + $0xf0] sm:$0xf]
        %v6334 = vld [vmem:[%s675 + $0xf4] sm:$0xf]
        %v6335 = vld [vmem:[%s675 + $0xf8] sm:$0xf]
        %v6336 = vld [vmem:[%s675 + $0xfc] sm:$0xf]
        %v6401 = vunpack.c.l.b16 %v6273
        %v6402 = vunpack.c.l.b16 %v6274
        %v6403 = vunpack.c.l.b16 %v6275
        %v6404 = vunpack.c.l.b16 %v6276
        %v6405 = vunpack.c.l.b16 %v6277
        %v6406 = vunpack.c.l.b16 %v6278
        %v6407 = vunpack.c.l.b16 %v6279
        %v6408 = vunpack.c.l.b16 %v6280
        %v6409 = vunpack.c.l.b16 %v6281
        %v6410 = vunpack.c.l.b16 %v6282
        %v6411 = vunpack.c.l.b16 %v6283
        %v6412 = vunpack.c.l.b16 %v6284
        %v6413 = vunpack.c.l.b16 %v6285
        %v6414 = vunpack.c.l.b16 %v6286
        %v6415 = vunpack.c.l.b16 %v6287
        %v6416 = vunpack.c.l.b16 %v6288
        %v6417 = vunpack.c.l.b16 %v6289
        %v6418 = vunpack.c.l.b16 %v6290
        %v6419 = vunpack.c.l.b16 %v6291
        %v6420 = vunpack.c.l.b16 %v6292
        %v6421 = vunpack.c.l.b16 %v6293
        %v6422 = vunpack.c.l.b16 %v6294
        %v6423 = vunpack.c.l.b16 %v6295
        %v6424 = vunpack.c.l.b16 %v6296
        %v6425 = vunpack.c.l.b16 %v6297
        %v6426 = vunpack.c.l.b16 %v6298
        %v6427 = vunpack.c.l.b16 %v6299
        %v6428 = vunpack.c.l.b16 %v6300
        %v6429 = vunpack.c.l.b16 %v6301
        %v6430 = vunpack.c.l.b16 %v6302
        %v6431 = vunpack.c.l.b16 %v6303
        %v6432 = vunpack.c.l.b16 %v6304
        %v6433 = vunpack.c.l.b16 %v6305
        %v6434 = vunpack.c.l.b16 %v6306
        %v6435 = vunpack.c.l.b16 %v6307
        %v6436 = vunpack.c.l.b16 %v6308
        %v6437 = vunpack.c.l.b16 %v6309
        %v6438 = vunpack.c.l.b16 %v6310
        %v6439 = vunpack.c.l.b16 %v6311
        %v6440 = vunpack.c.l.b16 %v6312
        %v6441 = vunpack.c.l.b16 %v6313
        %v6442 = vunpack.c.l.b16 %v6314
        %v6443 = vunpack.c.l.b16 %v6315
        %v6444 = vunpack.c.l.b16 %v6316
        %v6445 = vunpack.c.l.b16 %v6317
        %v6446 = vunpack.c.l.b16 %v6318
        %v6447 = vunpack.c.l.b16 %v6319
        %v6448 = vunpack.c.l.b16 %v6320
        %v6449 = vunpack.c.l.b16 %v6321
        %v6450 = vunpack.c.l.b16 %v6322
        %v6451 = vunpack.c.l.b16 %v6323
        %v6452 = vunpack.c.l.b16 %v6324
        %v6453 = vunpack.c.l.b16 %v6325
        %v6454 = vunpack.c.l.b16 %v6326
        %v6455 = vunpack.c.l.b16 %v6327
        %v6456 = vunpack.c.l.b16 %v6328
        %v6457 = vunpack.c.l.b16 %v6329
        %v6458 = vunpack.c.l.b16 %v6330
        %v6459 = vunpack.c.l.b16 %v6331
        %v6460 = vunpack.c.l.b16 %v6332
        %v6461 = vunpack.c.l.b16 %v6333
        %v6462 = vunpack.c.l.b16 %v6334
        %v6463 = vunpack.c.l.b16 %v6335
        %v6464 = vunpack.c.l.b16 %v6336
        %v6465 = vpack.c.b16 %v6402, %v6401
        %v6466 = vpack.c.b16 %v6404, %v6403
        %v6467 = vpack.c.b16 %v6406, %v6405
        %v6468 = vpack.c.b16 %v6408, %v6407
        %v6469 = vpack.c.b16 %v6410, %v6409
        %v6470 = vpack.c.b16 %v6412, %v6411
        %v6471 = vpack.c.b16 %v6414, %v6413
        %v6472 = vpack.c.b16 %v6416, %v6415
        %v6473 = vpack.c.b16 %v6418, %v6417
        %v6474 = vpack.c.b16 %v6420, %v6419
        %v6475 = vpack.c.b16 %v6422, %v6421
        %v6476 = vpack.c.b16 %v6424, %v6423
        %v6477 = vpack.c.b16 %v6426, %v6425
        %v6478 = vpack.c.b16 %v6428, %v6427
        %v6479 = vpack.c.b16 %v6430, %v6429
        %v6480 = vpack.c.b16 %v6432, %v6431
        %v6481 = vpack.c.b16 %v6434, %v6433
        %v6482 = vpack.c.b16 %v6436, %v6435
        %v6483 = vpack.c.b16 %v6438, %v6437
        %v6484 = vpack.c.b16 %v6440, %v6439
        %v6485 = vpack.c.b16 %v6442, %v6441
        %v6486 = vpack.c.b16 %v6444, %v6443
        %v6487 = vpack.c.b16 %v6446, %v6445
        %v6488 = vpack.c.b16 %v6448, %v6447
        %v6489 = vpack.c.b16 %v6450, %v6449
        %v6490 = vpack.c.b16 %v6452, %v6451
        %v6491 = vpack.c.b16 %v6454, %v6453
        %v6492 = vpack.c.b16 %v6456, %v6455
        %v6493 = vpack.c.b16 %v6458, %v6457
        %v6494 = vpack.c.b16 %v6460, %v6459
        %v6495 = vpack.c.b16 %v6462, %v6461
        %v6496 = vpack.c.b16 %v6464, %v6463
        %6529 = vmatprep.subr.bf16.mxu0 0
        %6530 = vmatpush1.bf16.msra.mxu0 %v6465
        %6531 = vmatprep.subr.bf16.mxu0 0
        %6532 = vmatpush1.bf16.msra.mxu0 %v6466
        %6533 = vmatprep.subr.bf16.mxu0 0
        %6534 = vmatpush1.bf16.msra.mxu0 %v6467
        %6535 = vmatprep.subr.bf16.mxu0 0
        %6536 = vmatpush1.bf16.msra.mxu0 %v6468
        %6537 = vmatprep.subr.bf16.mxu0 0
        %6538 = vmatpush1.bf16.msra.mxu0 %v6469
        %6539 = vmatprep.subr.bf16.mxu0 0
        %6540 = vmatpush1.bf16.msra.mxu0 %v6470
        %6541 = vmatprep.subr.bf16.mxu0 0
        %6542 = vmatpush1.bf16.msra.mxu0 %v6471
        %6543 = vmatprep.subr.bf16.mxu0 0
        %6544 = vmatpush1.bf16.msra.mxu0 %v6472
        %6545 = vmatprep.subr.bf16.mxu0 0
        %6546 = vmatpush1.bf16.msra.mxu0 %v6473
        %6547 = vmatprep.subr.bf16.mxu0 0
        %6548 = vmatpush1.bf16.msra.mxu0 %v6474
        %6549 = vmatprep.subr.bf16.mxu0 0
        %6550 = vmatpush1.bf16.msra.mxu0 %v6475
        %6551 = vmatprep.subr.bf16.mxu0 0
        %6552 = vmatpush1.bf16.msra.mxu0 %v6476
        %6553 = vmatprep.subr.bf16.mxu0 0
        %6554 = vmatpush1.bf16.msra.mxu0 %v6477
        %6555 = vmatprep.subr.bf16.mxu0 0
        %6556 = vmatpush1.bf16.msra.mxu0 %v6478
        %6557 = vmatprep.subr.bf16.mxu0 0
        %6558 = vmatpush1.bf16.msra.mxu0 %v6479
        %6559 = vmatprep.subr.bf16.mxu0 0
        %6560 = vmatpush1.bf16.msra.mxu0 %v6480
        %6561 = vmatprep.mubr.bf16.mxu0 %v6270
        %6562 = vmatmul.mubr.bf16.gmra.mrb[0].mxu0 %v6269
        %v6563 = vpop.f32.mrb[0].mxu0
        %v6564 = vadd.f32 0.0, %v6563
        %v6565 = vpop.f32.mrb[0].mxu0
        %v6566 = vpop.f32.mrb[0].mxu0
        %v6567 = vadd.f32 0.0, %v6566
        %v6568 = vpop.f32.mrb[0].mxu0
        %6569 = vdwg.mxu0
        %6570 = vmatprep.subr.bf16.mxu0 0
        %6571 = vmatpush1.bf16.msra.mxu0 %v6481
        %6572 = vmatprep.subr.bf16.mxu0 0
        %6573 = vmatpush1.bf16.msra.mxu0 %v6482
        %6574 = vmatprep.subr.bf16.mxu0 0
        %6575 = vmatpush1.bf16.msra.mxu0 %v6483
        %6576 = vmatprep.subr.bf16.mxu0 0
        %6577 = vmatpush1.bf16.msra.mxu0 %v6484
        %6578 = vmatprep.subr.bf16.mxu0 0
        %6579 = vmatpush1.bf16.msra.mxu0 %v6485
        %6580 = vmatprep.subr.bf16.mxu0 0
        %6581 = vmatpush1.bf16.msra.mxu0 %v6486
        %6582 = vmatprep.subr.bf16.mxu0 0
        %6583 = vmatpush1.bf16.msra.mxu0 %v6487
        %6584 = vmatprep.subr.bf16.mxu0 0
        %6585 = vmatpush1.bf16.msra.mxu0 %v6488
        %6586 = vmatprep.subr.bf16.mxu0 0
        %6587 = vmatpush1.bf16.msra.mxu0 %v6489
        %6588 = vmatprep.subr.bf16.mxu0 0
        %6589 = vmatpush1.bf16.msra.mxu0 %v6490
        %6590 = vmatprep.subr.bf16.mxu0 0
        %6591 = vmatpush1.bf16.msra.mxu0 %v6491
        %6592 = vmatprep.subr.bf16.mxu0 0
        %6593 = vmatpush1.bf16.msra.mxu0 %v6492
        %6594 = vmatprep.subr.bf16.mxu0 0
        %6595 = vmatpush1.bf16.msra.mxu0 %v6493
        %6596 = vmatprep.subr.bf16.mxu0 0
        %6597 = vmatpush1.bf16.msra.mxu0 %v6494
        %6598 = vmatprep.subr.bf16.mxu0 0
        %6599 = vmatpush1.bf16.msra.mxu0 %v6495
        %6600 = vmatprep.subr.bf16.mxu0 0
        %6601 = vmatpush1.bf16.msra.mxu0 %v6496
        %6602 = vmatprep.mubr.bf16.mxu0 %v6272
        %6603 = vmatmul.mubr.bf16.gmra.mrb[0].mxu0 %v6271
        %v6604 = vpop.f32.mrb[0].mxu0
        %v6605 = vadd.f32 %v6564, %v6604
        %v6606 = vpop.f32.mrb[0].mxu0
        %v6607 = vpop.f32.mrb[0].mxu0
        %v6608 = vadd.f32 %v6567, %v6607
        %v6609 = vpop.f32.mrb[0].mxu0
        %6610 = vdwg.mxu0
        %v6611 = vadd.f32 %v6267, %v6605
        %v6612 = vadd.f32 %v6268, %v6608
        %vm6613 = vcmask 7168
        %6614 = vst.msk [vmem:[#allocation2] sm:$0xff] %vm6613, %v6611
        %6615 = vst.msk [vmem:[#allocation2 + $0x8] sm:$0xff] %vm6613, %v6612
        %p6616 = scmp.eq.s32.totalorder %s36, 1
        // Predicated region
        $region117: #{tpu_custom_call.1} parent=67 // pred_check
          %p6617 = pneg %p6616
        $region118: #{tpu_custom_call.1} parent=67 // pred_check_branch
          %6619 = sbr.rel (%p6617) target = $region120
        $region119: #{tpu_custom_call.1} parent=67 // pred_region
          %v6620 = vld [vmem:[#allocation2] sm:$0xff]
          %v6621 = vld [vmem:[#allocation2 + $0x8] sm:$0xff]
          %s6622 = sld [smem:[#allocation13 + %s35]]
          %v6623 = vstv %s6622
          %v6624 = vadd.f32 %v6620, %v6623
          %v6625 = vadd.f32 %v6621, %v6623
          %v6626 = vsel %vm6613, %v6624, -inf
          %v6627 = vrot.slane %v6626, 4
          %v6628 = vmax.f32 %v6626, %v6627
          %v6629 = vrot.slane %v6628, 2
          %v6630 = vmax.f32 %v6628, %v6629
          %v6631 = vrot.slane %v6630, 1
          %v6632 = vmax.f32 %v6630, %v6631
          %v6633 = vsel %vm6613, %v6625, -inf
          %v6634 = vrot.slane %v6633, 4
          %v6635 = vmax.f32 %v6633, %v6634
          %v6636 = vrot.slane %v6635, 2
          %v6637 = vmax.f32 %v6635, %v6636
          %v6638 = vrot.slane %v6637, 1
          %v6639 = vmax.f32 %v6637, %v6638
          %v6640 = vsub.f32 %v6624, %v6632
          %v6641 = vsub.f32 %v6625, %v6639
          %v6642 = vmul.f32 %v6640, 1.442695
          %v6643 = vpow.pop %v6642
          %v6644 = vmul.f32 %v6641, 1.442695
          %v6645 = vpow.pop %v6644
          %v6646 = vsel %vm6613, %v6643, 0.0
          %v6647 = vrot.slane %v6646, 4
          %v6648 = vadd.f32 %v6646, %v6647
          %v6649 = vrot.slane %v6648, 2
          %v6650 = vadd.f32 %v6648, %v6649
          %v6651 = vrot.slane %v6650, 1
          %v6652 = vadd.f32 %v6650, %v6651
          %v6653 = vsel %vm6613, %v6645, 0.0
          %v6654 = vrot.slane %v6653, 4
          %v6655 = vadd.f32 %v6653, %v6654
          %v6656 = vrot.slane %v6655, 2
          %v6657 = vadd.f32 %v6655, %v6656
          %v6658 = vrot.slane %v6657, 1
          %v6659 = vadd.f32 %v6657, %v6658
          %v6660 = vrcp.pop %v6652
          %v6661 = vmul.f32 %v6643, %v6660
          %v6662 = vrcp.pop %v6659
          %v6663 = vmul.f32 %v6645, %v6662
          %6665 = vset.pattern.permute.xlu0 0
          %6666 = vperm.xlu0 %6665, %v6661
          %v6667 = vpop.permute.xlu0 %6666
          %6670 = vset.pattern.permute.xlu0 0
          %6671 = vperm.xlu0 %6670, %v6663
          %v6672 = vpop.permute.xlu0 %6671
          %v6674 = vmul.f32 %v6667, %v683
          %v6675 = vmul.f32 %v6672, %v684
          %v6676 = vrot.slane %v6674, 4
          %v6677 = vadd.f32 %v6674, %v6676
          %v6678 = vrot.slane %v6677, 2
          %v6679 = vadd.f32 %v6677, %v6678
          %v6680 = vrot.slane %v6679, 1
          %v6681 = vadd.f32 %v6679, %v6680
          %v6682 = vrot.slane %v6675, 4
          %v6683 = vadd.f32 %v6675, %v6682
          %v6684 = vrot.slane %v6683, 2
          %v6685 = vadd.f32 %v6683, %v6684
          %v6686 = vrot.slane %v6685, 1
          %v6687 = vadd.f32 %v6685, %v6686
          %v6688 = vld [vmem:[#allocation3] sm:$0x3]
          %v6689 = vpack.c.bf16 %v6681, %v6681
          %v6690 = vpack.c.bf16 %v6687, %v6687
          %v6691 = vld [vmem:[%s596] sm:$0xf]
          %v6692 = vld [vmem:[%s596 + $0x4] sm:$0xf]
          %v6693 = vld [vmem:[%s596 + $0x8] sm:$0xf]
          %v6694 = vld [vmem:[%s596 + $0xc] sm:$0xf]
          %v6695 = vld [vmem:[%s596 + $0x10] sm:$0xf]
          %v6696 = vld [vmem:[%s596 + $0x14] sm:$0xf]
          %v6697 = vld [vmem:[%s596 + $0x18] sm:$0xf]
          %v6698 = vld [vmem:[%s596 + $0x1c] sm:$0xf]
          %v6699 = vld [vmem:[%s596 + $0x20] sm:$0xf]
          %v6700 = vld [vmem:[%s596 + $0x24] sm:$0xf]
          %v6701 = vld [vmem:[%s596 + $0x28] sm:$0xf]
          %v6702 = vld [vmem:[%s596 + $0x2c] sm:$0xf]
          %v6703 = vld [vmem:[%s596 + $0x30] sm:$0xf]
          %v6704 = vld [vmem:[%s596 + $0x34] sm:$0xf]
          %v6705 = vld [vmem:[%s596 + $0x38] sm:$0xf]
          %v6706 = vld [vmem:[%s596 + $0x3c] sm:$0xf]
          %v6709 = vunpack.c.l.b16 %v6689
          %v6710 = vunpack.c.l.b16 %v6690
          %vm6711 = vcmask 1041409
          %v6712 = vsel %vm6711, %v6710, %v6709
          %v6713 = vpack.c.b16 %v6712, %v6712
          %v6731 = vunpack.c.l.b16 %v6691
          %v6732 = vunpack.c.l.b16 %v6692
          %v6733 = vunpack.c.l.b16 %v6693
          %v6734 = vunpack.c.l.b16 %v6694
          %v6735 = vunpack.c.l.b16 %v6695
          %v6736 = vunpack.c.l.b16 %v6696
          %v6737 = vunpack.c.l.b16 %v6697
          %v6738 = vunpack.c.l.b16 %v6698
          %v6739 = vunpack.c.l.b16 %v6699
          %v6740 = vunpack.c.l.b16 %v6700
          %v6741 = vunpack.c.l.b16 %v6701
          %v6742 = vunpack.c.l.b16 %v6702
          %v6743 = vunpack.c.l.b16 %v6703
          %v6744 = vunpack.c.l.b16 %v6704
          %v6745 = vunpack.c.l.b16 %v6705
          %v6746 = vunpack.c.l.b16 %v6706
          %v6747 = vpack.c.b16 %v6732, %v6731
          %v6748 = vpack.c.b16 %v6734, %v6733
          %v6749 = vpack.c.b16 %v6736, %v6735
          %v6750 = vpack.c.b16 %v6738, %v6737
          %v6751 = vpack.c.b16 %v6740, %v6739
          %v6752 = vpack.c.b16 %v6742, %v6741
          %v6753 = vpack.c.b16 %v6744, %v6743
          %v6754 = vpack.c.b16 %v6746, %v6745
          %6763 = vmatprep.subr.bf16.mxu0 0
          %6764 = vmatpush1.bf16.msra.mxu0 %v6747
          %6765 = vmatprep.subr.bf16.mxu0 0
          %6766 = vmatpush1.bf16.msra.mxu0 %v6748
          %6767 = vmatprep.subr.bf16.mxu0 0
          %6768 = vmatpush1.bf16.msra.mxu0 %v6749
          %6769 = vmatprep.subr.bf16.mxu0 0
          %6770 = vmatpush1.bf16.msra.mxu0 %v6750
          %6771 = vmatprep.subr.bf16.mxu0 0
          %6772 = vmatpush1.bf16.msra.mxu0 %v6751
          %6773 = vmatprep.subr.bf16.mxu0 0
          %6774 = vmatpush1.bf16.msra.mxu0 %v6752
          %6775 = vmatprep.subr.bf16.mxu0 0
          %6776 = vmatpush1.bf16.msra.mxu0 %v6753
          %6777 = vmatprep.subr.bf16.mxu0 0
          %6778 = vmatpush1.bf16.msra.mxu0 %v6754
          %6779 = vmatprep.subr.bf16.mxu0 0
          %6780 = vmatpush1.bf16.msra.mxu0 0
          %6781 = vmatprep.subr.bf16.mxu0 0
          %6782 = vmatpush1.bf16.msra.mxu0 0
          %6783 = vmatprep.subr.bf16.mxu0 0
          %6784 = vmatpush1.bf16.msra.mxu0 0
          %6785 = vmatprep.subr.bf16.mxu0 0
          %6786 = vmatpush1.bf16.msra.mxu0 0
          %6787 = vmatprep.subr.bf16.mxu0 0
          %6788 = vmatpush1.bf16.msra.mxu0 0
          %6789 = vmatprep.subr.bf16.mxu0 0
          %6790 = vmatpush1.bf16.msra.mxu0 0
          %6791 = vmatprep.subr.bf16.mxu0 0
          %6792 = vmatpush1.bf16.msra.mxu0 0
          %6793 = vmatprep.subr.bf16.mxu0 0
          %6794 = vmatpush1.bf16.msra.mxu0 0
          %6795 = vmatprep.mubr.bf16.mxu0 0
          %6796 = vmatmul.mubr.bf16.gmra.mrb[0].mxu0 %v6713
          %v6797 = vpop.f32.mrb[0].mxu0
          %v6798 = vadd.f32 0.0, %v6797
          %v6799 = vpop.f32.mrb[0].mxu0
          %v6800 = vpop.f32.mrb[0].mxu0
          %v6801 = vpop.f32.mrb[0].mxu0
          %6802 = vdwg.mxu0
          %v6803 = vadd.f32 %v6688, %v6798
          %6804 = vst [vmem:[#allocation3] sm:$0x3] %v6803
        $region120: #{tpu_custom_call.1} parent=67 // pred_fallthru
          _
        %p6805 = scmp.eq.s32.totalorder %s35, 1
        %p6806 = pnand %p6805, %p6616
        %p6807 = pneg %p6806
        // Predicated region
        $region121: #{tpu_custom_call.1} parent=67 // pred_check
          _
        $region122: #{tpu_custom_call.1} parent=67 // pred_check_branch
          %6809 = sbr.rel (%p6806) target = $region124
        $region123: #{tpu_custom_call.1} parent=67 // pred_region
          %v6810 = vld [vmem:[#allocation3] sm:$0x3]
          %v6811 = vld [vmem:[#allocation17] sm:$0x1]
          %v6813 = vlaneseq
          %v6814 = vshrl.u32 %v6813, 7
          %v6815 = vsub.s32 0, %v6814
          %v6816 = vrot.slane %v6811, %v6815
          %v6818 = vadd.f32 %v6810, %v6816
          %v6819 = vmax.f32 %v6818, 0.0
          %v6820 = vpack.c.bf16 %v6819, %v6819
          %v6821 = vld [vmem:[%s10] sm:$0xf]
          %v6822 = vld [vmem:[%s10 + $0x4] sm:$0xf]
          %v6823 = vld [vmem:[%s10 + $0x8] sm:$0xf]
          %v6824 = vld [vmem:[%s10 + $0xc] sm:$0xf]
          %v6825 = vld [vmem:[%s10 + $0x10] sm:$0xf]
          %v6826 = vld [vmem:[%s10 + $0x14] sm:$0xf]
          %v6827 = vld [vmem:[%s10 + $0x18] sm:$0xf]
          %v6828 = vld [vmem:[%s10 + $0x1c] sm:$0xf]
          %v6829 = vld [vmem:[%s10 + $0x20] sm:$0xf]
          %v6830 = vld [vmem:[%s10 + $0x24] sm:$0xf]
          %v6831 = vld [vmem:[%s10 + $0x28] sm:$0xf]
          %v6832 = vld [vmem:[%s10 + $0x2c] sm:$0xf]
          %v6833 = vld [vmem:[%s10 + $0x30] sm:$0xf]
          %v6834 = vld [vmem:[%s10 + $0x34] sm:$0xf]
          %v6835 = vld [vmem:[%s10 + $0x38] sm:$0xf]
          %v6836 = vld [vmem:[%s10 + $0x3c] sm:$0xf]
          %v6837 = vld [vmem:[#allocation18] sm:$0x1]
          %v6839 = vlaneseq
          %v6840 = vshrl.u32 %v6839, 7
          %v6841 = vsub.s32 0, %v6840
          %v6842 = vrot.slane %v6837, %v6841
          %v6860 = vunpack.c.l.b16 %v6821
          %v6861 = vunpack.c.l.b16 %v6822
          %v6862 = vunpack.c.l.b16 %v6823
          %v6863 = vunpack.c.l.b16 %v6824
          %v6864 = vunpack.c.l.b16 %v6825
          %v6865 = vunpack.c.l.b16 %v6826
          %v6866 = vunpack.c.l.b16 %v6827
          %v6867 = vunpack.c.l.b16 %v6828
          %v6868 = vunpack.c.l.b16 %v6829
          %v6869 = vunpack.c.l.b16 %v6830
          %v6870 = vunpack.c.l.b16 %v6831
          %v6871 = vunpack.c.l.b16 %v6832
          %v6872 = vunpack.c.l.b16 %v6833
          %v6873 = vunpack.c.l.b16 %v6834
          %v6874 = vunpack.c.l.b16 %v6835
          %v6875 = vunpack.c.l.b16 %v6836
          %v6876 = vpack.c.b16 %v6861, %v6860
          %v6877 = vpack.c.b16 %v6863, %v6862
          %v6878 = vpack.c.b16 %v6865, %v6864
          %v6879 = vpack.c.b16 %v6867, %v6866
          %v6880 = vpack.c.b16 %v6869, %v6868
          %v6881 = vpack.c.b16 %v6871, %v6870
          %v6882 = vpack.c.b16 %v6873, %v6872
          %v6883 = vpack.c.b16 %v6875, %v6874
          %6892 = vmatprep.subr.bf16.mxu0 0
          %6893 = vmatpush1.bf16.msra.mxu0 %v6876
          %6894 = vmatprep.subr.bf16.mxu0 0
          %6895 = vmatpush1.bf16.msra.mxu0 %v6877
          %6896 = vmatprep.subr.bf16.mxu0 0
          %6897 = vmatpush1.bf16.msra.mxu0 %v6878
          %6898 = vmatprep.subr.bf16.mxu0 0
          %6899 = vmatpush1.bf16.msra.mxu0 %v6879
          %6900 = vmatprep.subr.bf16.mxu0 0
          %6901 = vmatpush1.bf16.msra.mxu0 %v6880
          %6902 = vmatprep.subr.bf16.mxu0 0
          %6903 = vmatpush1.bf16.msra.mxu0 %v6881
          %6904 = vmatprep.subr.bf16.mxu0 0
          %6905 = vmatpush1.bf16.msra.mxu0 %v6882
          %6906 = vmatprep.subr.bf16.mxu0 0
          %6907 = vmatpush1.bf16.msra.mxu0 %v6883
          %6908 = vmatprep.subr.bf16.mxu0 0
          %6909 = vmatpush1.bf16.msra.mxu0 0
          %6910 = vmatprep.subr.bf16.mxu0 0
          %6911 = vmatpush1.bf16.msra.mxu0 0
          %6912 = vmatprep.subr.bf16.mxu0 0
          %6913 = vmatpush1.bf16.msra.mxu0 0
          %6914 = vmatprep.subr.bf16.mxu0 0
          %6915 = vmatpush1.bf16.msra.mxu0 0
          %6916 = vmatprep.subr.bf16.mxu0 0
          %6917 = vmatpush1.bf16.msra.mxu0 0
          %6918 = vmatprep.subr.bf16.mxu0 0
          %6919 = vmatpush1.bf16.msra.mxu0 0
          %6920 = vmatprep.subr.bf16.mxu0 0
          %6921 = vmatpush1.bf16.msra.mxu0 0
          %6922 = vmatprep.subr.bf16.mxu0 0
          %6923 = vmatpush1.bf16.msra.mxu0 0
          %6924 = vmatprep.mubr.bf16.mxu0 0
          %6925 = vmatmul.mubr.bf16.gmra.mrb[0].mxu0 %v6820
          %v6926 = vpop.f32.mrb[0].mxu0
          %v6927 = vadd.f32 %v6842, %v6926
          %v6928 = vpop.f32.mrb[0].mxu0
          %v6929 = vpop.f32.mrb[0].mxu0
          %v6930 = vpop.f32.mrb[0].mxu0
          %6931 = vdwg.mxu0
          %vm6932 = vcmask 123904
          %6933 = vst.msk [vmem:[#allocation20] sm:$0x3] %vm6932, %v6927
        $region124: #{tpu_custom_call.1} parent=67 // pred_fallthru
          _
        // Predicated region
        $region125: #{tpu_custom_call.1} parent=67 // pred_check
          %p6934 = pneg %p349
        $region126: #{tpu_custom_call.1} parent=67 // pred_check_branch
          %6936 = sbr.rel (%p6934) target = $region128
        $region127: #{tpu_custom_call.1} parent=67 // pred_region
          %s6938 = ssub.s32 32, 32
          %6939 = vsyncadd [#allocation6], %s6938
          %s6941 = sshll.u32 [#allocation20], 4
          %s6942 = int_to_ptr.vmem [resolvable:$true] %s6941
          %6944 = dma.vmem_to_hbm [thread:$0]  %s6942, 32, %s12, [#allocation6]
        $region128: #{tpu_custom_call.1} parent=67 // pred_fallthru
          _
        // Predicated region
        $region129: #{tpu_custom_call.1} parent=67 // pred_check
          %p6945 = pneg %p349
        $region130: #{tpu_custom_call.1} parent=67 // pred_check_branch
          %6947 = sbr.rel (%p6945) target = $region132
        $region131: #{tpu_custom_call.1} parent=67 // pred_region
          %6948 = dma.done [#allocation6], 32
        $region132: #{tpu_custom_call.1} parent=67 // pred_fallthru
          _
      $region68: #{tpu_custom_call.1} parent=5 // pred_fallthru
        _
      %p6949 = scmp.le.s32.totalorder 2, %s26
      // Predicated region
      $region133: #{tpu_custom_call.1} parent=5 // pred_check
        %p6950 = pneg %p6949
      $region134: #{tpu_custom_call.1} parent=5 // pred_check_branch
        %6952 = sbr.rel (%p6950) target = $region136
      $region135: #{tpu_custom_call.1} parent=5 // pred_region
        %s6953 = ssub.s32 %s26, 2
      $region136: #{tpu_custom_call.1} parent=5 // pred_fallthru
        _
    $region6: #{tpu_custom_call.1} parent=1 // loop_footer
      %s30 = sadd.s32 1, %s26
    $region7: #{tpu_custom_call.1} parent=1 // loop_footer_branch
      %25 = sbr.rel target = $region3
    $region8: #{tpu_custom_call.1} parent=1 // loop_exit
      _
    %6954 = vsyncpa [#allocation5], 1
    %s6955 = scalar_lea.sflag [#allocation5], 1
    %6956 = vsyncpa %s6955, 1
    %6957 = vsyncpa [#allocation9], 1
    %6958 = vsyncpa [#allocation16], 1
    %s6959 = scalar_lea.sflag [#allocation16], 1
    %6960 = vsyncpa %s6959, 1
    %6961 = vsyncpa [#allocation19], 1
    %6962 = vsyncpa [#allocation6], 1
    %s6963 = scalar_lea.sflag [#allocation6], 1
    %6964 = vsyncpa %s6963, 1
    %6965 = vsyncpa [#allocation7], 1
    %s6966 = scalar_lea.sflag [#allocation7], 1
    %6967 = vsyncpa %s6966, 1

</llo_original>
